<compile_context>
chip_gen: v6e
topology: v6e:2x2x1
jax: 0.10.0
libtpu: 0.0.40
codegen_flags: <defaults>
</compile_context>

<pallas_src>
import jax
import jax.numpy as jnp
from jax.experimental import pallas as pl
from jax.experimental.pallas import tpu as pltpu

_LANE = 128        # lane width: pad the cluster axis to this for lane-dense stores
_NEG_BIG = -1e30   # logit value for padded (fake) clusters -> exp underflows to 0


def _elu(x):
    # ELU(alpha=1): x if x > 0 else exp(x) - 1
    return jnp.where(x > 0, x, jnp.exp(x) - 1.0)


def _gnnpool_kernel(a_ref, xw_k_ref, xw_i_ref, d_k_ref, d_i_ref,
                    bg_ref, w1_ref, b1_ref, w2_ref, b2_ref,
                    s_ref, acc_ref):
    """grid = (row tiles i, k tiles k); k is the reduction axis (last)."""
    k = pl.program_id(1)

    @pl.when(k == 0)
    def _init():
        acc_ref[...] = jnp.zeros_like(acc_ref)

    # Column-side D^-1/2 folded into the small (tk, C) XW operand, cast to bf16
    # for the MXU.  The A tile is streamed from HBM in bf16 (exact: A is 0/1).
    xw_scaled = (d_k_ref[...] * xw_k_ref[...]).astype(jnp.bfloat16)
    acc_ref[...] += jnp.dot(a_ref[...], xw_scaled,
                            preferred_element_type=jnp.float32)

    @pl.when(k == pl.num_programs(1) - 1)
    def _finalize():
        d_i = d_i_ref[...]          # (tm, 1)  deg^-1/2 for this row tile
        inv_deg = d_i * d_i         # (tm, 1)  1/deg  (self-loop contribution)

        # GCNConv:  D^-1/2 (A+I) D^-1/2 XW + bg  ==  d*(A @ d*XW) + XW/deg + bg
        x1 = _elu(d_i * acc_ref[...] + inv_deg * xw_i_ref[...] + bg_ref[...])

        # MLP: Linear -> ELU -> (Dropout: identity in eval) -> Linear
        # TODO(synk): training-mode Dropout(0.25) not modeled (eval => identity).
        h1 = _elu(jnp.dot(x1, w1_ref[...], preferred_element_type=jnp.float32)
                  + b1_ref[...])
        H = jnp.dot(h1, w2_ref[...], preferred_element_type=jnp.float32) + b2_ref[...]

        # softmax over the lane-padded cluster axis (padded logits are -1e30)
        m = jnp.max(H, axis=-1, keepdims=True)
        e = jnp.exp(H - m)
        S = e * pl.reciprocal(jnp.sum(e, axis=-1, keepdims=True), approx=True)
        s_ref[...] = S.astype(s_ref.dtype)


def gnnpool_forward(A, X, params, *, tm=None, tk=None):
    """Returns (A, S) exactly like the PyTorch module's forward (eval mode).

    Tile-size guidance (reduction tile tk on the streamed A operand):
      v5e: tm=256, tk~1024   (16 MiB default scoped VMEM, lowest HBM BW)
      v6e: tm=512, tk~2048   (128 MiB VMEM, raise vmem_limit_bytes if needed)
      v7x: tm=512, tk~1024   (64 MiB VMEM; row axis is "parallel" for 2 TCs)
    Defaults below are modest so they work everywhere.
    """
    N = X.shape[0]
    C = params["wg"].shape[1]     # conv_hidden
    Hm = params["w1"].shape[1]    # mlp_hidden
    K = params["w2"].shape[1]     # num_clusters

    tm = min(256, N) if tm is None else tm
    tk = min(512, N) if tk is None else tk
    assert N % tm == 0 and N % tk == 0, "N must be divisible by (tm, tk)"

    # --- tiny per-node precompute kept outside the N^2 kernel ------------------
    # Column-side degrees must be known globally before the tiled k-reduction
    # can start, so deg (one streaming rowsum of A) and the hoisted feature
    # transform XW = X @ Wg are computed here; everything N^2 runs in the kernel.
    deg = jnp.sum(A, axis=1, keepdims=True).astype(jnp.float32) + 1.0   # (N, 1)
    d = jax.lax.rsqrt(deg)                                              # (N, 1)
    XW = jnp.dot(X, params["wg"], preferred_element_type=jnp.float32)   # (N, C)
    A_bf16 = A.astype(jnp.bfloat16)   # 0/1 adjacency -> exact in bf16, half the HBM bytes

    # Lane-dense output: pad clusters to a multiple of 128 lanes.
    Kp = max(_LANE, ((K + _LANE - 1) // _LANE) * _LANE)
    w2p = jnp.zeros((Hm, Kp), jnp.float32).at[:, :K].set(params["w2"])
    b2p = jnp.full((1, Kp), _NEG_BIG, jnp.float32).at[:, :K].set(params["b2"])

    grid = (N // tm, N // tk)

    flops = 2 * N * N * C + 2 * N * C * Hm + 2 * N * Hm * Kp
    bytes_accessed = (2 * N * N                      # A in bf16
                      + 4 * N * (2 * C + 2)          # XW (x2 views) + d (x2 views)
                      + 4 * N * Kp                   # S output
                      + 4 * (C + C * Hm + Hm + Hm * Kp + Kp))
    transcendentals = N * (C + Hm + Kp)

    S_pad = pl.pallas_call(
        _gnnpool_kernel,
        out_shape=jax.ShapeDtypeStruct((N, Kp), jnp.float32),
        grid_spec=pltpu.PrefetchScalarGridSpec(
            num_scalar_prefetch=0,
            grid=grid,
            in_specs=[
                pl.BlockSpec((tm, tk), lambda i, k: (i, k)),   # A (bf16 stream)
                pl.BlockSpec((tk, C), lambda i, k: (k, 0)),    # XW  k-block
                pl.BlockSpec((tm, C), lambda i, k: (i, 0)),    # XW  row-block (self term)
                pl.BlockSpec((tk, 1), lambda i, k: (k, 0)),    # d   k-block
                pl.BlockSpec((tm, 1), lambda i, k: (i, 0)),    # d   row-block
                pl.BlockSpec((1, C), lambda i, k: (0, 0)),     # bg
                pl.BlockSpec((C, Hm), lambda i, k: (0, 0)),    # w1
                pl.BlockSpec((1, Hm), lambda i, k: (0, 0)),    # b1
                pl.BlockSpec((Hm, Kp), lambda i, k: (0, 0)),   # w2 (lane-padded)
                pl.BlockSpec((1, Kp), lambda i, k: (0, 0)),    # b2 (lane-padded)
            ],
            out_specs=pl.BlockSpec((tm, Kp), lambda i, k: (i, 0)),
            scratch_shapes=[pltpu.VMEM((tm, C), jnp.float32)],
        ),
        compiler_params=pltpu.CompilerParams(
            dimension_semantics=("parallel", "arbitrary"),
        ),
        cost_estimate=pl.CostEstimate(
            flops=flops,
            transcendentals=transcendentals,
            bytes_accessed=bytes_accessed,
        ),
    )(A_bf16, XW, XW, d, d,
      params["bg"], params["w1"], params["b1"], w2p, b2p)

    return A, S_pad[:, :K]


def init_params(key, input_dim, conv_hidden, mlp_hidden, num_clusters):
    """Deterministic synthetic parameters (same shapes as the nn.Module)."""
    ks = jax.random.split(key, 6)
    scale = 0.1
    return {
        "wg": scale * jax.random.normal(ks[0], (input_dim, conv_hidden), jnp.float32),
        "bg": scale * jax.random.normal(ks[1], (1, conv_hidden), jnp.float32),
        "w1": scale * jax.random.normal(ks[2], (conv_hidden, mlp_hidden), jnp.float32),
        "b1": scale * jax.random.normal(ks[3], (1, mlp_hidden), jnp.float32),
        "w2": scale * jax.random.normal(ks[4], (mlp_hidden, num_clusters), jnp.float32),
        "b2": scale * jax.random.normal(ks[5], (1, num_clusters), jnp.float32),
    }


def _reference_forward(A, X, p):
    """Pure-JAX f32 reference (mirrors the PyTorch module)."""
    N = A.shape[0]
    A_hat = A + jnp.eye(N, dtype=A.dtype)
    deg = jnp.sum(A_hat, axis=-1, keepdims=True)
    dis = jnp.where(deg > 0, 1.0 / jnp.sqrt(deg), 0.0)
    A_norm = dis * A_hat * dis.reshape(1, N)
    x1 = _elu(A_norm @ (X @ p["wg"]) + p["bg"])
    h1 = _elu(x1 @ p["w1"] + p["b1"])
    H = h1 @ p["w2"] + p["b2"]
    return A, jax.nn.softmax(H, axis=-1)


if __name__ == "__main__":
    # Small, module-consistent shapes: N nodes with input_dim features.
    N, input_dim, conv_hidden, mlp_hidden, num_clusters = 512, 32, 64, 32, 8

    key = jax.random.PRNGKey(0)
    k_a, k_x, k_p = jax.random.split(key, 3)

    # Symmetric 0/1 adjacency (no self loops; GCN normalization adds them).
    A_rand = jax.random.uniform(k_a, (N, N), jnp.float32)
    A = (A_rand + A_rand.T > 1.2).astype(jnp.float32)
    A = A * (1.0 - jnp.eye(N, dtype=jnp.float32))

    X = jax.random.normal(k_x, (N, input_dim), jnp.float32)
    params = init_params(k_p, input_dim, conv_hidden, mlp_hidden, num_clusters)

    # tk=256 at this small N so both grid axes (parallel rows + k reduction)
    # are actually exercised; real workloads would use larger tk (see docstring).
    A_out, S = gnnpool_forward(A, X, params, tm=256, tk=256)
    S = jax.block_until_ready(S)

    # correctness checks against the pure-JAX f32 reference
    # (kernel streams A / scaled-XW in bf16 and uses the approximate EUP
    #  reciprocal for the softmax denominator, hence the relaxed tolerance)
    _, S_ref = _reference_forward(A, X, params)
    assert S.shape == (N, num_clusters)
    assert jnp.allclose(jnp.sum(S, axis=-1), 1.0, atol=2e-3)
    assert jnp.allclose(S, S_ref, atol=2e-3, rtol=2e-2)
    assert jnp.array_equal(A_out, A)

    print("KERNEL_OK")
</pallas_src>

<mosaic_0001>
module attributes {stable_mosaic.version = 11 : i64} {
  func.func @_gnnpool_kernel(%arg0: i32, %arg1: i32, %arg2: memref<256x256xbf16, #tpu.memory_space<vmem>>, %arg3: memref<256x64xf32, #tpu.memory_space<vmem>>, %arg4: memref<256x64xf32, #tpu.memory_space<vmem>>, %arg5: memref<256x1xf32, #tpu.memory_space<vmem>>, %arg6: memref<256x1xf32, #tpu.memory_space<vmem>>, %arg7: memref<1x64xf32, #tpu.memory_space<vmem>>, %arg8: memref<64x32xf32, #tpu.memory_space<vmem>>, %arg9: memref<1x32xf32, #tpu.memory_space<vmem>>, %arg10: memref<32x128xf32, #tpu.memory_space<vmem>>, %arg11: memref<1x128xf32, #tpu.memory_space<vmem>>, %arg12: memref<256x128xf32, #tpu.memory_space<vmem>>, %arg13: memref<256x64xf32, #tpu.memory_space<vmem>>) attributes {dimension_semantics = [#tpu.dimension_semantics<parallel>, #tpu.dimension_semantics<arbitrary>], iteration_bounds = array<i64: 2, 2>, scalar_prefetch = 0 : i64, scratch_operands = 1 : i64, tpu.core_type = #tpu.core_type<tc>, window_params = [{transform_indices = @transform_0, window_bounds = array<i64: 256, 256>}, {transform_indices = @transform_1, window_bounds = array<i64: 256, 64>}, {transform_indices = @transform_2, window_bounds = array<i64: 256, 64>}, {transform_indices = @transform_3, window_bounds = array<i64: 256, 1>}, {transform_indices = @transform_4, window_bounds = array<i64: 256, 1>}, {pipeline_mode = #tpu.pipeline_mode<synchronous>, transform_indices = @transform_5, window_bounds = array<i64: 1, 64>}, {pipeline_mode = #tpu.pipeline_mode<synchronous>, transform_indices = @transform_6, window_bounds = array<i64: 64, 32>}, {pipeline_mode = #tpu.pipeline_mode<synchronous>, transform_indices = @transform_7, window_bounds = array<i64: 1, 32>}, {pipeline_mode = #tpu.pipeline_mode<synchronous>, transform_indices = @transform_8, window_bounds = array<i64: 32, 128>}, {pipeline_mode = #tpu.pipeline_mode<synchronous>, transform_indices = @transform_9, window_bounds = array<i64: 1, 128>}, {transform_indices = @transform_10, window_bounds = array<i64: 256, 128>}]} {
    %c0_i32 = arith.constant 0 : i32
    %0 = arith.cmpi eq, %arg1, %c0_i32 : i32
    %1 = arith.extui %0 : i1 to i32
    %c0_i32_0 = arith.constant 0 : i32
    %2 = arith.cmpi ne, %1, %c0_i32_0 : i32
    scf.if %2 {
      %cst_11 = arith.constant 0.000000e+00 : f32
      %16 = vector.broadcast %cst_11 : f32 to vector<256x64xf32>
      %c0_12 = arith.constant 0 : index
      %c0_13 = arith.constant 0 : index
      %17 = vector.load %arg13[%c0_12, %c0_13] : memref<256x64xf32, #tpu.memory_space<vmem>>, vector<256x64xf32>
      tpu.vector_store %arg13[%c0_12, %c0_13], %16 {strides = array<i32>} : memref<256x64xf32, #tpu.memory_space<vmem>>, vector<256x64xf32>,
    } else {
    }
    %c0 = arith.constant 0 : index
    %c0_1 = arith.constant 0 : index
    %3 = vector.load %arg5[%c0, %c0_1] : memref<256x1xf32, #tpu.memory_space<vmem>>, vector<256x1xf32>
    %c0_2 = arith.constant 0 : index
    %c0_3 = arith.constant 0 : index
    %4 = vector.load %arg3[%c0_2, %c0_3] : memref<256x64xf32, #tpu.memory_space<vmem>>, vector<256x64xf32>
    %5 = vector.broadcast %3 : vector<256x1xf32> to vector<256x64xf32>
    %6 = arith.mulf %5, %4 : vector<256x64xf32>
    %7 = arith.truncf %6 : vector<256x64xf32> to vector<256x64xbf16>
    %c0_4 = arith.constant 0 : index
    %c0_5 = arith.constant 0 : index
    %8 = vector.load %arg13[%c0_4, %c0_5] : memref<256x64xf32, #tpu.memory_space<vmem>>, vector<256x64xf32>
    %c0_6 = arith.constant 0 : index
    %c0_7 = arith.constant 0 : index
    %9 = vector.load %arg2[%c0_6, %c0_7] : memref<256x256xbf16, #tpu.memory_space<vmem>>, vector<256x256xbf16>
    %cst = arith.constant dense<0.000000e+00> : vector<256x64xf32>
    %10 = tpu.matmul %9, %7, %cst {dimension_numbers = #tpu.dot_dimension_numbers<[1], [0], [0], [1], [0, 0, 1, 1], [], []>} : vector<256x256xbf16>, vector<256x64xbf16>, vector<256x64xf32> -> vector<256x64xf32>
    %11 = arith.addf %8, %10 : vector<256x64xf32>
    %c0_8 = arith.constant 0 : index
    %c0_9 = arith.constant 0 : index
    %12 = vector.load %arg13[%c0_8, %c0_9] : memref<256x64xf32, #tpu.memory_space<vmem>>, vector<256x64xf32>
    tpu.vector_store %arg13[%c0_8, %c0_9], %11 {strides = array<i32>} : memref<256x64xf32, #tpu.memory_space<vmem>>, vector<256x64xf32>,
    %c1_i32 = arith.constant 1 : i32
    %13 = arith.cmpi eq, %arg1, %c1_i32 : i32
    %14 = arith.extui %13 : i1 to i32
    %c0_i32_10 = arith.constant 0 : i32
    %15 = arith.cmpi ne, %14, %c0_i32_10 : i32
    scf.if %15 {
      %c0_11 = arith.constant 0 : index
      %c0_12 = arith.constant 0 : index
      %16 = vector.load %arg6[%c0_11, %c0_12] : memref<256x1xf32, #tpu.memory_space<vmem>>, vector<256x1xf32>
      %17 = arith.mulf %16, %16 : vector<256x1xf32>
      %c0_13 = arith.constant 0 : index
      %c0_14 = arith.constant 0 : index
      %18 = vector.load %arg13[%c0_13, %c0_14] : memref<256x64xf32, #tpu.memory_space<vmem>>, vector<256x64xf32>
      %19 = vector.broadcast %16 : vector<256x1xf32> to vector<256x64xf32>
      %20 = arith.mulf %19, %18 : vector<256x64xf32>
      %c0_15 = arith.constant 0 : index
      %c0_16 = arith.constant 0 : index
      %21 = vector.load %arg4[%c0_15, %c0_16] : memref<256x64xf32, #tpu.memory_space<vmem>>, vector<256x64xf32>
      %22 = vector.broadcast %17 : vector<256x1xf32> to vector<256x64xf32>
      %23 = arith.mulf %22, %21 : vector<256x64xf32>
      %24 = arith.addf %20, %23 : vector<256x64xf32>
      %c0_17 = arith.constant 0 : index
      %c0_18 = arith.constant 0 : index
      %25 = vector.load %arg7[%c0_17, %c0_18] : memref<1x64xf32, #tpu.memory_space<vmem>>, vector<1x64xf32>
      %26 = vector.broadcast %25 : vector<1x64xf32> to vector<256x64xf32>
      %27 = arith.addf %24, %26 : vector<256x64xf32>
      %cst_19 = arith.constant 0.000000e+00 : f32
      %28 = vector.broadcast %cst_19 : f32 to vector<256x64xf32>
      %29 = arith.cmpf ogt, %27, %28 : vector<256x64xf32>
      %30 = math.exp %27 : vector<256x64xf32>
      %cst_20 = arith.constant 1.000000e+00 : f32
      %31 = vector.broadcast %cst_20 : f32 to vector<256x64xf32>
      %32 = arith.subf %30, %31 : vector<256x64xf32>
      %33 = arith.select %29, %27, %32 : vector<256x64xi1>, vector<256x64xf32>
      %c0_21 = arith.constant 0 : index
      %c0_22 = arith.constant 0 : index
      %34 = vector.load %arg8[%c0_21, %c0_22] : memref<64x32xf32, #tpu.memory_space<vmem>>, vector<64x32xf32>
      %cst_23 = arith.constant dense<0.000000e+00> : vector<256x32xf32>
      %35 = tpu.matmul %33, %34, %cst_23 {dimension_numbers = #tpu.dot_dimension_numbers<[1], [0], [0], [1], [0, 0, 1, 1], [], []>} : vector<256x64xf32>, vector<64x32xf32>, vector<256x32xf32> -> vector<256x32xf32>
      %c0_24 = arith.constant 0 : index
      %c0_25 = arith.constant 0 : index
      %36 = vector.load %arg9[%c0_24, %c0_25] : memref<1x32xf32, #tpu.memory_space<vmem>>, vector<1x32xf32>
      %37 = vector.broadcast %36 : vector<1x32xf32> to vector<256x32xf32>
      %38 = arith.addf %35, %37 : vector<256x32xf32>
      %cst_26 = arith.constant 0.000000e+00 : f32
      %39 = vector.broadcast %cst_26 : f32 to vector<256x32xf32>
      %40 = arith.cmpf ogt, %38, %39 : vector<256x32xf32>
      %41 = math.exp %38 : vector<256x32xf32>
      %cst_27 = arith.constant 1.000000e+00 : f32
      %42 = vector.broadcast %cst_27 : f32 to vector<256x32xf32>
      %43 = arith.subf %41, %42 : vector<256x32xf32>
      %44 = arith.select %40, %38, %43 : vector<256x32xi1>, vector<256x32xf32>
      %c0_28 = arith.constant 0 : index
      %c0_29 = arith.constant 0 : index
      %45 = vector.load %arg10[%c0_28, %c0_29] : memref<32x128xf32, #tpu.memory_space<vmem>>, vector<32x128xf32>
      %cst_30 = arith.constant dense<0.000000e+00> : vector<256x128xf32>
      %46 = tpu.matmul %44, %45, %cst_30 {dimension_numbers = #tpu.dot_dimension_numbers<[1], [0], [0], [1], [0, 0, 1, 1], [], []>} : vector<256x32xf32>, vector<32x128xf32>, vector<256x128xf32> -> vector<256x128xf32>
      %c0_31 = arith.constant 0 : index
      %c0_32 = arith.constant 0 : index
      %47 = vector.load %arg11[%c0_31, %c0_32] : memref<1x128xf32, #tpu.memory_space<vmem>>, vector<1x128xf32>
      %48 = vector.broadcast %47 : vector<1x128xf32> to vector<256x128xf32>
      %49 = arith.addf %46, %48 : vector<256x128xf32>
      %cst_33 = arith.constant dense<0xFF800000> : vector<256xf32>
      %50 = vector.multi_reduction <maximumf>, %49, %cst_33 [1] : vector<256x128xf32> to vector<256xf32>
      %51 = vector.shape_cast %50 : vector<256xf32> to vector<256x1xf32>
      %52 = vector.broadcast %51 : vector<256x1xf32> to vector<256x128xf32>
      %53 = arith.subf %49, %52 : vector<256x128xf32>
      %54 = math.exp %53 : vector<256x128xf32>
      %cst_34 = arith.constant dense<0.000000e+00> : vector<256xf32>
      %55 = vector.multi_reduction <add>, %54, %cst_34 [1] : vector<256x128xf32> to vector<256xf32>
      %56 = vector.shape_cast %55 : vector<256xf32> to vector<256x1xf32>
      %57 = tpu.reciprocal %56 {approx = true} : vector<256x1xf32> -> vector<256x1xf32>
      %58 = vector.broadcast %57 : vector<256x1xf32> to vector<256x128xf32>
      %59 = arith.mulf %54, %58 : vector<256x128xf32>
      %c0_35 = arith.constant 0 : index
      %c0_36 = arith.constant 0 : index
      %60 = vector.load %arg12[%c0_35, %c0_36] : memref<256x128xf32, #tpu.memory_space<vmem>>, vector<256x128xf32>
      tpu.vector_store %arg12[%c0_35, %c0_36], %59 {strides = array<i32>} : memref<256x128xf32, #tpu.memory_space<vmem>>, vector<256x128xf32>,
    } else {
    }
    return
  }
  func.func @transform_0(%arg0: i32, %arg1: i32) -> (i32, i32) {
    %c0_i32 = arith.constant 0 : i32
    return %arg0, %arg1 : i32, i32
  }
  func.func @transform_1(%arg0: i32, %arg1: i32) -> (i32, i32) {
    %c0_i32 = arith.constant 0 : i32
    %c0_i32_0 = arith.constant 0 : i32
    return %arg1, %c0_i32 : i32, i32
  }
  func.func @transform_2(%arg0: i32, %arg1: i32) -> (i32, i32) {
    %c0_i32 = arith.constant 0 : i32
    %c0_i32_0 = arith.constant 0 : i32
    return %arg0, %c0_i32 : i32, i32
  }
  func.func @transform_3(%arg0: i32, %arg1: i32) -> (i32, i32) {
    %c0_i32 = arith.constant 0 : i32
    %c0_i32_0 = arith.constant 0 : i32
    return %arg1, %c0_i32 : i32, i32
  }
  func.func @transform_4(%arg0: i32, %arg1: i32) -> (i32, i32) {
    %c0_i32 = arith.constant 0 : i32
    %c0_i32_0 = arith.constant 0 : i32
    return %arg0, %c0_i32 : i32, i32
  }
  func.func @transform_5(%arg0: i32, %arg1: i32) -> (i32, i32) {
    %c0_i32 = arith.constant 0 : i32
    %c0_i32_0 = arith.constant 0 : i32
    %c0_i32_1 = arith.constant 0 : i32
    return %c0_i32, %c0_i32_0 : i32, i32
  }
  func.func @transform_6(%arg0: i32, %arg1: i32) -> (i32, i32) {
    %c0_i32 = arith.constant 0 : i32
    %c0_i32_0 = arith.constant 0 : i32
    %c0_i32_1 = arith.constant 0 : i32
    return %c0_i32, %c0_i32_0 : i32, i32
  }
  func.func @transform_7(%arg0: i32, %arg1: i32) -> (i32, i32) {
    %c0_i32 = arith.constant 0 : i32
    %c0_i32_0 = arith.constant 0 : i32
    %c0_i32_1 = arith.constant 0 : i32
    return %c0_i32, %c0_i32_0 : i32, i32
  }
  func.func @transform_8(%arg0: i32, %arg1: i32) -> (i32, i32) {
    %c0_i32 = arith.constant 0 : i32
    %c0_i32_0 = arith.constant 0 : i32
    %c0_i32_1 = arith.constant 0 : i32
    return %c0_i32, %c0_i32_0 : i32, i32
  }
  func.func @transform_9(%arg0: i32, %arg1: i32) -> (i32, i32) {
    %c0_i32 = arith.constant 0 : i32
    %c0_i32_0 = arith.constant 0 : i32
    %c0_i32_1 = arith.constant 0 : i32
    return %c0_i32, %c0_i32_0 : i32, i32
  }
  func.func @transform_10(%arg0: i32, %arg1: i32) -> (i32, i32) {
    %c0_i32 = arith.constant 0 : i32
    %c0_i32_0 = arith.constant 0 : i32
    return %arg0, %c0_i32 : i32, i32
  }
}

</mosaic_0001>

<llo_original>
// kernel: tpu_custom_call.1
$region0: #{tpu_custom_call.1}
  #allocation0 [shape = 'u32[]', space=smem, size = 0x4, offset = 0x4, fixed_abs, tag = 'smem constant byte address 0x4 - core index']
  #allocation1 [shape = 'u32[144,128]{1,0:T(1,128)}', space=vmem, size = 0x12000, scoped, tag = 'internal scratch']
  #allocation2 [shape = 'f32[256,64]{1,0:T(8,128)}', space=vmem, size = 0x20000, scoped, tag = 'scratch operand']
  %s0 = inlined_call_operand.vmem [shape: bf16[512,512], index: 0, kind: input, shape index: {}]
  %s1 = inlined_call_operand.vmem [shape: f32[512,64], index: 1, kind: input, shape index: {}]
  %s2 = inlined_call_operand.vmem [shape: f32[512,64], index: 2, kind: input, shape index: {}]
  %s3 = inlined_call_operand.vmem [shape: f32[512,1], index: 3, kind: input, shape index: {}]
  %s4 = inlined_call_operand.vmem [shape: f32[512,1], index: 4, kind: input, shape index: {}]
  %s5 = inlined_call_operand.vmem [shape: f32[1,64], index: 5, kind: input, shape index: {}]
  %s6 = inlined_call_operand.vmem [shape: f32[64,32], index: 6, kind: input, shape index: {}]
  %s7 = inlined_call_operand.vmem [shape: f32[1,32], index: 7, kind: input, shape index: {}]
  %s8 = inlined_call_operand.vmem [shape: f32[32,128], index: 8, kind: input, shape index: {}]
  %s9 = inlined_call_operand.vmem [shape: f32[1,128], index: 9, kind: input, shape index: {}]
  %s10 = inlined_call_operand.hbm [shape: f32[512,128], index: 10, kind: output, shape index: {}]
  %s11 = sld [smem:[#allocation0]]
  $region119: #{tpu_custom_call.1} parent=0
    _
  %s13 = ssub.s32 1, %s11
  %s14 = scalar_select 0, %s13, %s11
  $region1: #{tpu_custom_call.1} parent=0
    #allocation3 [shape = 'u8[262144]{0}', space=vmem, size = 0x40000, scoped, tag = 'input window, operand 0']
    #allocation4 [shape = 'u8[262144]{0}', space=vmem, size = 0x40000, scoped, tag = 'output window, operand 0']
    #allocation5 [shape = 's32[2]{0}', space=sflag, size = 0x8, scoped, tag = 'scoped memory for tpu_custom_call.1']
    %15 = vsyncpa [#allocation5], 0
    %s16 = scalar_lea.sflag [#allocation5], 1
    %17 = vsyncpa %s16, 0
    loop: start=0, step=1, limit=6
    $region2: #{tpu_custom_call.1} parent=1 // loop_pre_header
      _
    $region3: #{tpu_custom_call.1} parent=1 // loop_header
      %s19 = sphi 0, %s23
      %p20 = scmp.ge.s32.totalorder %s19, 6
      %s26 = sphi 0, %s38
      %s27 = sphi 0, %s34
      %s28 = sphi 0, %s26
      %s29 = sphi 0, %s27
      %s30 = sphi 0, %s28
      %s31 = sphi 0, %s29
      %s43 = sphi 0, %s45
      %s46 = sphi 0, %s43
      %s47 = sphi 0, %s46
      %s63 = sphi 0, %s47
      %s69 = sphi 0, %s71
      %s72 = sphi 0, %s69
      %s73 = sphi 0, %s72
      %s89 = sphi 0, %s73
      %s95 = sphi 0, %s97
      %s98 = sphi 0, %s95
      %s99 = sphi 0, %s98
      %s115 = sphi 0, %s99
      %s121 = sphi 0, %s123
      %s124 = sphi 0, %s121
      %s125 = sphi 0, %s124
      %s141 = sphi 0, %s125
      %s147 = sphi 0, %s149
      %s150 = sphi 0, %s147
      %s151 = sphi 0, %s150
      %s167 = sphi 0, %s151
      %s171 = sphi 0, %s171
      %s173 = sphi 0, %s171
      %s174 = sphi 0, %s173
      %s188 = sphi 0, %s174
      %s192 = sphi 0, %s192
      %s194 = sphi 0, %s192
      %s195 = sphi 0, %s194
      %s209 = sphi 0, %s195
      %s213 = sphi 0, %s213
      %s215 = sphi 0, %s213
      %s216 = sphi 0, %s215
      %s230 = sphi 0, %s216
      %s234 = sphi 0, %s234
      %s236 = sphi 0, %s234
      %s237 = sphi 0, %s236
      %s251 = sphi 0, %s237
      %s255 = sphi 0, %s255
      %s257 = sphi 0, %s255
      %s258 = sphi 0, %s257
      %s272 = sphi 0, %s258
      %s278 = sphi 0, %s280
      %s281 = sphi 0, %s278
      %s282 = sphi 0, %s281
      %s298 = sphi 0, %s282
    $region4: #{tpu_custom_call.1} parent=1 // loop_header_branch
      %22 = sbr.rel (%p20) target = $region8
    $region5: #{tpu_custom_call.1} parent=1 // loop_body
      %s24 = ssub.s32 %s19, 1
      %s25 = ssub.s32 %s19, 2
      %s32 = sadd.s32 1, %s27
      %p33 = scmp.ge.s32.totalorder %s32, 2
      %s34 = scalar_select %p33, 0, %s32
      %s35 = sadd.s32 1, %s26
      %s36 = scalar_select %p33, %s35, %s26
      %p37 = scmp.ge.s32.totalorder %s36, 2
      %s38 = scalar_select %p37, 0, %s36
      %s39 = ssub.s32 %s26, %s38
      %s40 = ssub.s32 %s27, %s34
      %s41 = sor.u32 %s39, %s40
      %p42 = scmp.eq.s32.totalorder %s41, 0
      %s44 = sadd.s32 %s43, 1
      %s45 = scalar_select %p42, %s43, %s44
      %p48 = pneg %p42
      %p49 = scmp.eq.s32.totalorder %s19, 3
      %p50 = por %p48, %p49
      %p51 = scmp.ne.s32.totalorder %s43, %s46
      %p52 = scmp.eq.s32.totalorder %s19, 0
      %p53 = por %p51, %p52
      %p54 = scmp.ne.s32.totalorder %s43, %s46
      %p55 = scmp.eq.s32.totalorder %s24, 3
      %p56 = por %p54, %p55
      %p57 = scmp.ne.s32.totalorder %s46, %s47
      %p58 = scmp.eq.s32.totalorder %s24, 0
      %p59 = por %p57, %p58
      %p60 = scmp.ne.s32.totalorder %s46, %s47
      %p61 = scmp.eq.s32.totalorder %s25, 3
      %p62 = por %p60, %p61
      %p64 = scmp.ne.s32.totalorder %s47, %s63
      %p65 = scmp.eq.s32.totalorder %s25, 0
      %p66 = por %p64, %p65
      %s67 = ssub.s32 %s27, %s34
      %p68 = scmp.eq.s32.totalorder %s67, 0
      %s70 = sadd.s32 %s69, 1
      %s71 = scalar_select %p68, %s69, %s70
      %p74 = pneg %p68
      %p75 = scmp.eq.s32.totalorder %s19, 3
      %p76 = por %p74, %p75
      %p77 = scmp.ne.s32.totalorder %s69, %s72
      %p78 = scmp.eq.s32.totalorder %s19, 0
      %p79 = por %p77, %p78
      %p80 = scmp.ne.s32.totalorder %s69, %s72
      %p81 = scmp.eq.s32.totalorder %s24, 3
      %p82 = por %p80, %p81
      %p83 = scmp.ne.s32.totalorder %s72, %s73
      %p84 = scmp.eq.s32.totalorder %s24, 0
      %p85 = por %p83, %p84
      %p86 = scmp.ne.s32.totalorder %s72, %s73
      %p87 = scmp.eq.s32.totalorder %s25, 3
      %p88 = por %p86, %p87
      %p90 = scmp.ne.s32.totalorder %s73, %s89
      %p91 = scmp.eq.s32.totalorder %s25, 0
      %p92 = por %p90, %p91
      %s93 = ssub.s32 %s26, %s38
      %p94 = scmp.eq.s32.totalorder %s93, 0
      %s96 = sadd.s32 %s95, 1
      %s97 = scalar_select %p94, %s95, %s96
      %p100 = pneg %p94
      %p101 = scmp.eq.s32.totalorder %s19, 3
      %p102 = por %p100, %p101
      %p103 = scmp.ne.s32.totalorder %s95, %s98
      %p104 = scmp.eq.s32.totalorder %s19, 0
      %p105 = por %p103, %p104
      %p106 = scmp.ne.s32.totalorder %s95, %s98
      %p107 = scmp.eq.s32.totalorder %s24, 3
      %p108 = por %p106, %p107
      %p109 = scmp.ne.s32.totalorder %s98, %s99
      %p110 = scmp.eq.s32.totalorder %s24, 0
      %p111 = por %p109, %p110
      %p112 = scmp.ne.s32.totalorder %s98, %s99
      %p113 = scmp.eq.s32.totalorder %s25, 3
      %p114 = por %p112, %p113
      %p116 = scmp.ne.s32.totalorder %s99, %s115
      %p117 = scmp.eq.s32.totalorder %s25, 0
      %p118 = por %p116, %p117
      %s119 = ssub.s32 %s27, %s34
      %p120 = scmp.eq.s32.totalorder %s119, 0
      %s122 = sadd.s32 %s121, 1
      %s123 = scalar_select %p120, %s121, %s122
      %p126 = pneg %p120
      %p127 = scmp.eq.s32.totalorder %s19, 3
      %p128 = por %p126, %p127
      %p129 = scmp.ne.s32.totalorder %s121, %s124
      %p130 = scmp.eq.s32.totalorder %s19, 0
      %p131 = por %p129, %p130
      %p132 = scmp.ne.s32.totalorder %s121, %s124
      %p133 = scmp.eq.s32.totalorder %s24, 3
      %p134 = por %p132, %p133
      %p135 = scmp.ne.s32.totalorder %s124, %s125
      %p136 = scmp.eq.s32.totalorder %s24, 0
      %p137 = por %p135, %p136
      %p138 = scmp.ne.s32.totalorder %s124, %s125
      %p139 = scmp.eq.s32.totalorder %s25, 3
      %p140 = por %p138, %p139
      %p142 = scmp.ne.s32.totalorder %s125, %s141
      %p143 = scmp.eq.s32.totalorder %s25, 0
      %p144 = por %p142, %p143
      %s145 = ssub.s32 %s26, %s38
      %p146 = scmp.eq.s32.totalorder %s145, 0
      %s148 = sadd.s32 %s147, 1
      %s149 = scalar_select %p146, %s147, %s148
      %p152 = pneg %p146
      %p153 = scmp.eq.s32.totalorder %s19, 3
      %p154 = por %p152, %p153
      %p155 = scmp.ne.s32.totalorder %s147, %s150
      %p156 = scmp.eq.s32.totalorder %s19, 0
      %p157 = por %p155, %p156
      %p158 = scmp.ne.s32.totalorder %s147, %s150
      %p159 = scmp.eq.s32.totalorder %s24, 3
      %p160 = por %p158, %p159
      %p161 = scmp.ne.s32.totalorder %s150, %s151
      %p162 = scmp.eq.s32.totalorder %s24, 0
      %p163 = por %p161, %p162
      %p164 = scmp.ne.s32.totalorder %s150, %s151
      %p165 = scmp.eq.s32.totalorder %s25, 3
      %p166 = por %p164, %p165
      %p168 = scmp.ne.s32.totalorder %s151, %s167
      %p169 = scmp.eq.s32.totalorder %s25, 0
      %p170 = por %p168, %p169
      %s172 = sadd.s32 %s171, 1
      %p175 = scmp.eq.s32.totalorder %s19, 3
      %p176 = scmp.ne.s32.totalorder %s171, %s173
      %p177 = scmp.eq.s32.totalorder %s19, 0
      %p178 = por %p176, %p177
      %p179 = scmp.ne.s32.totalorder %s171, %s173
      %p180 = scmp.eq.s32.totalorder %s24, 3
      %p181 = por %p179, %p180
      %p182 = scmp.ne.s32.totalorder %s173, %s174
      %p183 = scmp.eq.s32.totalorder %s24, 0
      %p184 = por %p182, %p183
      %p185 = scmp.ne.s32.totalorder %s173, %s174
      %p186 = scmp.eq.s32.totalorder %s25, 3
      %p187 = por %p185, %p186
      %p189 = scmp.ne.s32.totalorder %s174, %s188
      %p190 = scmp.eq.s32.totalorder %s25, 0
      %p191 = por %p189, %p190
      %s193 = sadd.s32 %s192, 1
      %p196 = scmp.eq.s32.totalorder %s19, 3
      %p197 = scmp.ne.s32.totalorder %s192, %s194
      %p198 = scmp.eq.s32.totalorder %s19, 0
      %p199 = por %p197, %p198
      %p200 = scmp.ne.s32.totalorder %s192, %s194
      %p201 = scmp.eq.s32.totalorder %s24, 3
      %p202 = por %p200, %p201
      %p203 = scmp.ne.s32.totalorder %s194, %s195
      %p204 = scmp.eq.s32.totalorder %s24, 0
      %p205 = por %p203, %p204
      %p206 = scmp.ne.s32.totalorder %s194, %s195
      %p207 = scmp.eq.s32.totalorder %s25, 3
      %p208 = por %p206, %p207
      %p210 = scmp.ne.s32.totalorder %s195, %s209
      %p211 = scmp.eq.s32.totalorder %s25, 0
      %p212 = por %p210, %p211
      %s214 = sadd.s32 %s213, 1
      %p217 = scmp.eq.s32.totalorder %s19, 3
      %p218 = scmp.ne.s32.totalorder %s213, %s215
      %p219 = scmp.eq.s32.totalorder %s19, 0
      %p220 = por %p218, %p219
      %p221 = scmp.ne.s32.totalorder %s213, %s215
      %p222 = scmp.eq.s32.totalorder %s24, 3
      %p223 = por %p221, %p222
      %p224 = scmp.ne.s32.totalorder %s215, %s216
      %p225 = scmp.eq.s32.totalorder %s24, 0
      %p226 = por %p224, %p225
      %p227 = scmp.ne.s32.totalorder %s215, %s216
      %p228 = scmp.eq.s32.totalorder %s25, 3
      %p229 = por %p227, %p228
      %p231 = scmp.ne.s32.totalorder %s216, %s230
      %p232 = scmp.eq.s32.totalorder %s25, 0
      %p233 = por %p231, %p232
      %s235 = sadd.s32 %s234, 1
      %p238 = scmp.eq.s32.totalorder %s19, 3
      %p239 = scmp.ne.s32.totalorder %s234, %s236
      %p240 = scmp.eq.s32.totalorder %s19, 0
      %p241 = por %p239, %p240
      %p242 = scmp.ne.s32.totalorder %s234, %s236
      %p243 = scmp.eq.s32.totalorder %s24, 3
      %p244 = por %p242, %p243
      %p245 = scmp.ne.s32.totalorder %s236, %s237
      %p246 = scmp.eq.s32.totalorder %s24, 0
      %p247 = por %p245, %p246
      %p248 = scmp.ne.s32.totalorder %s236, %s237
      %p249 = scmp.eq.s32.totalorder %s25, 3
      %p250 = por %p248, %p249
      %p252 = scmp.ne.s32.totalorder %s237, %s251
      %p253 = scmp.eq.s32.totalorder %s25, 0
      %p254 = por %p252, %p253
      %s256 = sadd.s32 %s255, 1
      %p259 = scmp.eq.s32.totalorder %s19, 3
      %p260 = scmp.ne.s32.totalorder %s255, %s257
      %p261 = scmp.eq.s32.totalorder %s19, 0
      %p262 = por %p260, %p261
      %p263 = scmp.ne.s32.totalorder %s255, %s257
      %p264 = scmp.eq.s32.totalorder %s24, 3
      %p265 = por %p263, %p264
      %p266 = scmp.ne.s32.totalorder %s257, %s258
      %p267 = scmp.eq.s32.totalorder %s24, 0
      %p268 = por %p266, %p267
      %p269 = scmp.ne.s32.totalorder %s257, %s258
      %p270 = scmp.eq.s32.totalorder %s25, 3
      %p271 = por %p269, %p270
      %p273 = scmp.ne.s32.totalorder %s258, %s272
      %p274 = scmp.eq.s32.totalorder %s25, 0
      %p275 = por %p273, %p274
      %s276 = ssub.s32 %s26, %s38
      %p277 = scmp.eq.s32.totalorder %s276, 0
      %s279 = sadd.s32 %s278, 1
      %s280 = scalar_select %p277, %s278, %s279
      %p283 = pneg %p277
      %p284 = scmp.eq.s32.totalorder %s19, 3
      %p285 = por %p283, %p284
      %p286 = scmp.ne.s32.totalorder %s278, %s281
      %p287 = scmp.eq.s32.totalorder %s19, 0
      %p288 = por %p286, %p287
      %p289 = scmp.ne.s32.totalorder %s278, %s281
      %p290 = scmp.eq.s32.totalorder %s24, 3
      %p291 = por %p289, %p290
      %p292 = scmp.ne.s32.totalorder %s281, %s282
      %p293 = scmp.eq.s32.totalorder %s24, 0
      %p294 = por %p292, %p293
      %p295 = scmp.ne.s32.totalorder %s281, %s282
      %p296 = scmp.eq.s32.totalorder %s25, 3
      %p297 = por %p295, %p296
      %p299 = scmp.ne.s32.totalorder %s282, %s298
      %p300 = scmp.eq.s32.totalorder %s25, 0
      %p301 = por %p299, %p300
      %p302 = scmp.le.s32.totalorder 1, %s19
      %p303 = scmp.lt.s32.totalorder %s19, 5
      %p304 = pnand %p302, %p303
      %p305 = pneg %p304
      // Predicated region
      $region9: #{tpu_custom_call.1} parent=5 // pred_check
        _
      $region10: #{tpu_custom_call.1} parent=5 // pred_check_branch
        %307 = sbr.rel (%p304) target = $region12
      $region11: #{tpu_custom_call.1} parent=5 // pred_region
        %s308 = ssub.s32 %s19, 1
        // Predicated region
        $region13: #{tpu_custom_call.1} parent=11 // pred_check
          %p309 = pneg %p184
        $region14: #{tpu_custom_call.1} parent=11 // pred_check_branch
          %311 = sbr.rel (%p309) target = $region16
        $region15: #{tpu_custom_call.1} parent=11 // pred_region
          _
        $region16: #{tpu_custom_call.1} parent=11 // pred_fallthru
          _
        // Predicated region
        $region17: #{tpu_custom_call.1} parent=11 // pred_check
          %p312 = pneg %p205
        $region18: #{tpu_custom_call.1} parent=11 // pred_check_branch
          %314 = sbr.rel (%p312) target = $region20
        $region19: #{tpu_custom_call.1} parent=11 // pred_region
          _
        $region20: #{tpu_custom_call.1} parent=11 // pred_fallthru
          _
        // Predicated region
        $region21: #{tpu_custom_call.1} parent=11 // pred_check
          %p315 = pneg %p226
        $region22: #{tpu_custom_call.1} parent=11 // pred_check_branch
          %317 = sbr.rel (%p315) target = $region24
        $region23: #{tpu_custom_call.1} parent=11 // pred_region
          _
        $region24: #{tpu_custom_call.1} parent=11 // pred_fallthru
          _
        // Predicated region
        $region25: #{tpu_custom_call.1} parent=11 // pred_check
          %p318 = pneg %p247
        $region26: #{tpu_custom_call.1} parent=11 // pred_check_branch
          %320 = sbr.rel (%p318) target = $region28
        $region27: #{tpu_custom_call.1} parent=11 // pred_region
          _
        $region28: #{tpu_custom_call.1} parent=11 // pred_fallthru
          _
        // Predicated region
        $region29: #{tpu_custom_call.1} parent=11 // pred_check
          %p321 = pneg %p268
        $region30: #{tpu_custom_call.1} parent=11 // pred_check_branch
          %323 = sbr.rel (%p321) target = $region32
        $region31: #{tpu_custom_call.1} parent=11 // pred_region
          _
        $region32: #{tpu_custom_call.1} parent=11 // pred_fallthru
          _
      $region12: #{tpu_custom_call.1} parent=5 // pred_fallthru
        _
      %p324 = scmp.lt.s32.totalorder %s19, 4
      // Predicated region
      $region33: #{tpu_custom_call.1} parent=5 // pred_check
        %p325 = pneg %p324
      $region34: #{tpu_custom_call.1} parent=5 // pred_check_branch
        %327 = sbr.rel (%p325) target = $region36
      $region35: #{tpu_custom_call.1} parent=5 // pred_region
        // Predicated region
        $region37: #{tpu_custom_call.1} parent=35 // pred_check
          %p328 = pneg %p53
        $region38: #{tpu_custom_call.1} parent=35 // pred_check_branch
          %330 = sbr.rel (%p328) target = $region40
        $region39: #{tpu_custom_call.1} parent=35 // pred_region
          %s331 = sand.u32 %s43, 1
          %s332 = sand.u32 %s43, 1
          %s333 = smul.addr %s332, 256
          %s334 = scalar_lea.vmem [#allocation3], %s333
          %s335 = smul.u32 32, %s26
          %s336 = smul.u32 2, %s27
          %s337 = smul.addr %s335, 4
          %s338 = sadd.s32 %s336, %s337
          %s339 = smul.addr %s338, 4
          %s340 = scalar_lea.vmem %s0, %s339
          // Predicated region
          $region41: #{tpu_custom_call.1} parent=39 // pred_check
            _
          $region42: #{tpu_custom_call.1} parent=39 // pred_check_branch
            %342 = sbr.rel (0) target = $region44
          $region43: #{tpu_custom_call.1} parent=39 // pred_region
            // Predicated region
            $region45: #{tpu_custom_call.1} parent=43 // pred_check
              _
            $region46: #{tpu_custom_call.1} parent=43 // pred_check_branch
              %344 = sbr.rel (0) target = $region48
            $region47: #{tpu_custom_call.1} parent=43 // pred_region
              // Predicated region
              $region60: #{tpu_custom_call.1} parent=47 // pred_check
                _
              $region61: #{tpu_custom_call.1} parent=47 // pred_check_branch
                %422 = sbr.rel (0) target = $region63
              $region62: #{tpu_custom_call.1} parent=47 // pred_region
                loop: start=0, step=1, limit=1
                $region64: #{tpu_custom_call.1} parent=62 // loop_pre_header
                  _
                $region65: #{tpu_custom_call.1} parent=62 // loop_header
                  %s424 = sphi 0, %s428
                  %p425 = scmp.ge.s32.totalorder %s424, 1
                  %s429 = sphi %s340, %s340
                  %s430 = sphi %s334, %s334
                $region66: #{tpu_custom_call.1} parent=62 // loop_header_branch
                  %427 = sbr.rel (%p425) target = $region70
                $region67: #{tpu_custom_call.1} parent=62 // loop_body
                  %v431 = vld [vmem:[%s429] sm:$0xff]
                  %432 = vst [vmem:[%s430] sm:$0xff] %v431
                  %v433 = vld [vmem:[%s429 + $0x10] sm:$0xff]
                  %434 = vst [vmem:[%s430 + $0x8] sm:$0xff] %v433
                  %v435 = vld [vmem:[%s429 + $0x20] sm:$0xff]
                  %436 = vst [vmem:[%s430 + $0x10] sm:$0xff] %v435
                  %v437 = vld [vmem:[%s429 + $0x30] sm:$0xff]
                  %438 = vst [vmem:[%s430 + $0x18] sm:$0xff] %v437
                  %v439 = vld [vmem:[%s429 + $0x40] sm:$0xff]
                  %440 = vst [vmem:[%s430 + $0x20] sm:$0xff] %v439
                  %v441 = vld [vmem:[%s429 + $0x50] sm:$0xff]
                  %442 = vst [vmem:[%s430 + $0x28] sm:$0xff] %v441
                  %v443 = vld [vmem:[%s429 + $0x60] sm:$0xff]
                  %444 = vst [vmem:[%s430 + $0x30] sm:$0xff] %v443
                  %v445 = vld [vmem:[%s429 + $0x70] sm:$0xff]
                  %446 = vst [vmem:[%s430 + $0x38] sm:$0xff] %v445
                  %v447 = vld [vmem:[%s429 + $0x80] sm:$0xff]
                  %448 = vst [vmem:[%s430 + $0x40] sm:$0xff] %v447
                  %v449 = vld [vmem:[%s429 + $0x90] sm:$0xff]
                  %450 = vst [vmem:[%s430 + $0x48] sm:$0xff] %v449
                  %v451 = vld [vmem:[%s429 + $0xa0] sm:$0xff]
                  %452 = vst [vmem:[%s430 + $0x50] sm:$0xff] %v451
                  %v453 = vld [vmem:[%s429 + $0xb0] sm:$0xff]
                  %454 = vst [vmem:[%s430 + $0x58] sm:$0xff] %v453
                  %v455 = vld [vmem:[%s429 + $0xc0] sm:$0xff]
                  %456 = vst [vmem:[%s430 + $0x60] sm:$0xff] %v455
                  %v457 = vld [vmem:[%s429 + $0xd0] sm:$0xff]
                  %458 = vst [vmem:[%s430 + $0x68] sm:$0xff] %v457
                  %v459 = vld [vmem:[%s429 + $0xe0] sm:$0xff]
                  %460 = vst [vmem:[%s430 + $0x70] sm:$0xff] %v459
                  %v461 = vld [vmem:[%s429 + $0xf0] sm:$0xff]
                  %462 = vst [vmem:[%s430 + $0x78] sm:$0xff] %v461
                  %v463 = vld [vmem:[%s429 + $0x100] sm:$0xff]
                  %464 = vst [vmem:[%s430 + $0x80] sm:$0xff] %v463
                  %v465 = vld [vmem:[%s429 + $0x110] sm:$0xff]
                  %466 = vst [vmem:[%s430 + $0x88] sm:$0xff] %v465
                  %v467 = vld [vmem:[%s429 + $0x120] sm:$0xff]
                  %468 = vst [vmem:[%s430 + $0x90] sm:$0xff] %v467
                  %v469 = vld [vmem:[%s429 + $0x130] sm:$0xff]
                  %470 = vst [vmem:[%s430 + $0x98] sm:$0xff] %v469
                  %v471 = vld [vmem:[%s429 + $0x140] sm:$0xff]
                  %472 = vst [vmem:[%s430 + $0xa0] sm:$0xff] %v471
                  %v473 = vld [vmem:[%s429 + $0x150] sm:$0xff]
                  %474 = vst [vmem:[%s430 + $0xa8] sm:$0xff] %v473
                  %v475 = vld [vmem:[%s429 + $0x160] sm:$0xff]
                  %476 = vst [vmem:[%s430 + $0xb0] sm:$0xff] %v475
                  %v477 = vld [vmem:[%s429 + $0x170] sm:$0xff]
                  %478 = vst [vmem:[%s430 + $0xb8] sm:$0xff] %v477
                  %v479 = vld [vmem:[%s429 + $0x180] sm:$0xff]
                  %480 = vst [vmem:[%s430 + $0xc0] sm:$0xff] %v479
                  %v481 = vld [vmem:[%s429 + $0x190] sm:$0xff]
                  %482 = vst [vmem:[%s430 + $0xc8] sm:$0xff] %v481
                  %v483 = vld [vmem:[%s429 + $0x1a0] sm:$0xff]
                  %484 = vst [vmem:[%s430 + $0xd0] sm:$0xff] %v483
                  %v485 = vld [vmem:[%s429 + $0x1b0] sm:$0xff]
                  %486 = vst [vmem:[%s430 + $0xd8] sm:$0xff] %v485
                  %v487 = vld [vmem:[%s429 + $0x1c0] sm:$0xff]
                  %488 = vst [vmem:[%s430 + $0xe0] sm:$0xff] %v487
                  %v489 = vld [vmem:[%s429 + $0x1d0] sm:$0xff]
                  %490 = vst [vmem:[%s430 + $0xe8] sm:$0xff] %v489
                  %v491 = vld [vmem:[%s429 + $0x1e0] sm:$0xff]
                  %492 = vst [vmem:[%s430 + $0xf0] sm:$0xff] %v491
                  %v493 = vld [vmem:[%s429 + $0x1f0] sm:$0xff]
                  %494 = vst [vmem:[%s430 + $0xf8] sm:$0xff] %v493
                $region68: #{tpu_custom_call.1} parent=62 // loop_footer
                  %s428 = sadd.s32 1, %s424
                $region69: #{tpu_custom_call.1} parent=62 // loop_footer_branch
                  %423 = sbr.rel target = $region65
                $region70: #{tpu_custom_call.1} parent=62 // loop_exit
                  _
              $region63: #{tpu_custom_call.1} parent=47 // pred_fallthru
                _
              // Predicated region
              $region71: #{tpu_custom_call.1} parent=47 // pred_check
                _
              $region72: #{tpu_custom_call.1} parent=47 // pred_check_branch
                %496 = sbr.rel target = $region74
              $region73: #{tpu_custom_call.1} parent=47 // pred_region
                _
              $region74: #{tpu_custom_call.1} parent=47 // pred_fallthru
                _
            $region48: #{tpu_custom_call.1} parent=43 // pred_fallthru
              _
            // Predicated region
            $region49: #{tpu_custom_call.1} parent=43 // pred_check
              _
            $region50: #{tpu_custom_call.1} parent=43 // pred_check_branch
              %346 = sbr.rel target = $region52
            $region51: #{tpu_custom_call.1} parent=43 // pred_region
              %s348 = ssub.s32 256, 1
              loop: start=0, step=1, limit=1
              $region53: #{tpu_custom_call.1} parent=51 // loop_pre_header
                _
              $region54: #{tpu_custom_call.1} parent=51 // loop_header
                %s350 = sphi 0, %s354
                %p351 = scmp.ge.s32.totalorder %s350, 1
                %s355 = sphi %s340, %s340
                %s356 = sphi %s334, %s334
              $region55: #{tpu_custom_call.1} parent=51 // loop_header_branch
                %353 = sbr.rel (%p351) target = $region59
              $region56: #{tpu_custom_call.1} parent=51 // loop_body
                %v357 = vld [vmem:[%s355] sm:%s348]
                %358 = vst [vmem:[%s356] sm:%s348] %v357
                %v359 = vld [vmem:[%s355 + $0x10] sm:%s348]
                %360 = vst [vmem:[%s356 + $0x8] sm:%s348] %v359
                %v361 = vld [vmem:[%s355 + $0x20] sm:%s348]
                %362 = vst [vmem:[%s356 + $0x10] sm:%s348] %v361
                %v363 = vld [vmem:[%s355 + $0x30] sm:%s348]
                %364 = vst [vmem:[%s356 + $0x18] sm:%s348] %v363
                %v365 = vld [vmem:[%s355 + $0x40] sm:%s348]
                %366 = vst [vmem:[%s356 + $0x20] sm:%s348] %v365
                %v367 = vld [vmem:[%s355 + $0x50] sm:%s348]
                %368 = vst [vmem:[%s356 + $0x28] sm:%s348] %v367
                %v369 = vld [vmem:[%s355 + $0x60] sm:%s348]
                %370 = vst [vmem:[%s356 + $0x30] sm:%s348] %v369
                %v371 = vld [vmem:[%s355 + $0x70] sm:%s348]
                %372 = vst [vmem:[%s356 + $0x38] sm:%s348] %v371
                %v373 = vld [vmem:[%s355 + $0x80] sm:%s348]
                %374 = vst [vmem:[%s356 + $0x40] sm:%s348] %v373
                %v375 = vld [vmem:[%s355 + $0x90] sm:%s348]
                %376 = vst [vmem:[%s356 + $0x48] sm:%s348] %v375
                %v377 = vld [vmem:[%s355 + $0xa0] sm:%s348]
                %378 = vst [vmem:[%s356 + $0x50] sm:%s348] %v377
                %v379 = vld [vmem:[%s355 + $0xb0] sm:%s348]
                %380 = vst [vmem:[%s356 + $0x58] sm:%s348] %v379
                %v381 = vld [vmem:[%s355 + $0xc0] sm:%s348]
                %382 = vst [vmem:[%s356 + $0x60] sm:%s348] %v381
                %v383 = vld [vmem:[%s355 + $0xd0] sm:%s348]
                %384 = vst [vmem:[%s356 + $0x68] sm:%s348] %v383
                %v385 = vld [vmem:[%s355 + $0xe0] sm:%s348]
                %386 = vst [vmem:[%s356 + $0x70] sm:%s348] %v385
                %v387 = vld [vmem:[%s355 + $0xf0] sm:%s348]
                %388 = vst [vmem:[%s356 + $0x78] sm:%s348] %v387
                %v389 = vld [vmem:[%s355 + $0x100] sm:%s348]
                %390 = vst [vmem:[%s356 + $0x80] sm:%s348] %v389
                %v391 = vld [vmem:[%s355 + $0x110] sm:%s348]
                %392 = vst [vmem:[%s356 + $0x88] sm:%s348] %v391
                %v393 = vld [vmem:[%s355 + $0x120] sm:%s348]
                %394 = vst [vmem:[%s356 + $0x90] sm:%s348] %v393
                %v395 = vld [vmem:[%s355 + $0x130] sm:%s348]
                %396 = vst [vmem:[%s356 + $0x98] sm:%s348] %v395
                %v397 = vld [vmem:[%s355 + $0x140] sm:%s348]
                %398 = vst [vmem:[%s356 + $0xa0] sm:%s348] %v397
                %v399 = vld [vmem:[%s355 + $0x150] sm:%s348]
                %400 = vst [vmem:[%s356 + $0xa8] sm:%s348] %v399
                %v401 = vld [vmem:[%s355 + $0x160] sm:%s348]
                %402 = vst [vmem:[%s356 + $0xb0] sm:%s348] %v401
                %v403 = vld [vmem:[%s355 + $0x170] sm:%s348]
                %404 = vst [vmem:[%s356 + $0xb8] sm:%s348] %v403
                %v405 = vld [vmem:[%s355 + $0x180] sm:%s348]
                %406 = vst [vmem:[%s356 + $0xc0] sm:%s348] %v405
                %v407 = vld [vmem:[%s355 + $0x190] sm:%s348]
                %408 = vst [vmem:[%s356 + $0xc8] sm:%s348] %v407
                %v409 = vld [vmem:[%s355 + $0x1a0] sm:%s348]
                %410 = vst [vmem:[%s356 + $0xd0] sm:%s348] %v409
                %v411 = vld [vmem:[%s355 + $0x1b0] sm:%s348]
                %412 = vst [vmem:[%s356 + $0xd8] sm:%s348] %v411
                %v413 = vld [vmem:[%s355 + $0x1c0] sm:%s348]
                %414 = vst [vmem:[%s356 + $0xe0] sm:%s348] %v413
                %v415 = vld [vmem:[%s355 + $0x1d0] sm:%s348]
                %416 = vst [vmem:[%s356 + $0xe8] sm:%s348] %v415
                %v417 = vld [vmem:[%s355 + $0x1e0] sm:%s348]
                %418 = vst [vmem:[%s356 + $0xf0] sm:%s348] %v417
                %v419 = vld [vmem:[%s355 + $0x1f0] sm:%s348]
                %420 = vst [vmem:[%s356 + $0xf8] sm:%s348] %v419
              $region57: #{tpu_custom_call.1} parent=51 // loop_footer
                %s354 = sadd.s32 1, %s350
              $region58: #{tpu_custom_call.1} parent=51 // loop_footer_branch
                %349 = sbr.rel target = $region54
              $region59: #{tpu_custom_call.1} parent=51 // loop_exit
                _
            $region52: #{tpu_custom_call.1} parent=43 // pred_fallthru
              _
          $region44: #{tpu_custom_call.1} parent=39 // pred_fallthru
            _
          %497 = vnop
        $region40: #{tpu_custom_call.1} parent=35 // pred_fallthru
          _
        // Predicated region
        $region75: #{tpu_custom_call.1} parent=35 // pred_check
          %p498 = pneg %p79
        $region76: #{tpu_custom_call.1} parent=35 // pred_check_branch
          %500 = sbr.rel (%p498) target = $region78
        $region77: #{tpu_custom_call.1} parent=35 // pred_region
          %s501 = smul.u32 32, %s27
          %p502 = scmp.lt.s32.totalorder %s501, 63
          %s503 = scalar_select %p502, %s501, 63
          %s504 = smul.addr %s503, 8
          %s505 = scalar_lea.vmem %s1, %s504
          %s506 = smul.u32 32, %s27
        $region78: #{tpu_custom_call.1} parent=35 // pred_fallthru
          _
        // Predicated region
        $region79: #{tpu_custom_call.1} parent=35 // pred_check
          %p507 = pneg %p105
        $region80: #{tpu_custom_call.1} parent=35 // pred_check_branch
          %509 = sbr.rel (%p507) target = $region82
        $region81: #{tpu_custom_call.1} parent=35 // pred_region
          %s510 = smul.u32 32, %s26
          %p511 = scmp.lt.s32.totalorder %s510, 63
          %s512 = scalar_select %p511, %s510, 63
          %s513 = smul.addr %s512, 8
          %s514 = scalar_lea.vmem %s2, %s513
          %s515 = smul.u32 32, %s26
        $region82: #{tpu_custom_call.1} parent=35 // pred_fallthru
          _
        // Predicated region
        $region83: #{tpu_custom_call.1} parent=35 // pred_check
          %p516 = pneg %p131
        $region84: #{tpu_custom_call.1} parent=35 // pred_check_branch
          %518 = sbr.rel (%p516) target = $region86
        $region85: #{tpu_custom_call.1} parent=35 // pred_region
          %s519 = smul.u32 32, %s27
          %p520 = scmp.lt.s32.totalorder %s519, 63
          %s521 = scalar_select %p520, %s519, 63
          %s522 = smul.addr %s521, 8
          %s523 = scalar_lea.vmem %s3, %s522
          %s524 = smul.u32 32, %s27
        $region86: #{tpu_custom_call.1} parent=35 // pred_fallthru
          _
        // Predicated region
        $region87: #{tpu_custom_call.1} parent=35 // pred_check
          %p525 = pneg %p157
        $region88: #{tpu_custom_call.1} parent=35 // pred_check_branch
          %527 = sbr.rel (%p525) target = $region90
        $region89: #{tpu_custom_call.1} parent=35 // pred_region
          %s528 = smul.u32 32, %s26
          %p529 = scmp.lt.s32.totalorder %s528, 63
          %s530 = scalar_select %p529, %s528, 63
          %s531 = smul.addr %s530, 8
          %s532 = scalar_lea.vmem %s4, %s531
          %s533 = smul.u32 32, %s26
        $region90: #{tpu_custom_call.1} parent=35 // pred_fallthru
          _
      $region36: #{tpu_custom_call.1} parent=5 // pred_fallthru
        _
      %p534 = scmp.le.s32.totalorder 1, %s19
      %p535 = scmp.lt.s32.totalorder %s19, 5
      %p536 = pnand %p534, %p535
      %p537 = pneg %p536
      // Predicated region
      $region91: #{tpu_custom_call.1} parent=5 // pred_check
        _
      $region92: #{tpu_custom_call.1} parent=5 // pred_check_branch
        %539 = sbr.rel (%p536) target = $region94
      $region93: #{tpu_custom_call.1} parent=5 // pred_region
        %s540 = ssub.s32 %s19, 1
        %s541 = sand.u32 %s46, 1
        %s542 = sand.u32 %s46, 1
        %s543 = smul.addr %s542, 256
        %s544 = scalar_lea.vmem [#allocation3], %s543
        // Predicated region
        $region95: #{tpu_custom_call.1} parent=93 // pred_check
          %p545 = pneg %p59
        $region96: #{tpu_custom_call.1} parent=93 // pred_check_branch
          %547 = sbr.rel (%p545) target = $region98
        $region97: #{tpu_custom_call.1} parent=93 // pred_region
          _
        $region98: #{tpu_custom_call.1} parent=93 // pred_fallthru
          _
        %s548 = sand.u32 %s46, 1
        %s549 = sand.u32 %s46, 1
        %s550 = smul.addr %s549, 256
        %s551 = scalar_lea.vmem [#allocation3], %s550
        %p552 = pneg %p59
        %p553 = pneg %p56
        %s554 = smul.u32 32, %s29
        %p555 = scmp.lt.s32.totalorder %s554, 63
        %s556 = scalar_select %p555, %s554, 63
        %s557 = smul.addr %s556, 8
        %s558 = scalar_lea.vmem %s1, %s557
        %p559 = pneg %p85
        %p560 = pneg %p82
        %s561 = smul.u32 32, %s28
        %p562 = scmp.lt.s32.totalorder %s561, 63
        %s563 = scalar_select %p562, %s561, 63
        %s564 = smul.addr %s563, 8
        %s565 = scalar_lea.vmem %s2, %s564
        %p566 = pneg %p111
        %p567 = pneg %p108
        %s568 = smul.u32 32, %s29
        %p569 = scmp.lt.s32.totalorder %s568, 63
        %s570 = scalar_select %p569, %s568, 63
        %s571 = smul.addr %s570, 8
        %s572 = scalar_lea.vmem %s3, %s571
        %p573 = pneg %p137
        %p574 = pneg %p134
        %s575 = smul.u32 32, %s28
        %p576 = scmp.lt.s32.totalorder %s575, 63
        %s577 = scalar_select %p576, %s575, 63
        %s578 = smul.addr %s577, 8
        %s579 = scalar_lea.vmem %s4, %s578
        %p580 = pneg %p163
        %p581 = pneg %p160
        %p582 = pneg %p184
        %p583 = pneg %p181
        %p584 = pneg %p205
        %p585 = pneg %p202
        %p586 = pneg %p226
        %p587 = pneg %p223
        %p588 = pneg %p247
        %p589 = pneg %p244
        %p590 = pneg %p268
        %p591 = pneg %p265
        %p592 = pneg %p294
        %p593 = pneg %p291
        %s594 = sand.u32 %s281, 1
        %s595 = scalar_lea.sflag [#allocation5], %s594
        %s596 = sand.u32 %s281, 1
        %s597 = smul.addr %s596, 256
        %s598 = scalar_lea.vmem [#allocation4], %s597
        %s599 = smul.u32 32, %s28
        %s600 = smul.u32 2, %s29
        %s601 = smul.u32 32, %s29
        %p602 = scmp.lt.s32.totalorder %s601, 63
        %s603 = scalar_select %p602, %s601, 63
        %s604 = smul.addr %s603, 8
        %s605 = scalar_lea.vmem %s1, %s604
        %s606 = smul.u32 32, %s29
        %s607 = smul.u32 32, %s28
        %p608 = scmp.lt.s32.totalorder %s607, 63
        %s609 = scalar_select %p608, %s607, 63
        %s610 = smul.addr %s609, 8
        %s611 = scalar_lea.vmem %s2, %s610
        %s612 = smul.u32 32, %s28
        %s613 = smul.u32 32, %s29
        %p614 = scmp.lt.s32.totalorder %s613, 63
        %s615 = scalar_select %p614, %s613, 63
        %s616 = smul.addr %s615, 8
        %s617 = scalar_lea.vmem %s3, %s616
        %s618 = smul.u32 32, %s29
        %s619 = smul.u32 32, %s28
        %p620 = scmp.lt.s32.totalorder %s619, 63
        %s621 = scalar_select %p620, %s619, 63
        %s622 = smul.addr %s621, 8
        %s623 = scalar_lea.vmem %s4, %s622
        %s624 = smul.u32 32, %s28
        %s625 = smul.u32 32, %s28
        %p627 = scmp.eq.s32.totalorder %s29, 0
        // Predicated region
        $region99: #{tpu_custom_call.1} parent=93 // pred_check
          %p628 = pneg %p627
        $region100: #{tpu_custom_call.1} parent=93 // pred_check_branch
          %630 = sbr.rel (%p628) target = $region102
        $region101: #{tpu_custom_call.1} parent=93 // pred_region
          %vm631 = vcmask 523264
          %632 = vst.msk [vmem:[#allocation2] sm:$0xff] %vm631, 0.0
          %633 = vst.msk [vmem:[#allocation2 + $0x8] sm:$0xff] %vm631, 0.0
          %634 = vst.msk [vmem:[#allocation2 + $0x10] sm:$0xff] %vm631, 0.0
          %635 = vst.msk [vmem:[#allocation2 + $0x18] sm:$0xff] %vm631, 0.0
          %636 = vst.msk [vmem:[#allocation2 + $0x20] sm:$0xff] %vm631, 0.0
          %637 = vst.msk [vmem:[#allocation2 + $0x28] sm:$0xff] %vm631, 0.0
          %638 = vst.msk [vmem:[#allocation2 + $0x30] sm:$0xff] %vm631, 0.0
          %639 = vst.msk [vmem:[#allocation2 + $0x38] sm:$0xff] %vm631, 0.0
          %640 = vst.msk [vmem:[#allocation2 + $0x40] sm:$0xff] %vm631, 0.0
          %641 = vst.msk [vmem:[#allocation2 + $0x48] sm:$0xff] %vm631, 0.0
          %642 = vst.msk [vmem:[#allocation2 + $0x50] sm:$0xff] %vm631, 0.0
          %643 = vst.msk [vmem:[#allocation2 + $0x58] sm:$0xff] %vm631, 0.0
          %644 = vst.msk [vmem:[#allocation2 + $0x60] sm:$0xff] %vm631, 0.0
          %645 = vst.msk [vmem:[#allocation2 + $0x68] sm:$0xff] %vm631, 0.0
          %646 = vst.msk [vmem:[#allocation2 + $0x70] sm:$0xff] %vm631, 0.0
          %647 = vst.msk [vmem:[#allocation2 + $0x78] sm:$0xff] %vm631, 0.0
          %648 = vst.msk [vmem:[#allocation2 + $0x80] sm:$0xff] %vm631, 0.0
          %649 = vst.msk [vmem:[#allocation2 + $0x88] sm:$0xff] %vm631, 0.0
          %650 = vst.msk [vmem:[#allocation2 + $0x90] sm:$0xff] %vm631, 0.0
          %651 = vst.msk [vmem:[#allocation2 + $0x98] sm:$0xff] %vm631, 0.0
          %652 = vst.msk [vmem:[#allocation2 + $0xa0] sm:$0xff] %vm631, 0.0
          %653 = vst.msk [vmem:[#allocation2 + $0xa8] sm:$0xff] %vm631, 0.0
          %654 = vst.msk [vmem:[#allocation2 + $0xb0] sm:$0xff] %vm631, 0.0
          %655 = vst.msk [vmem:[#allocation2 + $0xb8] sm:$0xff] %vm631, 0.0
          %656 = vst.msk [vmem:[#allocation2 + $0xc0] sm:$0xff] %vm631, 0.0
          %657 = vst.msk [vmem:[#allocation2 + $0xc8] sm:$0xff] %vm631, 0.0
          %658 = vst.msk [vmem:[#allocation2 + $0xd0] sm:$0xff] %vm631, 0.0
          %659 = vst.msk [vmem:[#allocation2 + $0xd8] sm:$0xff] %vm631, 0.0
          %660 = vst.msk [vmem:[#allocation2 + $0xe0] sm:$0xff] %vm631, 0.0
          %661 = vst.msk [vmem:[#allocation2 + $0xe8] sm:$0xff] %vm631, 0.0
          %662 = vst.msk [vmem:[#allocation2 + $0xf0] sm:$0xff] %vm631, 0.0
          %663 = vst.msk [vmem:[#allocation2 + $0xf8] sm:$0xff] %vm631, 0.0
        $region102: #{tpu_custom_call.1} parent=93 // pred_fallthru
          _
        %v664 = vld [vmem:[%s617] sm:$0xff]
        %v665 = vld [vmem:[%s617 + $0x8] sm:$0xff]
        %v666 = vld [vmem:[%s617 + $0x10] sm:$0xff]
        %v667 = vld [vmem:[%s617 + $0x18] sm:$0xff]
        %v668 = vld [vmem:[%s617 + $0x20] sm:$0xff]
        %v669 = vld [vmem:[%s617 + $0x28] sm:$0xff]
        %v670 = vld [vmem:[%s617 + $0x30] sm:$0xff]
        %v671 = vld [vmem:[%s617 + $0x38] sm:$0xff]
        %v672 = vld [vmem:[%s617 + $0x40] sm:$0xff]
        %v673 = vld [vmem:[%s617 + $0x48] sm:$0xff]
        %v674 = vld [vmem:[%s617 + $0x50] sm:$0xff]
        %v675 = vld [vmem:[%s617 + $0x58] sm:$0xff]
        %v676 = vld [vmem:[%s617 + $0x60] sm:$0xff]
        %v677 = vld [vmem:[%s617 + $0x68] sm:$0xff]
        %v678 = vld [vmem:[%s617 + $0x70] sm:$0xff]
        %v679 = vld [vmem:[%s617 + $0x78] sm:$0xff]
        %v680 = vld [vmem:[%s617 + $0x80] sm:$0xff]
        %v681 = vld [vmem:[%s617 + $0x88] sm:$0xff]
        %v682 = vld [vmem:[%s617 + $0x90] sm:$0xff]
        %v683 = vld [vmem:[%s617 + $0x98] sm:$0xff]
        %v684 = vld [vmem:[%s617 + $0xa0] sm:$0xff]
        %v685 = vld [vmem:[%s617 + $0xa8] sm:$0xff]
        %v686 = vld [vmem:[%s617 + $0xb0] sm:$0xff]
        %v687 = vld [vmem:[%s617 + $0xb8] sm:$0xff]
        %v688 = vld [vmem:[%s617 + $0xc0] sm:$0xff]
        %v689 = vld [vmem:[%s617 + $0xc8] sm:$0xff]
        %v690 = vld [vmem:[%s617 + $0xd0] sm:$0xff]
        %v691 = vld [vmem:[%s617 + $0xd8] sm:$0xff]
        %v692 = vld [vmem:[%s617 + $0xe0] sm:$0xff]
        %v693 = vld [vmem:[%s617 + $0xe8] sm:$0xff]
        %v694 = vld [vmem:[%s617 + $0xf0] sm:$0xff]
        %v695 = vld [vmem:[%s617 + $0xf8] sm:$0xff]
        %v696 = vld [vmem:[%s605] sm:$0xff]
        %v697 = vld [vmem:[%s605 + $0x8] sm:$0xff]
        %v698 = vld [vmem:[%s605 + $0x10] sm:$0xff]
        %v699 = vld [vmem:[%s605 + $0x18] sm:$0xff]
        %v700 = vld [vmem:[%s605 + $0x20] sm:$0xff]
        %v701 = vld [vmem:[%s605 + $0x28] sm:$0xff]
        %v702 = vld [vmem:[%s605 + $0x30] sm:$0xff]
        %v703 = vld [vmem:[%s605 + $0x38] sm:$0xff]
        %v704 = vld [vmem:[%s605 + $0x40] sm:$0xff]
        %v705 = vld [vmem:[%s605 + $0x48] sm:$0xff]
        %v706 = vld [vmem:[%s605 + $0x50] sm:$0xff]
        %v707 = vld [vmem:[%s605 + $0x58] sm:$0xff]
        %v708 = vld [vmem:[%s605 + $0x60] sm:$0xff]
        %v709 = vld [vmem:[%s605 + $0x68] sm:$0xff]
        %v710 = vld [vmem:[%s605 + $0x70] sm:$0xff]
        %v711 = vld [vmem:[%s605 + $0x78] sm:$0xff]
        %v712 = vld [vmem:[%s605 + $0x80] sm:$0xff]
        %v713 = vld [vmem:[%s605 + $0x88] sm:$0xff]
        %v714 = vld [vmem:[%s605 + $0x90] sm:$0xff]
        %v715 = vld [vmem:[%s605 + $0x98] sm:$0xff]
        %v716 = vld [vmem:[%s605 + $0xa0] sm:$0xff]
        %v717 = vld [vmem:[%s605 + $0xa8] sm:$0xff]
        %v718 = vld [vmem:[%s605 + $0xb0] sm:$0xff]
        %v719 = vld [vmem:[%s605 + $0xb8] sm:$0xff]
        %v720 = vld [vmem:[%s605 + $0xc0] sm:$0xff]
        %v721 = vld [vmem:[%s605 + $0xc8] sm:$0xff]
        %v722 = vld [vmem:[%s605 + $0xd0] sm:$0xff]
        %v723 = vld [vmem:[%s605 + $0xd8] sm:$0xff]
        %v724 = vld [vmem:[%s605 + $0xe0] sm:$0xff]
        %v725 = vld [vmem:[%s605 + $0xe8] sm:$0xff]
        %v726 = vld [vmem:[%s605 + $0xf0] sm:$0xff]
        %v727 = vld [vmem:[%s605 + $0xf8] sm:$0xff]
        %729 = vset.pattern.permute.xlu0 0
        %730 = vperm.xlu0 %729, %v664
        %v731 = vpop.permute.xlu0 %730
        %734 = vset.pattern.permute.xlu0 0
        %735 = vperm.xlu0 %734, %v665
        %v736 = vpop.permute.xlu0 %735
        %739 = vset.pattern.permute.xlu0 0
        %740 = vperm.xlu0 %739, %v666
        %v741 = vpop.permute.xlu0 %740
        %744 = vset.pattern.permute.xlu0 0
        %745 = vperm.xlu0 %744, %v667
        %v746 = vpop.permute.xlu0 %745
        %749 = vset.pattern.permute.xlu0 0
        %750 = vperm.xlu0 %749, %v668
        %v751 = vpop.permute.xlu0 %750
        %754 = vset.pattern.permute.xlu0 0
        %755 = vperm.xlu0 %754, %v669
        %v756 = vpop.permute.xlu0 %755
        %759 = vset.pattern.permute.xlu0 0
        %760 = vperm.xlu0 %759, %v670
        %v761 = vpop.permute.xlu0 %760
        %764 = vset.pattern.permute.xlu0 0
        %765 = vperm.xlu0 %764, %v671
        %v766 = vpop.permute.xlu0 %765
        %769 = vset.pattern.permute.xlu0 0
        %770 = vperm.xlu0 %769, %v672
        %v771 = vpop.permute.xlu0 %770
        %774 = vset.pattern.permute.xlu0 0
        %775 = vperm.xlu0 %774, %v673
        %v776 = vpop.permute.xlu0 %775
        %779 = vset.pattern.permute.xlu0 0
        %780 = vperm.xlu0 %779, %v674
        %v781 = vpop.permute.xlu0 %780
        %784 = vset.pattern.permute.xlu0 0
        %785 = vperm.xlu0 %784, %v675
        %v786 = vpop.permute.xlu0 %785
        %789 = vset.pattern.permute.xlu0 0
        %790 = vperm.xlu0 %789, %v676
        %v791 = vpop.permute.xlu0 %790
        %794 = vset.pattern.permute.xlu0 0
        %795 = vperm.xlu0 %794, %v677
        %v796 = vpop.permute.xlu0 %795
        %799 = vset.pattern.permute.xlu0 0
        %800 = vperm.xlu0 %799, %v678
        %v801 = vpop.permute.xlu0 %800
        %804 = vset.pattern.permute.xlu0 0
        %805 = vperm.xlu0 %804, %v679
        %v806 = vpop.permute.xlu0 %805
        %809 = vset.pattern.permute.xlu0 0
        %810 = vperm.xlu0 %809, %v680
        %v811 = vpop.permute.xlu0 %810
        %814 = vset.pattern.permute.xlu0 0
        %815 = vperm.xlu0 %814, %v681
        %v816 = vpop.permute.xlu0 %815
        %819 = vset.pattern.permute.xlu0 0
        %820 = vperm.xlu0 %819, %v682
        %v821 = vpop.permute.xlu0 %820
        %824 = vset.pattern.permute.xlu0 0
        %825 = vperm.xlu0 %824, %v683
        %v826 = vpop.permute.xlu0 %825
        %829 = vset.pattern.permute.xlu0 0
        %830 = vperm.xlu0 %829, %v684
        %v831 = vpop.permute.xlu0 %830
        %834 = vset.pattern.permute.xlu0 0
        %835 = vperm.xlu0 %834, %v685
        %v836 = vpop.permute.xlu0 %835
        %839 = vset.pattern.permute.xlu0 0
        %840 = vperm.xlu0 %839, %v686
        %v841 = vpop.permute.xlu0 %840
        %844 = vset.pattern.permute.xlu0 0
        %845 = vperm.xlu0 %844, %v687
        %v846 = vpop.permute.xlu0 %845
        %849 = vset.pattern.permute.xlu0 0
        %850 = vperm.xlu0 %849, %v688
        %v851 = vpop.permute.xlu0 %850
        %854 = vset.pattern.permute.xlu0 0
        %855 = vperm.xlu0 %854, %v689
        %v856 = vpop.permute.xlu0 %855
        %859 = vset.pattern.permute.xlu0 0
        %860 = vperm.xlu0 %859, %v690
        %v861 = vpop.permute.xlu0 %860
        %864 = vset.pattern.permute.xlu0 0
        %865 = vperm.xlu0 %864, %v691
        %v866 = vpop.permute.xlu0 %865
        %869 = vset.pattern.permute.xlu0 0
        %870 = vperm.xlu0 %869, %v692
        %v871 = vpop.permute.xlu0 %870
        %874 = vset.pattern.permute.xlu0 0
        %875 = vperm.xlu0 %874, %v693
        %v876 = vpop.permute.xlu0 %875
        %879 = vset.pattern.permute.xlu0 0
        %880 = vperm.xlu0 %879, %v694
        %v881 = vpop.permute.xlu0 %880
        %884 = vset.pattern.permute.xlu0 0
        %885 = vperm.xlu0 %884, %v695
        %v886 = vpop.permute.xlu0 %885
        %v888 = vmul.f32 %v731, %v696
        %v889 = vmul.f32 %v736, %v697
        %v890 = vmul.f32 %v741, %v698
        %v891 = vmul.f32 %v746, %v699
        %v892 = vmul.f32 %v751, %v700
        %v893 = vmul.f32 %v756, %v701
        %v894 = vmul.f32 %v761, %v702
        %v895 = vmul.f32 %v766, %v703
        %v896 = vmul.f32 %v771, %v704
        %v897 = vmul.f32 %v776, %v705
        %v898 = vmul.f32 %v781, %v706
        %v899 = vmul.f32 %v786, %v707
        %v900 = vmul.f32 %v791, %v708
        %v901 = vmul.f32 %v796, %v709
        %v902 = vmul.f32 %v801, %v710
        %v903 = vmul.f32 %v806, %v711
        %v904 = vmul.f32 %v811, %v712
        %v905 = vmul.f32 %v816, %v713
        %v906 = vmul.f32 %v821, %v714
        %v907 = vmul.f32 %v826, %v715
        %v908 = vmul.f32 %v831, %v716
        %v909 = vmul.f32 %v836, %v717
        %v910 = vmul.f32 %v841, %v718
        %v911 = vmul.f32 %v846, %v719
        %v912 = vmul.f32 %v851, %v720
        %v913 = vmul.f32 %v856, %v721
        %v914 = vmul.f32 %v861, %v722
        %v915 = vmul.f32 %v866, %v723
        %v916 = vmul.f32 %v871, %v724
        %v917 = vmul.f32 %v876, %v725
        %v918 = vmul.f32 %v881, %v726
        %v919 = vmul.f32 %v886, %v727
        %v920 = vpack.c.bf16 %v889, %v888
        %v921 = vpack.c.bf16 %v891, %v890
        %v922 = vpack.c.bf16 %v893, %v892
        %v923 = vpack.c.bf16 %v895, %v894
        %v924 = vpack.c.bf16 %v897, %v896
        %v925 = vpack.c.bf16 %v899, %v898
        %v926 = vpack.c.bf16 %v901, %v900
        %v927 = vpack.c.bf16 %v903, %v902
        %v928 = vpack.c.bf16 %v905, %v904
        %v929 = vpack.c.bf16 %v907, %v906
        %v930 = vpack.c.bf16 %v909, %v908
        %v931 = vpack.c.bf16 %v911, %v910
        %v932 = vpack.c.bf16 %v913, %v912
        %v933 = vpack.c.bf16 %v915, %v914
        %v934 = vpack.c.bf16 %v917, %v916
        %v935 = vpack.c.bf16 %v919, %v918
        %v936 = vld [vmem:[#allocation2] sm:$0xff]
        %v937 = vld [vmem:[#allocation2 + $0x8] sm:$0xff]
        %v938 = vld [vmem:[#allocation2 + $0x10] sm:$0xff]
        %v939 = vld [vmem:[#allocation2 + $0x18] sm:$0xff]
        %v940 = vld [vmem:[#allocation2 + $0x20] sm:$0xff]
        %v941 = vld [vmem:[#allocation2 + $0x28] sm:$0xff]
        %v942 = vld [vmem:[#allocation2 + $0x30] sm:$0xff]
        %v943 = vld [vmem:[#allocation2 + $0x38] sm:$0xff]
        %v944 = vld [vmem:[#allocation2 + $0x40] sm:$0xff]
        %v945 = vld [vmem:[#allocation2 + $0x48] sm:$0xff]
        %v946 = vld [vmem:[#allocation2 + $0x50] sm:$0xff]
        %v947 = vld [vmem:[#allocation2 + $0x58] sm:$0xff]
        %v948 = vld [vmem:[#allocation2 + $0x60] sm:$0xff]
        %v949 = vld [vmem:[#allocation2 + $0x68] sm:$0xff]
        %v950 = vld [vmem:[#allocation2 + $0x70] sm:$0xff]
        %v951 = vld [vmem:[#allocation2 + $0x78] sm:$0xff]
        %v952 = vld [vmem:[#allocation2 + $0x80] sm:$0xff]
        %v953 = vld [vmem:[#allocation2 + $0x88] sm:$0xff]
        %v954 = vld [vmem:[#allocation2 + $0x90] sm:$0xff]
        %v955 = vld [vmem:[#allocation2 + $0x98] sm:$0xff]
        %v956 = vld [vmem:[#allocation2 + $0xa0] sm:$0xff]
        %v957 = vld [vmem:[#allocation2 + $0xa8] sm:$0xff]
        %v958 = vld [vmem:[#allocation2 + $0xb0] sm:$0xff]
        %v959 = vld [vmem:[#allocation2 + $0xb8] sm:$0xff]
        %v960 = vld [vmem:[#allocation2 + $0xc0] sm:$0xff]
        %v961 = vld [vmem:[#allocation2 + $0xc8] sm:$0xff]
        %v962 = vld [vmem:[#allocation2 + $0xd0] sm:$0xff]
        %v963 = vld [vmem:[#allocation2 + $0xd8] sm:$0xff]
        %v964 = vld [vmem:[#allocation2 + $0xe0] sm:$0xff]
        %v965 = vld [vmem:[#allocation2 + $0xe8] sm:$0xff]
        %v966 = vld [vmem:[#allocation2 + $0xf0] sm:$0xff]
        %v967 = vld [vmem:[#allocation2 + $0xf8] sm:$0xff]
        %v968 = vld [vmem:[%s544] sm:$0xff]
        %v969 = vld [vmem:[%s544 + $0x8] sm:$0xff]
        %v970 = vld [vmem:[%s544 + $0x10] sm:$0xff]
        %v971 = vld [vmem:[%s544 + $0x18] sm:$0xff]
        %v972 = vld [vmem:[%s544 + $0x20] sm:$0xff]
        %v973 = vld [vmem:[%s544 + $0x28] sm:$0xff]
        %v974 = vld [vmem:[%s544 + $0x30] sm:$0xff]
        %v975 = vld [vmem:[%s544 + $0x38] sm:$0xff]
        %v976 = vld [vmem:[%s544 + $0x40] sm:$0xff]
        %v977 = vld [vmem:[%s544 + $0x48] sm:$0xff]
        %v978 = vld [vmem:[%s544 + $0x50] sm:$0xff]
        %v979 = vld [vmem:[%s544 + $0x58] sm:$0xff]
        %v980 = vld [vmem:[%s544 + $0x60] sm:$0xff]
        %v981 = vld [vmem:[%s544 + $0x68] sm:$0xff]
        %v982 = vld [vmem:[%s544 + $0x70] sm:$0xff]
        %v983 = vld [vmem:[%s544 + $0x78] sm:$0xff]
        %v984 = vld [vmem:[%s544 + $0x80] sm:$0xff]
        %v985 = vld [vmem:[%s544 + $0x88] sm:$0xff]
        %v986 = vld [vmem:[%s544 + $0x90] sm:$0xff]
        %v987 = vld [vmem:[%s544 + $0x98] sm:$0xff]
        %v988 = vld [vmem:[%s544 + $0xa0] sm:$0xff]
        %v989 = vld [vmem:[%s544 + $0xa8] sm:$0xff]
        %v990 = vld [vmem:[%s544 + $0xb0] sm:$0xff]
        %v991 = vld [vmem:[%s544 + $0xb8] sm:$0xff]
        %v992 = vld [vmem:[%s544 + $0xc0] sm:$0xff]
        %v993 = vld [vmem:[%s544 + $0xc8] sm:$0xff]
        %v994 = vld [vmem:[%s544 + $0xd0] sm:$0xff]
        %v995 = vld [vmem:[%s544 + $0xd8] sm:$0xff]
        %v996 = vld [vmem:[%s544 + $0xe0] sm:$0xff]
        %v997 = vld [vmem:[%s544 + $0xe8] sm:$0xff]
        %v998 = vld [vmem:[%s544 + $0xf0] sm:$0xff]
        %v999 = vld [vmem:[%s544 + $0xf8] sm:$0xff]
        %v1032 = vunpack.c.l.b16 %v968
        %v1033 = vunpack.c.h.b16 %v968
        %v1034 = vunpack.c.l.b16 %v969
        %v1035 = vunpack.c.h.b16 %v969
        %v1036 = vunpack.c.l.b16 %v970
        %v1037 = vunpack.c.h.b16 %v970
        %v1038 = vunpack.c.l.b16 %v971
        %v1039 = vunpack.c.h.b16 %v971
        %v1040 = vunpack.c.l.b16 %v972
        %v1041 = vunpack.c.h.b16 %v972
        %v1042 = vunpack.c.l.b16 %v973
        %v1043 = vunpack.c.h.b16 %v973
        %v1044 = vunpack.c.l.b16 %v974
        %v1045 = vunpack.c.h.b16 %v974
        %v1046 = vunpack.c.l.b16 %v975
        %v1047 = vunpack.c.h.b16 %v975
        %v1048 = vunpack.c.l.b16 %v976
        %v1049 = vunpack.c.h.b16 %v976
        %v1050 = vunpack.c.l.b16 %v977
        %v1051 = vunpack.c.h.b16 %v977
        %v1052 = vunpack.c.l.b16 %v978
        %v1053 = vunpack.c.h.b16 %v978
        %v1054 = vunpack.c.l.b16 %v979
        %v1055 = vunpack.c.h.b16 %v979
        %v1056 = vunpack.c.l.b16 %v980
        %v1057 = vunpack.c.h.b16 %v980
        %v1058 = vunpack.c.l.b16 %v981
        %v1059 = vunpack.c.h.b16 %v981
        %v1060 = vunpack.c.l.b16 %v982
        %v1061 = vunpack.c.h.b16 %v982
        %v1062 = vunpack.c.l.b16 %v983
        %v1063 = vunpack.c.h.b16 %v983
        %v1064 = vunpack.c.l.b16 %v984
        %v1065 = vunpack.c.h.b16 %v984
        %v1066 = vunpack.c.l.b16 %v985
        %v1067 = vunpack.c.h.b16 %v985
        %v1068 = vunpack.c.l.b16 %v986
        %v1069 = vunpack.c.h.b16 %v986
        %v1070 = vunpack.c.l.b16 %v987
        %v1071 = vunpack.c.h.b16 %v987
        %v1072 = vunpack.c.l.b16 %v988
        %v1073 = vunpack.c.h.b16 %v988
        %v1074 = vunpack.c.l.b16 %v989
        %v1075 = vunpack.c.h.b16 %v989
        %v1076 = vunpack.c.l.b16 %v990
        %v1077 = vunpack.c.h.b16 %v990
        %v1078 = vunpack.c.l.b16 %v991
        %v1079 = vunpack.c.h.b16 %v991
        %v1080 = vunpack.c.l.b16 %v992
        %v1081 = vunpack.c.h.b16 %v992
        %v1082 = vunpack.c.l.b16 %v993
        %v1083 = vunpack.c.h.b16 %v993
        %v1084 = vunpack.c.l.b16 %v994
        %v1085 = vunpack.c.h.b16 %v994
        %v1086 = vunpack.c.l.b16 %v995
        %v1087 = vunpack.c.h.b16 %v995
        %v1088 = vunpack.c.l.b16 %v996
        %v1089 = vunpack.c.h.b16 %v996
        %v1090 = vunpack.c.l.b16 %v997
        %v1091 = vunpack.c.h.b16 %v997
        %v1092 = vunpack.c.l.b16 %v998
        %v1093 = vunpack.c.h.b16 %v998
        %v1094 = vunpack.c.l.b16 %v999
        %v1095 = vunpack.c.h.b16 %v999
        %v1096 = vpack.c.b16 %v1034, %v1032
        %v1097 = vpack.c.b16 %v1035, %v1033
        %v1098 = vpack.c.b16 %v1038, %v1036
        %v1099 = vpack.c.b16 %v1039, %v1037
        %v1100 = vpack.c.b16 %v1042, %v1040
        %v1101 = vpack.c.b16 %v1043, %v1041
        %v1102 = vpack.c.b16 %v1046, %v1044
        %v1103 = vpack.c.b16 %v1047, %v1045
        %v1104 = vpack.c.b16 %v1050, %v1048
        %v1105 = vpack.c.b16 %v1051, %v1049
        %v1106 = vpack.c.b16 %v1054, %v1052
        %v1107 = vpack.c.b16 %v1055, %v1053
        %v1108 = vpack.c.b16 %v1058, %v1056
        %v1109 = vpack.c.b16 %v1059, %v1057
        %v1110 = vpack.c.b16 %v1062, %v1060
        %v1111 = vpack.c.b16 %v1063, %v1061
        %v1112 = vpack.c.b16 %v1066, %v1064
        %v1113 = vpack.c.b16 %v1067, %v1065
        %v1114 = vpack.c.b16 %v1070, %v1068
        %v1115 = vpack.c.b16 %v1071, %v1069
        %v1116 = vpack.c.b16 %v1074, %v1072
        %v1117 = vpack.c.b16 %v1075, %v1073
        %v1118 = vpack.c.b16 %v1078, %v1076
        %v1119 = vpack.c.b16 %v1079, %v1077
        %v1120 = vpack.c.b16 %v1082, %v1080
        %v1121 = vpack.c.b16 %v1083, %v1081
        %v1122 = vpack.c.b16 %v1086, %v1084
        %v1123 = vpack.c.b16 %v1087, %v1085
        %v1124 = vpack.c.b16 %v1090, %v1088
        %v1125 = vpack.c.b16 %v1091, %v1089
        %v1126 = vpack.c.b16 %v1094, %v1092
        %v1127 = vpack.c.b16 %v1095, %v1093
        %1160 = vmatprep.subr.bf16.mxu0 0
        %1161 = vmatpush1.bf16.msra.mxu0 %v927
        %1162 = vmatprep.subr.bf16.mxu0 0
        %1163 = vmatpush1.bf16.msra.mxu0 %v926
        %1164 = vmatprep.subr.bf16.mxu0 0
        %1165 = vmatpush1.bf16.msra.mxu0 %v925
        %1166 = vmatprep.subr.bf16.mxu0 0
        %1167 = vmatpush1.bf16.msra.mxu0 %v924
        %1168 = vmatprep.subr.bf16.mxu0 0
        %1169 = vmatpush1.bf16.msra.mxu0 %v923
        %1170 = vmatprep.subr.bf16.mxu0 0
        %1171 = vmatpush1.bf16.msra.mxu0 %v922
        %1172 = vmatprep.subr.bf16.mxu0 0
        %1173 = vmatpush1.bf16.msra.mxu0 %v921
        %1174 = vmatprep.subr.bf16.mxu0 0
        %1175 = vmatpush1.bf16.msra.mxu0 %v920
        %1176 = vmatprep.subr.bf16.mxu0 0
        %1177 = vmatpush2.bf16.msra.mxu0 %v935
        %1178 = vmatprep.subr.bf16.mxu0 0
        %1179 = vmatpush2.bf16.msra.mxu0 %v934
        %1180 = vmatprep.subr.bf16.mxu0 0
        %1181 = vmatpush2.bf16.msra.mxu0 %v933
        %1182 = vmatprep.subr.bf16.mxu0 0
        %1183 = vmatpush2.bf16.msra.mxu0 %v932
        %1184 = vmatprep.subr.bf16.mxu0 0
        %1185 = vmatpush2.bf16.msra.mxu0 %v931
        %1186 = vmatprep.subr.bf16.mxu0 0
        %1187 = vmatpush2.bf16.msra.mxu0 %v930
        %1188 = vmatprep.subr.bf16.mxu0 0
        %1189 = vmatpush2.bf16.msra.mxu0 %v929
        %1190 = vmatprep.subr.bf16.mxu0 0
        %1191 = vmatpush2.bf16.msra.mxu0 %v928
        %1192 = vmatprep.mubr.bf16.mxu0 %v1097
        %1193 = vmatmul.mubr.bf16.gmra.mxu0 %v1096
        %v1194 = vpop.f32.mrf.mxu0
        %v1195 = vadd.f32 0.0, %v1194
        %v1196 = vpop.f32.mrf.mxu0
        %v1197 = vpop.f32.mrf.mxu0
        %v1198 = vadd.f32 0.0, %v1197
        %v1199 = vpop.f32.mrf.mxu0
        %1200 = vmatprep.mubr.bf16.mxu0 %v1099
        %1201 = vmatmul.mubr.bf16.gmra.mxu0 %v1098
        %v1202 = vpop.f32.mrf.mxu0
        %v1203 = vadd.f32 0.0, %v1202
        %v1204 = vpop.f32.mrf.mxu0
        %v1205 = vpop.f32.mrf.mxu0
        %v1206 = vadd.f32 0.0, %v1205
        %v1207 = vpop.f32.mrf.mxu0
        %1208 = vmatprep.mubr.bf16.mxu0 %v1101
        %1209 = vmatmul.mubr.bf16.gmra.mxu0 %v1100
        %v1210 = vpop.f32.mrf.mxu0
        %v1211 = vadd.f32 0.0, %v1210
        %v1212 = vpop.f32.mrf.mxu0
        %v1213 = vpop.f32.mrf.mxu0
        %v1214 = vadd.f32 0.0, %v1213
        %v1215 = vpop.f32.mrf.mxu0
        %1216 = vmatprep.mubr.bf16.mxu0 %v1103
        %1217 = vmatmul.mubr.bf16.gmra.mxu0 %v1102
        %v1218 = vpop.f32.mrf.mxu0
        %v1219 = vadd.f32 0.0, %v1218
        %v1220 = vpop.f32.mrf.mxu0
        %v1221 = vpop.f32.mrf.mxu0
        %v1222 = vadd.f32 0.0, %v1221
        %v1223 = vpop.f32.mrf.mxu0
        %1224 = vmatprep.mubr.bf16.mxu0 %v1105
        %1225 = vmatmul.mubr.bf16.gmra.mxu0 %v1104
        %v1226 = vpop.f32.mrf.mxu0
        %v1227 = vadd.f32 0.0, %v1226
        %v1228 = vpop.f32.mrf.mxu0
        %v1229 = vpop.f32.mrf.mxu0
        %v1230 = vadd.f32 0.0, %v1229
        %v1231 = vpop.f32.mrf.mxu0
        %1232 = vmatprep.mubr.bf16.mxu0 %v1107
        %1233 = vmatmul.mubr.bf16.gmra.mxu0 %v1106
        %v1234 = vpop.f32.mrf.mxu0
        %v1235 = vadd.f32 0.0, %v1234
        %v1236 = vpop.f32.mrf.mxu0
        %v1237 = vpop.f32.mrf.mxu0
        %v1238 = vadd.f32 0.0, %v1237
        %v1239 = vpop.f32.mrf.mxu0
        %1240 = vmatprep.mubr.bf16.mxu0 %v1109
        %1241 = vmatmul.mubr.bf16.gmra.mxu0 %v1108
        %v1242 = vpop.f32.mrf.mxu0
        %v1243 = vadd.f32 0.0, %v1242
        %v1244 = vpop.f32.mrf.mxu0
        %v1245 = vpop.f32.mrf.mxu0
        %v1246 = vadd.f32 0.0, %v1245
        %v1247 = vpop.f32.mrf.mxu0
        %1248 = vmatprep.mubr.bf16.mxu0 %v1111
        %1249 = vmatmul.mubr.bf16.gmra.mxu0 %v1110
        %v1250 = vpop.f32.mrf.mxu0
        %v1251 = vadd.f32 0.0, %v1250
        %v1252 = vpop.f32.mrf.mxu0
        %v1253 = vpop.f32.mrf.mxu0
        %v1254 = vadd.f32 0.0, %v1253
        %v1255 = vpop.f32.mrf.mxu0
        %1256 = vmatprep.mubr.bf16.mxu0 %v1113
        %1257 = vmatmul.mubr.bf16.gmra.mxu0 %v1112
        %v1258 = vpop.f32.mrf.mxu0
        %v1259 = vadd.f32 0.0, %v1258
        %v1260 = vpop.f32.mrf.mxu0
        %v1261 = vpop.f32.mrf.mxu0
        %v1262 = vadd.f32 0.0, %v1261
        %v1263 = vpop.f32.mrf.mxu0
        %1264 = vmatprep.mubr.bf16.mxu0 %v1115
        %1265 = vmatmul.mubr.bf16.gmra.mxu0 %v1114
        %v1266 = vpop.f32.mrf.mxu0
        %v1267 = vadd.f32 0.0, %v1266
        %v1268 = vpop.f32.mrf.mxu0
        %v1269 = vpop.f32.mrf.mxu0
        %v1270 = vadd.f32 0.0, %v1269
        %v1271 = vpop.f32.mrf.mxu0
        %1272 = vmatprep.mubr.bf16.mxu0 %v1117
        %1273 = vmatmul.mubr.bf16.gmra.mxu0 %v1116
        %v1274 = vpop.f32.mrf.mxu0
        %v1275 = vadd.f32 0.0, %v1274
        %v1276 = vpop.f32.mrf.mxu0
        %v1277 = vpop.f32.mrf.mxu0
        %v1278 = vadd.f32 0.0, %v1277
        %v1279 = vpop.f32.mrf.mxu0
        %1280 = vmatprep.mubr.bf16.mxu0 %v1119
        %1281 = vmatmul.mubr.bf16.gmra.mxu0 %v1118
        %v1282 = vpop.f32.mrf.mxu0
        %v1283 = vadd.f32 0.0, %v1282
        %v1284 = vpop.f32.mrf.mxu0
        %v1285 = vpop.f32.mrf.mxu0
        %v1286 = vadd.f32 0.0, %v1285
        %v1287 = vpop.f32.mrf.mxu0
        %1288 = vmatprep.mubr.bf16.mxu0 %v1121
        %1289 = vmatmul.mubr.bf16.gmra.mxu0 %v1120
        %v1290 = vpop.f32.mrf.mxu0
        %v1291 = vadd.f32 0.0, %v1290
        %v1292 = vpop.f32.mrf.mxu0
        %v1293 = vpop.f32.mrf.mxu0
        %v1294 = vadd.f32 0.0, %v1293
        %v1295 = vpop.f32.mrf.mxu0
        %1296 = vmatprep.mubr.bf16.mxu0 %v1123
        %1297 = vmatmul.mubr.bf16.gmra.mxu0 %v1122
        %v1298 = vpop.f32.mrf.mxu0
        %v1299 = vadd.f32 0.0, %v1298
        %v1300 = vpop.f32.mrf.mxu0
        %v1301 = vpop.f32.mrf.mxu0
        %v1302 = vadd.f32 0.0, %v1301
        %v1303 = vpop.f32.mrf.mxu0
        %1304 = vmatprep.mubr.bf16.mxu0 %v1125
        %1305 = vmatmul.mubr.bf16.gmra.mxu0 %v1124
        %v1306 = vpop.f32.mrf.mxu0
        %v1307 = vadd.f32 0.0, %v1306
        %v1308 = vpop.f32.mrf.mxu0
        %v1309 = vpop.f32.mrf.mxu0
        %v1310 = vadd.f32 0.0, %v1309
        %v1311 = vpop.f32.mrf.mxu0
        %1312 = vmatprep.mubr.bf16.mxu0 %v1127
        %1313 = vmatmul.mubr.bf16.gmra.mxu0 %v1126
        %v1314 = vpop.f32.mrf.mxu0
        %v1315 = vadd.f32 0.0, %v1314
        %v1316 = vpop.f32.mrf.mxu0
        %v1317 = vpop.f32.mrf.mxu0
        %v1318 = vadd.f32 0.0, %v1317
        %v1319 = vpop.f32.mrf.mxu0
        %1320 = vdwg.mxu0
        %v1321 = vadd.f32 %v936, %v1195
        %v1322 = vadd.f32 %v937, %v1198
        %v1323 = vadd.f32 %v938, %v1203
        %v1324 = vadd.f32 %v939, %v1206
        %v1325 = vadd.f32 %v940, %v1211
        %v1326 = vadd.f32 %v941, %v1214
        %v1327 = vadd.f32 %v942, %v1219
        %v1328 = vadd.f32 %v943, %v1222
        %v1329 = vadd.f32 %v944, %v1227
        %v1330 = vadd.f32 %v945, %v1230
        %v1331 = vadd.f32 %v946, %v1235
        %v1332 = vadd.f32 %v947, %v1238
        %v1333 = vadd.f32 %v948, %v1243
        %v1334 = vadd.f32 %v949, %v1246
        %v1335 = vadd.f32 %v950, %v1251
        %v1336 = vadd.f32 %v951, %v1254
        %v1337 = vadd.f32 %v952, %v1259
        %v1338 = vadd.f32 %v953, %v1262
        %v1339 = vadd.f32 %v954, %v1267
        %v1340 = vadd.f32 %v955, %v1270
        %v1341 = vadd.f32 %v956, %v1275
        %v1342 = vadd.f32 %v957, %v1278
        %v1343 = vadd.f32 %v958, %v1283
        %v1344 = vadd.f32 %v959, %v1286
        %v1345 = vadd.f32 %v960, %v1291
        %v1346 = vadd.f32 %v961, %v1294
        %v1347 = vadd.f32 %v962, %v1299
        %v1348 = vadd.f32 %v963, %v1302
        %v1349 = vadd.f32 %v964, %v1307
        %v1350 = vadd.f32 %v965, %v1310
        %v1351 = vadd.f32 %v966, %v1315
        %v1352 = vadd.f32 %v967, %v1318
        %vm1353 = vcmask 523264
        %1354 = vst.msk [vmem:[#allocation2] sm:$0xff] %vm1353, %v1321
        %1355 = vst.msk [vmem:[#allocation2 + $0x8] sm:$0xff] %vm1353, %v1322
        %1356 = vst.msk [vmem:[#allocation2 + $0x10] sm:$0xff] %vm1353, %v1323
        %1357 = vst.msk [vmem:[#allocation2 + $0x18] sm:$0xff] %vm1353, %v1324
        %1358 = vst.msk [vmem:[#allocation2 + $0x20] sm:$0xff] %vm1353, %v1325
        %1359 = vst.msk [vmem:[#allocation2 + $0x28] sm:$0xff] %vm1353, %v1326
        %1360 = vst.msk [vmem:[#allocation2 + $0x30] sm:$0xff] %vm1353, %v1327
        %1361 = vst.msk [vmem:[#allocation2 + $0x38] sm:$0xff] %vm1353, %v1328
        %1362 = vst.msk [vmem:[#allocation2 + $0x40] sm:$0xff] %vm1353, %v1329
        %1363 = vst.msk [vmem:[#allocation2 + $0x48] sm:$0xff] %vm1353, %v1330
        %1364 = vst.msk [vmem:[#allocation2 + $0x50] sm:$0xff] %vm1353, %v1331
        %1365 = vst.msk [vmem:[#allocation2 + $0x58] sm:$0xff] %vm1353, %v1332
        %1366 = vst.msk [vmem:[#allocation2 + $0x60] sm:$0xff] %vm1353, %v1333
        %1367 = vst.msk [vmem:[#allocation2 + $0x68] sm:$0xff] %vm1353, %v1334
        %1368 = vst.msk [vmem:[#allocation2 + $0x70] sm:$0xff] %vm1353, %v1335
        %1369 = vst.msk [vmem:[#allocation2 + $0x78] sm:$0xff] %vm1353, %v1336
        %1370 = vst.msk [vmem:[#allocation2 + $0x80] sm:$0xff] %vm1353, %v1337
        %1371 = vst.msk [vmem:[#allocation2 + $0x88] sm:$0xff] %vm1353, %v1338
        %1372 = vst.msk [vmem:[#allocation2 + $0x90] sm:$0xff] %vm1353, %v1339
        %1373 = vst.msk [vmem:[#allocation2 + $0x98] sm:$0xff] %vm1353, %v1340
        %1374 = vst.msk [vmem:[#allocation2 + $0xa0] sm:$0xff] %vm1353, %v1341
        %1375 = vst.msk [vmem:[#allocation2 + $0xa8] sm:$0xff] %vm1353, %v1342
        %1376 = vst.msk [vmem:[#allocation2 + $0xb0] sm:$0xff] %vm1353, %v1343
        %1377 = vst.msk [vmem:[#allocation2 + $0xb8] sm:$0xff] %vm1353, %v1344
        %1378 = vst.msk [vmem:[#allocation2 + $0xc0] sm:$0xff] %vm1353, %v1345
        %1379 = vst.msk [vmem:[#allocation2 + $0xc8] sm:$0xff] %vm1353, %v1346
        %1380 = vst.msk [vmem:[#allocation2 + $0xd0] sm:$0xff] %vm1353, %v1347
        %1381 = vst.msk [vmem:[#allocation2 + $0xd8] sm:$0xff] %vm1353, %v1348
        %1382 = vst.msk [vmem:[#allocation2 + $0xe0] sm:$0xff] %vm1353, %v1349
        %1383 = vst.msk [vmem:[#allocation2 + $0xe8] sm:$0xff] %vm1353, %v1350
        %1384 = vst.msk [vmem:[#allocation2 + $0xf0] sm:$0xff] %vm1353, %v1351
        %1385 = vst.msk [vmem:[#allocation2 + $0xf8] sm:$0xff] %vm1353, %v1352
        %p1386 = scmp.eq.s32.totalorder %s29, 1
        // Predicated region
        $region103: #{tpu_custom_call.1} parent=93 // pred_check
          %p1387 = pneg %p1386
        $region104: #{tpu_custom_call.1} parent=93 // pred_check_branch
          %1389 = sbr.rel (%p1387) target = $region106
        $region105: #{tpu_custom_call.1} parent=93 // pred_region
          %v1390 = vld [vmem:[%s623] sm:$0xff]
          %v1391 = vld [vmem:[%s623 + $0x8] sm:$0xff]
          %v1392 = vld [vmem:[%s623 + $0x10] sm:$0xff]
          %v1393 = vld [vmem:[%s623 + $0x18] sm:$0xff]
          %v1394 = vld [vmem:[%s623 + $0x20] sm:$0xff]
          %v1395 = vld [vmem:[%s623 + $0x28] sm:$0xff]
          %v1396 = vld [vmem:[%s623 + $0x30] sm:$0xff]
          %v1397 = vld [vmem:[%s623 + $0x38] sm:$0xff]
          %v1398 = vld [vmem:[%s623 + $0x40] sm:$0xff]
          %v1399 = vld [vmem:[%s623 + $0x48] sm:$0xff]
          %v1400 = vld [vmem:[%s623 + $0x50] sm:$0xff]
          %v1401 = vld [vmem:[%s623 + $0x58] sm:$0xff]
          %v1402 = vld [vmem:[%s623 + $0x60] sm:$0xff]
          %v1403 = vld [vmem:[%s623 + $0x68] sm:$0xff]
          %v1404 = vld [vmem:[%s623 + $0x70] sm:$0xff]
          %v1405 = vld [vmem:[%s623 + $0x78] sm:$0xff]
          %v1406 = vld [vmem:[%s623 + $0x80] sm:$0xff]
          %v1407 = vld [vmem:[%s623 + $0x88] sm:$0xff]
          %v1408 = vld [vmem:[%s623 + $0x90] sm:$0xff]
          %v1409 = vld [vmem:[%s623 + $0x98] sm:$0xff]
          %v1410 = vld [vmem:[%s623 + $0xa0] sm:$0xff]
          %v1411 = vld [vmem:[%s623 + $0xa8] sm:$0xff]
          %v1412 = vld [vmem:[%s623 + $0xb0] sm:$0xff]
          %v1413 = vld [vmem:[%s623 + $0xb8] sm:$0xff]
          %v1414 = vld [vmem:[%s623 + $0xc0] sm:$0xff]
          %v1415 = vld [vmem:[%s623 + $0xc8] sm:$0xff]
          %v1416 = vld [vmem:[%s623 + $0xd0] sm:$0xff]
          %v1417 = vld [vmem:[%s623 + $0xd8] sm:$0xff]
          %v1418 = vld [vmem:[%s623 + $0xe0] sm:$0xff]
          %v1419 = vld [vmem:[%s623 + $0xe8] sm:$0xff]
          %v1420 = vld [vmem:[%s623 + $0xf0] sm:$0xff]
          %v1421 = vld [vmem:[%s623 + $0xf8] sm:$0xff]
          %v1422 = vmul.f32 %v1390, %v1390
          %v1423 = vmul.f32 %v1391, %v1391
          %v1424 = vmul.f32 %v1392, %v1392
          %v1425 = vmul.f32 %v1393, %v1393
          %v1426 = vmul.f32 %v1394, %v1394
          %v1427 = vmul.f32 %v1395, %v1395
          %v1428 = vmul.f32 %v1396, %v1396
          %v1429 = vmul.f32 %v1397, %v1397
          %v1430 = vmul.f32 %v1398, %v1398
          %v1431 = vmul.f32 %v1399, %v1399
          %v1432 = vmul.f32 %v1400, %v1400
          %v1433 = vmul.f32 %v1401, %v1401
          %v1434 = vmul.f32 %v1402, %v1402
          %v1435 = vmul.f32 %v1403, %v1403
          %v1436 = vmul.f32 %v1404, %v1404
          %v1437 = vmul.f32 %v1405, %v1405
          %v1438 = vmul.f32 %v1406, %v1406
          %v1439 = vmul.f32 %v1407, %v1407
          %v1440 = vmul.f32 %v1408, %v1408
          %v1441 = vmul.f32 %v1409, %v1409
          %v1442 = vmul.f32 %v1410, %v1410
          %v1443 = vmul.f32 %v1411, %v1411
          %v1444 = vmul.f32 %v1412, %v1412
          %v1445 = vmul.f32 %v1413, %v1413
          %v1446 = vmul.f32 %v1414, %v1414
          %v1447 = vmul.f32 %v1415, %v1415
          %v1448 = vmul.f32 %v1416, %v1416
          %v1449 = vmul.f32 %v1417, %v1417
          %v1450 = vmul.f32 %v1418, %v1418
          %v1451 = vmul.f32 %v1419, %v1419
          %v1452 = vmul.f32 %v1420, %v1420
          %v1453 = vmul.f32 %v1421, %v1421
          %v1454 = vld [vmem:[#allocation2] sm:$0xff]
          %v1455 = vld [vmem:[#allocation2 + $0x8] sm:$0xff]
          %v1456 = vld [vmem:[#allocation2 + $0x10] sm:$0xff]
          %v1457 = vld [vmem:[#allocation2 + $0x18] sm:$0xff]
          %v1458 = vld [vmem:[#allocation2 + $0x20] sm:$0xff]
          %v1459 = vld [vmem:[#allocation2 + $0x28] sm:$0xff]
          %v1460 = vld [vmem:[#allocation2 + $0x30] sm:$0xff]
          %v1461 = vld [vmem:[#allocation2 + $0x38] sm:$0xff]
          %v1462 = vld [vmem:[#allocation2 + $0x40] sm:$0xff]
          %v1463 = vld [vmem:[#allocation2 + $0x48] sm:$0xff]
          %v1464 = vld [vmem:[#allocation2 + $0x50] sm:$0xff]
          %v1465 = vld [vmem:[#allocation2 + $0x58] sm:$0xff]
          %v1466 = vld [vmem:[#allocation2 + $0x60] sm:$0xff]
          %v1467 = vld [vmem:[#allocation2 + $0x68] sm:$0xff]
          %v1468 = vld [vmem:[#allocation2 + $0x70] sm:$0xff]
          %v1469 = vld [vmem:[#allocation2 + $0x78] sm:$0xff]
          %v1470 = vld [vmem:[#allocation2 + $0x80] sm:$0xff]
          %v1471 = vld [vmem:[#allocation2 + $0x88] sm:$0xff]
          %v1472 = vld [vmem:[#allocation2 + $0x90] sm:$0xff]
          %v1473 = vld [vmem:[#allocation2 + $0x98] sm:$0xff]
          %v1474 = vld [vmem:[#allocation2 + $0xa0] sm:$0xff]
          %v1475 = vld [vmem:[#allocation2 + $0xa8] sm:$0xff]
          %v1476 = vld [vmem:[#allocation2 + $0xb0] sm:$0xff]
          %v1477 = vld [vmem:[#allocation2 + $0xb8] sm:$0xff]
          %v1478 = vld [vmem:[#allocation2 + $0xc0] sm:$0xff]
          %v1479 = vld [vmem:[#allocation2 + $0xc8] sm:$0xff]
          %v1480 = vld [vmem:[#allocation2 + $0xd0] sm:$0xff]
          %v1481 = vld [vmem:[#allocation2 + $0xd8] sm:$0xff]
          %v1482 = vld [vmem:[#allocation2 + $0xe0] sm:$0xff]
          %v1483 = vld [vmem:[#allocation2 + $0xe8] sm:$0xff]
          %v1484 = vld [vmem:[#allocation2 + $0xf0] sm:$0xff]
          %v1485 = vld [vmem:[#allocation2 + $0xf8] sm:$0xff]
          %1487 = vset.pattern.permute.xlu0 0
          %1488 = vperm.xlu0 %1487, %v1390
          %v1489 = vpop.permute.xlu0 %1488
          %1492 = vset.pattern.permute.xlu0 0
          %1493 = vperm.xlu0 %1492, %v1391
          %v1494 = vpop.permute.xlu0 %1493
          %1497 = vset.pattern.permute.xlu0 0
          %1498 = vperm.xlu0 %1497, %v1392
          %v1499 = vpop.permute.xlu0 %1498
          %1502 = vset.pattern.permute.xlu0 0
          %1503 = vperm.xlu0 %1502, %v1393
          %v1504 = vpop.permute.xlu0 %1503
          %1507 = vset.pattern.permute.xlu0 0
          %1508 = vperm.xlu0 %1507, %v1394
          %v1509 = vpop.permute.xlu0 %1508
          %1512 = vset.pattern.permute.xlu0 0
          %1513 = vperm.xlu0 %1512, %v1395
          %v1514 = vpop.permute.xlu0 %1513
          %1517 = vset.pattern.permute.xlu0 0
          %1518 = vperm.xlu0 %1517, %v1396
          %v1519 = vpop.permute.xlu0 %1518
          %1522 = vset.pattern.permute.xlu0 0
          %1523 = vperm.xlu0 %1522, %v1397
          %v1524 = vpop.permute.xlu0 %1523
          %1527 = vset.pattern.permute.xlu0 0
          %1528 = vperm.xlu0 %1527, %v1398
          %v1529 = vpop.permute.xlu0 %1528
          %1532 = vset.pattern.permute.xlu0 0
          %1533 = vperm.xlu0 %1532, %v1399
          %v1534 = vpop.permute.xlu0 %1533
          %1537 = vset.pattern.permute.xlu0 0
          %1538 = vperm.xlu0 %1537, %v1400
          %v1539 = vpop.permute.xlu0 %1538
          %1542 = vset.pattern.permute.xlu0 0
          %1543 = vperm.xlu0 %1542, %v1401
          %v1544 = vpop.permute.xlu0 %1543
          %1547 = vset.pattern.permute.xlu0 0
          %1548 = vperm.xlu0 %1547, %v1402
          %v1549 = vpop.permute.xlu0 %1548
          %1552 = vset.pattern.permute.xlu0 0
          %1553 = vperm.xlu0 %1552, %v1403
          %v1554 = vpop.permute.xlu0 %1553
          %1557 = vset.pattern.permute.xlu0 0
          %1558 = vperm.xlu0 %1557, %v1404
          %v1559 = vpop.permute.xlu0 %1558
          %1562 = vset.pattern.permute.xlu0 0
          %1563 = vperm.xlu0 %1562, %v1405
          %v1564 = vpop.permute.xlu0 %1563
          %1567 = vset.pattern.permute.xlu0 0
          %1568 = vperm.xlu0 %1567, %v1406
          %v1569 = vpop.permute.xlu0 %1568
          %1572 = vset.pattern.permute.xlu0 0
          %1573 = vperm.xlu0 %1572, %v1407
          %v1574 = vpop.permute.xlu0 %1573
          %1577 = vset.pattern.permute.xlu0 0
          %1578 = vperm.xlu0 %1577, %v1408
          %v1579 = vpop.permute.xlu0 %1578
          %1582 = vset.pattern.permute.xlu0 0
          %1583 = vperm.xlu0 %1582, %v1409
          %v1584 = vpop.permute.xlu0 %1583
          %1587 = vset.pattern.permute.xlu0 0
          %1588 = vperm.xlu0 %1587, %v1410
          %v1589 = vpop.permute.xlu0 %1588
          %1592 = vset.pattern.permute.xlu0 0
          %1593 = vperm.xlu0 %1592, %v1411
          %v1594 = vpop.permute.xlu0 %1593
          %1597 = vset.pattern.permute.xlu0 0
          %1598 = vperm.xlu0 %1597, %v1412
          %v1599 = vpop.permute.xlu0 %1598
          %1602 = vset.pattern.permute.xlu0 0
          %1603 = vperm.xlu0 %1602, %v1413
          %v1604 = vpop.permute.xlu0 %1603
          %1607 = vset.pattern.permute.xlu0 0
          %1608 = vperm.xlu0 %1607, %v1414
          %v1609 = vpop.permute.xlu0 %1608
          %1612 = vset.pattern.permute.xlu0 0
          %1613 = vperm.xlu0 %1612, %v1415
          %v1614 = vpop.permute.xlu0 %1613
          %1617 = vset.pattern.permute.xlu0 0
          %1618 = vperm.xlu0 %1617, %v1416
          %v1619 = vpop.permute.xlu0 %1618
          %1622 = vset.pattern.permute.xlu0 0
          %1623 = vperm.xlu0 %1622, %v1417
          %v1624 = vpop.permute.xlu0 %1623
          %1627 = vset.pattern.permute.xlu0 0
          %1628 = vperm.xlu0 %1627, %v1418
          %v1629 = vpop.permute.xlu0 %1628
          %1632 = vset.pattern.permute.xlu0 0
          %1633 = vperm.xlu0 %1632, %v1419
          %v1634 = vpop.permute.xlu0 %1633
          %1637 = vset.pattern.permute.xlu0 0
          %1638 = vperm.xlu0 %1637, %v1420
          %v1639 = vpop.permute.xlu0 %1638
          %1642 = vset.pattern.permute.xlu0 0
          %1643 = vperm.xlu0 %1642, %v1421
          %v1644 = vpop.permute.xlu0 %1643
          %v1646 = vmul.f32 %v1489, %v1454
          %v1647 = vmul.f32 %v1494, %v1455
          %v1648 = vmul.f32 %v1499, %v1456
          %v1649 = vmul.f32 %v1504, %v1457
          %v1650 = vmul.f32 %v1509, %v1458
          %v1651 = vmul.f32 %v1514, %v1459
          %v1652 = vmul.f32 %v1519, %v1460
          %v1653 = vmul.f32 %v1524, %v1461
          %v1654 = vmul.f32 %v1529, %v1462
          %v1655 = vmul.f32 %v1534, %v1463
          %v1656 = vmul.f32 %v1539, %v1464
          %v1657 = vmul.f32 %v1544, %v1465
          %v1658 = vmul.f32 %v1549, %v1466
          %v1659 = vmul.f32 %v1554, %v1467
          %v1660 = vmul.f32 %v1559, %v1468
          %v1661 = vmul.f32 %v1564, %v1469
          %v1662 = vmul.f32 %v1569, %v1470
          %v1663 = vmul.f32 %v1574, %v1471
          %v1664 = vmul.f32 %v1579, %v1472
          %v1665 = vmul.f32 %v1584, %v1473
          %v1666 = vmul.f32 %v1589, %v1474
          %v1667 = vmul.f32 %v1594, %v1475
          %v1668 = vmul.f32 %v1599, %v1476
          %v1669 = vmul.f32 %v1604, %v1477
          %v1670 = vmul.f32 %v1609, %v1478
          %v1671 = vmul.f32 %v1614, %v1479
          %v1672 = vmul.f32 %v1619, %v1480
          %v1673 = vmul.f32 %v1624, %v1481
          %v1674 = vmul.f32 %v1629, %v1482
          %v1675 = vmul.f32 %v1634, %v1483
          %v1676 = vmul.f32 %v1639, %v1484
          %v1677 = vmul.f32 %v1644, %v1485
          %v1678 = vld [vmem:[%s611] sm:$0xff]
          %v1679 = vld [vmem:[%s611 + $0x8] sm:$0xff]
          %v1680 = vld [vmem:[%s611 + $0x10] sm:$0xff]
          %v1681 = vld [vmem:[%s611 + $0x18] sm:$0xff]
          %v1682 = vld [vmem:[%s611 + $0x20] sm:$0xff]
          %v1683 = vld [vmem:[%s611 + $0x28] sm:$0xff]
          %v1684 = vld [vmem:[%s611 + $0x30] sm:$0xff]
          %v1685 = vld [vmem:[%s611 + $0x38] sm:$0xff]
          %v1686 = vld [vmem:[%s611 + $0x40] sm:$0xff]
          %v1687 = vld [vmem:[%s611 + $0x48] sm:$0xff]
          %v1688 = vld [vmem:[%s611 + $0x50] sm:$0xff]
          %v1689 = vld [vmem:[%s611 + $0x58] sm:$0xff]
          %v1690 = vld [vmem:[%s611 + $0x60] sm:$0xff]
          %v1691 = vld [vmem:[%s611 + $0x68] sm:$0xff]
          %v1692 = vld [vmem:[%s611 + $0x70] sm:$0xff]
          %v1693 = vld [vmem:[%s611 + $0x78] sm:$0xff]
          %v1694 = vld [vmem:[%s611 + $0x80] sm:$0xff]
          %v1695 = vld [vmem:[%s611 + $0x88] sm:$0xff]
          %v1696 = vld [vmem:[%s611 + $0x90] sm:$0xff]
          %v1697 = vld [vmem:[%s611 + $0x98] sm:$0xff]
          %v1698 = vld [vmem:[%s611 + $0xa0] sm:$0xff]
          %v1699 = vld [vmem:[%s611 + $0xa8] sm:$0xff]
          %v1700 = vld [vmem:[%s611 + $0xb0] sm:$0xff]
          %v1701 = vld [vmem:[%s611 + $0xb8] sm:$0xff]
          %v1702 = vld [vmem:[%s611 + $0xc0] sm:$0xff]
          %v1703 = vld [vmem:[%s611 + $0xc8] sm:$0xff]
          %v1704 = vld [vmem:[%s611 + $0xd0] sm:$0xff]
          %v1705 = vld [vmem:[%s611 + $0xd8] sm:$0xff]
          %v1706 = vld [vmem:[%s611 + $0xe0] sm:$0xff]
          %v1707 = vld [vmem:[%s611 + $0xe8] sm:$0xff]
          %v1708 = vld [vmem:[%s611 + $0xf0] sm:$0xff]
          %v1709 = vld [vmem:[%s611 + $0xf8] sm:$0xff]
          %1711 = vset.pattern.permute.xlu0 0
          %1712 = vperm.xlu0 %1711, %v1422
          %v1713 = vpop.permute.xlu0 %1712
          %1716 = vset.pattern.permute.xlu0 0
          %1717 = vperm.xlu0 %1716, %v1423
          %v1718 = vpop.permute.xlu0 %1717
          %1721 = vset.pattern.permute.xlu0 0
          %1722 = vperm.xlu0 %1721, %v1424
          %v1723 = vpop.permute.xlu0 %1722
          %1726 = vset.pattern.permute.xlu0 0
          %1727 = vperm.xlu0 %1726, %v1425
          %v1728 = vpop.permute.xlu0 %1727
          %1731 = vset.pattern.permute.xlu0 0
          %1732 = vperm.xlu0 %1731, %v1426
          %v1733 = vpop.permute.xlu0 %1732
          %1736 = vset.pattern.permute.xlu0 0
          %1737 = vperm.xlu0 %1736, %v1427
          %v1738 = vpop.permute.xlu0 %1737
          %1741 = vset.pattern.permute.xlu0 0
          %1742 = vperm.xlu0 %1741, %v1428
          %v1743 = vpop.permute.xlu0 %1742
          %1746 = vset.pattern.permute.xlu0 0
          %1747 = vperm.xlu0 %1746, %v1429
          %v1748 = vpop.permute.xlu0 %1747
          %1751 = vset.pattern.permute.xlu0 0
          %1752 = vperm.xlu0 %1751, %v1430
          %v1753 = vpop.permute.xlu0 %1752
          %1756 = vset.pattern.permute.xlu0 0
          %1757 = vperm.xlu0 %1756, %v1431
          %v1758 = vpop.permute.xlu0 %1757
          %1761 = vset.pattern.permute.xlu0 0
          %1762 = vperm.xlu0 %1761, %v1432
          %v1763 = vpop.permute.xlu0 %1762
          %1766 = vset.pattern.permute.xlu0 0
          %1767 = vperm.xlu0 %1766, %v1433
          %v1768 = vpop.permute.xlu0 %1767
          %1771 = vset.pattern.permute.xlu0 0
          %1772 = vperm.xlu0 %1771, %v1434
          %v1773 = vpop.permute.xlu0 %1772
          %1776 = vset.pattern.permute.xlu0 0
          %1777 = vperm.xlu0 %1776, %v1435
          %v1778 = vpop.permute.xlu0 %1777
          %1781 = vset.pattern.permute.xlu0 0
          %1782 = vperm.xlu0 %1781, %v1436
          %v1783 = vpop.permute.xlu0 %1782
          %1786 = vset.pattern.permute.xlu0 0
          %1787 = vperm.xlu0 %1786, %v1437
          %v1788 = vpop.permute.xlu0 %1787
          %1791 = vset.pattern.permute.xlu0 0
          %1792 = vperm.xlu0 %1791, %v1438
          %v1793 = vpop.permute.xlu0 %1792
          %1796 = vset.pattern.permute.xlu0 0
          %1797 = vperm.xlu0 %1796, %v1439
          %v1798 = vpop.permute.xlu0 %1797
          %1801 = vset.pattern.permute.xlu0 0
          %1802 = vperm.xlu0 %1801, %v1440
          %v1803 = vpop.permute.xlu0 %1802
          %1806 = vset.pattern.permute.xlu0 0
          %1807 = vperm.xlu0 %1806, %v1441
          %v1808 = vpop.permute.xlu0 %1807
          %1811 = vset.pattern.permute.xlu0 0
          %1812 = vperm.xlu0 %1811, %v1442
          %v1813 = vpop.permute.xlu0 %1812
          %1816 = vset.pattern.permute.xlu0 0
          %1817 = vperm.xlu0 %1816, %v1443
          %v1818 = vpop.permute.xlu0 %1817
          %1821 = vset.pattern.permute.xlu0 0
          %1822 = vperm.xlu0 %1821, %v1444
          %v1823 = vpop.permute.xlu0 %1822
          %1826 = vset.pattern.permute.xlu0 0
          %1827 = vperm.xlu0 %1826, %v1445
          %v1828 = vpop.permute.xlu0 %1827
          %1831 = vset.pattern.permute.xlu0 0
          %1832 = vperm.xlu0 %1831, %v1446
          %v1833 = vpop.permute.xlu0 %1832
          %1836 = vset.pattern.permute.xlu0 0
          %1837 = vperm.xlu0 %1836, %v1447
          %v1838 = vpop.permute.xlu0 %1837
          %1841 = vset.pattern.permute.xlu0 0
          %1842 = vperm.xlu0 %1841, %v1448
          %v1843 = vpop.permute.xlu0 %1842
          %1846 = vset.pattern.permute.xlu0 0
          %1847 = vperm.xlu0 %1846, %v1449
          %v1848 = vpop.permute.xlu0 %1847
          %1851 = vset.pattern.permute.xlu0 0
          %1852 = vperm.xlu0 %1851, %v1450
          %v1853 = vpop.permute.xlu0 %1852
          %1856 = vset.pattern.permute.xlu0 0
          %1857 = vperm.xlu0 %1856, %v1451
          %v1858 = vpop.permute.xlu0 %1857
          %1861 = vset.pattern.permute.xlu0 0
          %1862 = vperm.xlu0 %1861, %v1452
          %v1863 = vpop.permute.xlu0 %1862
          %1866 = vset.pattern.permute.xlu0 0
          %1867 = vperm.xlu0 %1866, %v1453
          %v1868 = vpop.permute.xlu0 %1867
          %v1870 = vmul.f32 %v1713, %v1678
          %v1871 = vmul.f32 %v1718, %v1679
          %v1872 = vmul.f32 %v1723, %v1680
          %v1873 = vmul.f32 %v1728, %v1681
          %v1874 = vmul.f32 %v1733, %v1682
          %v1875 = vmul.f32 %v1738, %v1683
          %v1876 = vmul.f32 %v1743, %v1684
          %v1877 = vmul.f32 %v1748, %v1685
          %v1878 = vmul.f32 %v1753, %v1686
          %v1879 = vmul.f32 %v1758, %v1687
          %v1880 = vmul.f32 %v1763, %v1688
          %v1881 = vmul.f32 %v1768, %v1689
          %v1882 = vmul.f32 %v1773, %v1690
          %v1883 = vmul.f32 %v1778, %v1691
          %v1884 = vmul.f32 %v1783, %v1692
          %v1885 = vmul.f32 %v1788, %v1693
          %v1886 = vmul.f32 %v1793, %v1694
          %v1887 = vmul.f32 %v1798, %v1695
          %v1888 = vmul.f32 %v1803, %v1696
          %v1889 = vmul.f32 %v1808, %v1697
          %v1890 = vmul.f32 %v1813, %v1698
          %v1891 = vmul.f32 %v1818, %v1699
          %v1892 = vmul.f32 %v1823, %v1700
          %v1893 = vmul.f32 %v1828, %v1701
          %v1894 = vmul.f32 %v1833, %v1702
          %v1895 = vmul.f32 %v1838, %v1703
          %v1896 = vmul.f32 %v1843, %v1704
          %v1897 = vmul.f32 %v1848, %v1705
          %v1898 = vmul.f32 %v1853, %v1706
          %v1899 = vmul.f32 %v1858, %v1707
          %v1900 = vmul.f32 %v1863, %v1708
          %v1901 = vmul.f32 %v1868, %v1709
          %v1902 = vadd.f32 %v1646, %v1870
          %v1903 = vadd.f32 %v1647, %v1871
          %v1904 = vadd.f32 %v1648, %v1872
          %v1905 = vadd.f32 %v1649, %v1873
          %v1906 = vadd.f32 %v1650, %v1874
          %v1907 = vadd.f32 %v1651, %v1875
          %v1908 = vadd.f32 %v1652, %v1876
          %v1909 = vadd.f32 %v1653, %v1877
          %v1910 = vadd.f32 %v1654, %v1878
          %v1911 = vadd.f32 %v1655, %v1879
          %v1912 = vadd.f32 %v1656, %v1880
          %v1913 = vadd.f32 %v1657, %v1881
          %v1914 = vadd.f32 %v1658, %v1882
          %v1915 = vadd.f32 %v1659, %v1883
          %v1916 = vadd.f32 %v1660, %v1884
          %v1917 = vadd.f32 %v1661, %v1885
          %v1918 = vadd.f32 %v1662, %v1886
          %v1919 = vadd.f32 %v1663, %v1887
          %v1920 = vadd.f32 %v1664, %v1888
          %v1921 = vadd.f32 %v1665, %v1889
          %v1922 = vadd.f32 %v1666, %v1890
          %v1923 = vadd.f32 %v1667, %v1891
          %v1924 = vadd.f32 %v1668, %v1892
          %v1925 = vadd.f32 %v1669, %v1893
          %v1926 = vadd.f32 %v1670, %v1894
          %v1927 = vadd.f32 %v1671, %v1895
          %v1928 = vadd.f32 %v1672, %v1896
          %v1929 = vadd.f32 %v1673, %v1897
          %v1930 = vadd.f32 %v1674, %v1898
          %v1931 = vadd.f32 %v1675, %v1899
          %v1932 = vadd.f32 %v1676, %v1900
          %v1933 = vadd.f32 %v1677, %v1901
          %v1934 = vld [vmem:[%s5] sm:$0x1]
          %v1936 = vlaneseq
          %v1937 = vshrl.u32 %v1936, 7
          %v1938 = vsub.s32 0, %v1937
          %v1939 = vrot.slane %v1934, %v1938
          %v1941 = vadd.f32 %v1902, %v1939
          %v1942 = vadd.f32 %v1903, %v1939
          %v1943 = vadd.f32 %v1904, %v1939
          %v1944 = vadd.f32 %v1905, %v1939
          %v1945 = vadd.f32 %v1906, %v1939
          %v1946 = vadd.f32 %v1907, %v1939
          %v1947 = vadd.f32 %v1908, %v1939
          %v1948 = vadd.f32 %v1909, %v1939
          %v1949 = vadd.f32 %v1910, %v1939
          %v1950 = vadd.f32 %v1911, %v1939
          %v1951 = vadd.f32 %v1912, %v1939
          %v1952 = vadd.f32 %v1913, %v1939
          %v1953 = vadd.f32 %v1914, %v1939
          %v1954 = vadd.f32 %v1915, %v1939
          %v1955 = vadd.f32 %v1916, %v1939
          %v1956 = vadd.f32 %v1917, %v1939
          %v1957 = vadd.f32 %v1918, %v1939
          %v1958 = vadd.f32 %v1919, %v1939
          %v1959 = vadd.f32 %v1920, %v1939
          %v1960 = vadd.f32 %v1921, %v1939
          %v1961 = vadd.f32 %v1922, %v1939
          %v1962 = vadd.f32 %v1923, %v1939
          %v1963 = vadd.f32 %v1924, %v1939
          %v1964 = vadd.f32 %v1925, %v1939
          %v1965 = vadd.f32 %v1926, %v1939
          %v1966 = vadd.f32 %v1927, %v1939
          %v1967 = vadd.f32 %v1928, %v1939
          %v1968 = vadd.f32 %v1929, %v1939
          %v1969 = vadd.f32 %v1930, %v1939
          %v1970 = vadd.f32 %v1931, %v1939
          %v1971 = vadd.f32 %v1932, %v1939
          %v1972 = vadd.f32 %v1933, %v1939
          %vm1973 = vcmp.gt.f32.partialorder %v1941, 0.0
          %vm1974 = vcmp.gt.f32.partialorder %v1942, 0.0
          %vm1975 = vcmp.gt.f32.partialorder %v1943, 0.0
          %vm1976 = vcmp.gt.f32.partialorder %v1944, 0.0
          %vm1977 = vcmp.gt.f32.partialorder %v1945, 0.0
          %vm1978 = vcmp.gt.f32.partialorder %v1946, 0.0
          %vm1979 = vcmp.gt.f32.partialorder %v1947, 0.0
          %vm1980 = vcmp.gt.f32.partialorder %v1948, 0.0
          %vm1981 = vcmp.gt.f32.partialorder %v1949, 0.0
          %vm1982 = vcmp.gt.f32.partialorder %v1950, 0.0
          %vm1983 = vcmp.gt.f32.partialorder %v1951, 0.0
          %vm1984 = vcmp.gt.f32.partialorder %v1952, 0.0
          %vm1985 = vcmp.gt.f32.partialorder %v1953, 0.0
          %vm1986 = vcmp.gt.f32.partialorder %v1954, 0.0
          %vm1987 = vcmp.gt.f32.partialorder %v1955, 0.0
          %vm1988 = vcmp.gt.f32.partialorder %v1956, 0.0
          %vm1989 = vcmp.gt.f32.partialorder %v1957, 0.0
          %vm1990 = vcmp.gt.f32.partialorder %v1958, 0.0
          %vm1991 = vcmp.gt.f32.partialorder %v1959, 0.0
          %vm1992 = vcmp.gt.f32.partialorder %v1960, 0.0
          %vm1993 = vcmp.gt.f32.partialorder %v1961, 0.0
          %vm1994 = vcmp.gt.f32.partialorder %v1962, 0.0
          %vm1995 = vcmp.gt.f32.partialorder %v1963, 0.0
          %vm1996 = vcmp.gt.f32.partialorder %v1964, 0.0
          %vm1997 = vcmp.gt.f32.partialorder %v1965, 0.0
          %vm1998 = vcmp.gt.f32.partialorder %v1966, 0.0
          %vm1999 = vcmp.gt.f32.partialorder %v1967, 0.0
          %vm2000 = vcmp.gt.f32.partialorder %v1968, 0.0
          %vm2001 = vcmp.gt.f32.partialorder %v1969, 0.0
          %vm2002 = vcmp.gt.f32.partialorder %v1970, 0.0
          %vm2003 = vcmp.gt.f32.partialorder %v1971, 0.0
          %vm2004 = vcmp.gt.f32.partialorder %v1972, 0.0
          %v2005 = vmul.f32 %v1941, 1.442695
          %v2006 = vpow.pop %v2005
          %v2007 = vmul.f32 %v1942, 1.442695
          %v2008 = vpow.pop %v2007
          %v2009 = vmul.f32 %v1943, 1.442695
          %v2010 = vpow.pop %v2009
          %v2011 = vmul.f32 %v1944, 1.442695
          %v2012 = vpow.pop %v2011
          %v2013 = vmul.f32 %v1945, 1.442695
          %v2014 = vpow.pop %v2013
          %v2015 = vmul.f32 %v1946, 1.442695
          %v2016 = vpow.pop %v2015
          %v2017 = vmul.f32 %v1947, 1.442695
          %v2018 = vpow.pop %v2017
          %v2019 = vmul.f32 %v1948, 1.442695
          %v2020 = vpow.pop %v2019
          %v2021 = vmul.f32 %v1949, 1.442695
          %v2022 = vpow.pop %v2021
          %v2023 = vmul.f32 %v1950, 1.442695
          %v2024 = vpow.pop %v2023
          %v2025 = vmul.f32 %v1951, 1.442695
          %v2026 = vpow.pop %v2025
          %v2027 = vmul.f32 %v1952, 1.442695
          %v2028 = vpow.pop %v2027
          %v2029 = vmul.f32 %v1953, 1.442695
          %v2030 = vpow.pop %v2029
          %v2031 = vmul.f32 %v1954, 1.442695
          %v2032 = vpow.pop %v2031
          %v2033 = vmul.f32 %v1955, 1.442695
          %v2034 = vpow.pop %v2033
          %v2035 = vmul.f32 %v1956, 1.442695
          %v2036 = vpow.pop %v2035
          %v2037 = vmul.f32 %v1957, 1.442695
          %v2038 = vpow.pop %v2037
          %v2039 = vmul.f32 %v1958, 1.442695
          %v2040 = vpow.pop %v2039
          %v2041 = vmul.f32 %v1959, 1.442695
          %v2042 = vpow.pop %v2041
          %v2043 = vmul.f32 %v1960, 1.442695
          %v2044 = vpow.pop %v2043
          %v2045 = vmul.f32 %v1961, 1.442695
          %v2046 = vpow.pop %v2045
          %v2047 = vmul.f32 %v1962, 1.442695
          %v2048 = vpow.pop %v2047
          %v2049 = vmul.f32 %v1963, 1.442695
          %v2050 = vpow.pop %v2049
          %v2051 = vmul.f32 %v1964, 1.442695
          %v2052 = vpow.pop %v2051
          %v2053 = vmul.f32 %v1965, 1.442695
          %v2054 = vpow.pop %v2053
          %v2055 = vmul.f32 %v1966, 1.442695
          %v2056 = vpow.pop %v2055
          %v2057 = vmul.f32 %v1967, 1.442695
          %v2058 = vpow.pop %v2057
          %v2059 = vmul.f32 %v1968, 1.442695
          %v2060 = vpow.pop %v2059
          %v2061 = vmul.f32 %v1969, 1.442695
          %v2062 = vpow.pop %v2061
          %v2063 = vmul.f32 %v1970, 1.442695
          %v2064 = vpow.pop %v2063
          %v2065 = vmul.f32 %v1971, 1.442695
          %v2066 = vpow.pop %v2065
          %v2067 = vmul.f32 %v1972, 1.442695
          %v2068 = vpow.pop %v2067
          %v2069 = vsub.f32 %v2006, 1.0
          %v2070 = vsub.f32 %v2008, 1.0
          %v2071 = vsub.f32 %v2010, 1.0
          %v2072 = vsub.f32 %v2012, 1.0
          %v2073 = vsub.f32 %v2014, 1.0
          %v2074 = vsub.f32 %v2016, 1.0
          %v2075 = vsub.f32 %v2018, 1.0
          %v2076 = vsub.f32 %v2020, 1.0
          %v2077 = vsub.f32 %v2022, 1.0
          %v2078 = vsub.f32 %v2024, 1.0
          %v2079 = vsub.f32 %v2026, 1.0
          %v2080 = vsub.f32 %v2028, 1.0
          %v2081 = vsub.f32 %v2030, 1.0
          %v2082 = vsub.f32 %v2032, 1.0
          %v2083 = vsub.f32 %v2034, 1.0
          %v2084 = vsub.f32 %v2036, 1.0
          %v2085 = vsub.f32 %v2038, 1.0
          %v2086 = vsub.f32 %v2040, 1.0
          %v2087 = vsub.f32 %v2042, 1.0
          %v2088 = vsub.f32 %v2044, 1.0
          %v2089 = vsub.f32 %v2046, 1.0
          %v2090 = vsub.f32 %v2048, 1.0
          %v2091 = vsub.f32 %v2050, 1.0
          %v2092 = vsub.f32 %v2052, 1.0
          %v2093 = vsub.f32 %v2054, 1.0
          %v2094 = vsub.f32 %v2056, 1.0
          %v2095 = vsub.f32 %v2058, 1.0
          %v2096 = vsub.f32 %v2060, 1.0
          %v2097 = vsub.f32 %v2062, 1.0
          %v2098 = vsub.f32 %v2064, 1.0
          %v2099 = vsub.f32 %v2066, 1.0
          %v2100 = vsub.f32 %v2068, 1.0
          %v2101 = vsel %vm1973, %v1941, %v2069
          %v2102 = vsel %vm1974, %v1942, %v2070
          %v2103 = vsel %vm1975, %v1943, %v2071
          %v2104 = vsel %vm1976, %v1944, %v2072
          %v2105 = vsel %vm1977, %v1945, %v2073
          %v2106 = vsel %vm1978, %v1946, %v2074
          %v2107 = vsel %vm1979, %v1947, %v2075
          %v2108 = vsel %vm1980, %v1948, %v2076
          %v2109 = vsel %vm1981, %v1949, %v2077
          %v2110 = vsel %vm1982, %v1950, %v2078
          %v2111 = vsel %vm1983, %v1951, %v2079
          %v2112 = vsel %vm1984, %v1952, %v2080
          %v2113 = vsel %vm1985, %v1953, %v2081
          %v2114 = vsel %vm1986, %v1954, %v2082
          %v2115 = vsel %vm1987, %v1955, %v2083
          %v2116 = vsel %vm1988, %v1956, %v2084
          %v2117 = vsel %vm1989, %v1957, %v2085
          %v2118 = vsel %vm1990, %v1958, %v2086
          %v2119 = vsel %vm1991, %v1959, %v2087
          %v2120 = vsel %vm1992, %v1960, %v2088
          %v2121 = vsel %vm1993, %v1961, %v2089
          %v2122 = vsel %vm1994, %v1962, %v2090
          %v2123 = vsel %vm1995, %v1963, %v2091
          %v2124 = vsel %vm1996, %v1964, %v2092
          %v2125 = vsel %vm1997, %v1965, %v2093
          %v2126 = vsel %vm1998, %v1966, %v2094
          %v2127 = vsel %vm1999, %v1967, %v2095
          %v2128 = vsel %vm2000, %v1968, %v2096
          %v2129 = vsel %vm2001, %v1969, %v2097
          %v2130 = vsel %vm2002, %v1970, %v2098
          %v2131 = vsel %vm2003, %v1971, %v2099
          %v2132 = vsel %vm2004, %v1972, %v2100
          %v2133 = vld [vmem:[%s6] sm:$0xff]
          %v2134 = vld [vmem:[%s6 + $0x8] sm:$0xff]
          %v2135 = vld [vmem:[%s6 + $0x10] sm:$0xff]
          %v2136 = vld [vmem:[%s6 + $0x18] sm:$0xff]
          %v2137 = vld [vmem:[%s6 + $0x20] sm:$0xff]
          %v2138 = vld [vmem:[%s6 + $0x28] sm:$0xff]
          %v2139 = vld [vmem:[%s6 + $0x30] sm:$0xff]
          %v2140 = vld [vmem:[%s6 + $0x38] sm:$0xff]
          %v2141 = vld [vmem:[%s7] sm:$0x1]
          %v2143 = vlaneseq
          %v2144 = vshrl.u32 %v2143, 7
          %v2145 = vsub.s32 0, %v2144
          %v2146 = vrot.slane %v2141, %v2145
          %v2149 = vsel %vm1353, %v2101, 0
          %v2152 = vsel %vm1353, %v2102, 0
          %v2155 = vsel %vm1353, %v2103, 0
          %v2158 = vsel %vm1353, %v2104, 0
          %v2161 = vsel %vm1353, %v2105, 0
          %v2164 = vsel %vm1353, %v2106, 0
          %v2167 = vsel %vm1353, %v2107, 0
          %v2170 = vsel %vm1353, %v2108, 0
          %v2173 = vsel %vm1353, %v2109, 0
          %v2176 = vsel %vm1353, %v2110, 0
          %v2179 = vsel %vm1353, %v2111, 0
          %v2182 = vsel %vm1353, %v2112, 0
          %v2185 = vsel %vm1353, %v2113, 0
          %v2188 = vsel %vm1353, %v2114, 0
          %v2191 = vsel %vm1353, %v2115, 0
          %v2194 = vsel %vm1353, %v2116, 0
          %v2197 = vsel %vm1353, %v2117, 0
          %v2200 = vsel %vm1353, %v2118, 0
          %v2203 = vsel %vm1353, %v2119, 0
          %v2206 = vsel %vm1353, %v2120, 0
          %v2209 = vsel %vm1353, %v2121, 0
          %v2212 = vsel %vm1353, %v2122, 0
          %v2215 = vsel %vm1353, %v2123, 0
          %v2218 = vsel %vm1353, %v2124, 0
          %v2221 = vsel %vm1353, %v2125, 0
          %v2224 = vsel %vm1353, %v2126, 0
          %v2227 = vsel %vm1353, %v2127, 0
          %v2230 = vsel %vm1353, %v2128, 0
          %v2233 = vsel %vm1353, %v2129, 0
          %v2236 = vsel %vm1353, %v2130, 0
          %v2239 = vsel %vm1353, %v2131, 0
          %v2242 = vsel %vm1353, %v2132, 0
          %2244 = vmatprep.subr.mxu0 0.0
          %2245 = vmatpush1.msra.mxu0 0.0
          %2246 = vmatprep.subr.mxu0 0.0
          %2247 = vmatpush1.msra.mxu0 0.0
          %2248 = vmatprep.subr.mxu0 0.0
          %2249 = vmatpush1.msra.mxu0 0.0
          %2250 = vmatprep.subr.mxu0 0.0
          %2251 = vmatpush1.msra.mxu0 0.0
          %2252 = vmatprep.subr.mxu0 0.0
          %2253 = vmatpush1.msra.mxu0 0.0
          %2254 = vmatprep.subr.mxu0 0.0
          %2255 = vmatpush1.msra.mxu0 0.0
          %2256 = vmatprep.subr.mxu0 0.0
          %2257 = vmatpush1.msra.mxu0 0.0
          %2258 = vmatprep.subr.mxu0 0.0
          %2259 = vmatpush1.msra.mxu0 0.0
          %2260 = vmatprep.subr.mxu0 0.0
          %2261 = vmatpush1.msra.mxu0 %v2140
          %2262 = vmatprep.subr.mxu0 0.0
          %2263 = vmatpush1.msra.mxu0 %v2139
          %2264 = vmatprep.subr.mxu0 0.0
          %2265 = vmatpush1.msra.mxu0 %v2138
          %2266 = vmatprep.subr.mxu0 0.0
          %2267 = vmatpush1.msra.mxu0 %v2137
          %2268 = vmatprep.subr.mxu0 0.0
          %2269 = vmatpush1.msra.mxu0 %v2136
          %2270 = vmatprep.subr.mxu0 0.0
          %2271 = vmatpush1.msra.mxu0 %v2135
          %2272 = vmatprep.subr.mxu0 0.0
          %2273 = vmatpush1.msra.mxu0 %v2134
          %2274 = vmatprep.subr.mxu0 0.0
          %2275 = vmatpush1.msra.mxu0 %v2133
          %2276 = vmatprep.subr.mxu0 0.0
          %2277 = vmatpush2.msra.mxu0 0.0
          %2278 = vmatprep.subr.mxu0 0.0
          %2279 = vmatpush2.msra.mxu0 0.0
          %2280 = vmatprep.subr.mxu0 0.0
          %2281 = vmatpush2.msra.mxu0 0.0
          %2282 = vmatprep.subr.mxu0 0.0
          %2283 = vmatpush2.msra.mxu0 0.0
          %2284 = vmatprep.subr.mxu0 0.0
          %2285 = vmatpush2.msra.mxu0 0.0
          %2286 = vmatprep.subr.mxu0 0.0
          %2287 = vmatpush2.msra.mxu0 0.0
          %2288 = vmatprep.subr.mxu0 0.0
          %2289 = vmatpush2.msra.mxu0 0.0
          %2290 = vmatprep.subr.mxu0 0.0
          %2291 = vmatpush2.msra.mxu0 0.0
          %2292 = vmatprep.subr.mxu0 0.0
          %2293 = vmatpush2.msra.mxu0 0.0
          %2294 = vmatprep.subr.mxu0 0.0
          %2295 = vmatpush2.msra.mxu0 0.0
          %2296 = vmatprep.subr.mxu0 0.0
          %2297 = vmatpush2.msra.mxu0 0.0
          %2298 = vmatprep.subr.mxu0 0.0
          %2299 = vmatpush2.msra.mxu0 0.0
          %2300 = vmatprep.subr.mxu0 0.0
          %2301 = vmatpush2.msra.mxu0 0.0
          %2302 = vmatprep.subr.mxu0 0.0
          %2303 = vmatpush2.msra.mxu0 0.0
          %2304 = vmatprep.subr.mxu0 0.0
          %2305 = vmatpush2.msra.mxu0 0.0
          %2306 = vmatprep.subr.mxu0 0.0
          %2307 = vmatpush2.msra.mxu0 0.0
          %2308 = vmatprep.mubr.f32.mxu0 0.0
          %2309 = vmatmul.mubr.f32.gmra.mxu0 %v2149
          %v2310 = vpop.f32.mrf.mxu0
          %v2311 = vadd.f32 %v2146, %v2310
          %v2312 = vpop.f32.mrf.mxu0
          %2313 = vmatprep.mubr.f32.mxu0 0.0
          %2314 = vmatmul.mubr.f32.gmra.mxu0 %v2152
          %v2315 = vpop.f32.mrf.mxu0
          %v2316 = vadd.f32 %v2146, %v2315
          %v2317 = vpop.f32.mrf.mxu0
          %2318 = vmatprep.mubr.f32.mxu0 0.0
          %2319 = vmatmul.mubr.f32.gmra.mxu0 %v2155
          %v2320 = vpop.f32.mrf.mxu0
          %v2321 = vadd.f32 %v2146, %v2320
          %v2322 = vpop.f32.mrf.mxu0
          %2323 = vmatprep.mubr.f32.mxu0 0.0
          %2324 = vmatmul.mubr.f32.gmra.mxu0 %v2158
          %v2325 = vpop.f32.mrf.mxu0
          %v2326 = vadd.f32 %v2146, %v2325
          %v2327 = vpop.f32.mrf.mxu0
          %2328 = vmatprep.mubr.f32.mxu0 0.0
          %2329 = vmatmul.mubr.f32.gmra.mxu0 %v2161
          %v2330 = vpop.f32.mrf.mxu0
          %v2331 = vadd.f32 %v2146, %v2330
          %v2332 = vpop.f32.mrf.mxu0
          %2333 = vmatprep.mubr.f32.mxu0 0.0
          %2334 = vmatmul.mubr.f32.gmra.mxu0 %v2164
          %v2335 = vpop.f32.mrf.mxu0
          %v2336 = vadd.f32 %v2146, %v2335
          %v2337 = vpop.f32.mrf.mxu0
          %2338 = vmatprep.mubr.f32.mxu0 0.0
          %2339 = vmatmul.mubr.f32.gmra.mxu0 %v2167
          %v2340 = vpop.f32.mrf.mxu0
          %v2341 = vadd.f32 %v2146, %v2340
          %v2342 = vpop.f32.mrf.mxu0
          %2343 = vmatprep.mubr.f32.mxu0 0.0
          %2344 = vmatmul.mubr.f32.gmra.mxu0 %v2170
          %v2345 = vpop.f32.mrf.mxu0
          %v2346 = vadd.f32 %v2146, %v2345
          %v2347 = vpop.f32.mrf.mxu0
          %2348 = vmatprep.mubr.f32.mxu0 0.0
          %2349 = vmatmul.mubr.f32.gmra.mxu0 %v2173
          %v2350 = vpop.f32.mrf.mxu0
          %v2351 = vadd.f32 %v2146, %v2350
          %v2352 = vpop.f32.mrf.mxu0
          %2353 = vmatprep.mubr.f32.mxu0 0.0
          %2354 = vmatmul.mubr.f32.gmra.mxu0 %v2176
          %v2355 = vpop.f32.mrf.mxu0
          %v2356 = vadd.f32 %v2146, %v2355
          %v2357 = vpop.f32.mrf.mxu0
          %2358 = vmatprep.mubr.f32.mxu0 0.0
          %2359 = vmatmul.mubr.f32.gmra.mxu0 %v2179
          %v2360 = vpop.f32.mrf.mxu0
          %v2361 = vadd.f32 %v2146, %v2360
          %v2362 = vpop.f32.mrf.mxu0
          %2363 = vmatprep.mubr.f32.mxu0 0.0
          %2364 = vmatmul.mubr.f32.gmra.mxu0 %v2182
          %v2365 = vpop.f32.mrf.mxu0
          %v2366 = vadd.f32 %v2146, %v2365
          %v2367 = vpop.f32.mrf.mxu0
          %2368 = vmatprep.mubr.f32.mxu0 0.0
          %2369 = vmatmul.mubr.f32.gmra.mxu0 %v2185
          %v2370 = vpop.f32.mrf.mxu0
          %v2371 = vadd.f32 %v2146, %v2370
          %v2372 = vpop.f32.mrf.mxu0
          %2373 = vmatprep.mubr.f32.mxu0 0.0
          %2374 = vmatmul.mubr.f32.gmra.mxu0 %v2188
          %v2375 = vpop.f32.mrf.mxu0
          %v2376 = vadd.f32 %v2146, %v2375
          %v2377 = vpop.f32.mrf.mxu0
          %2378 = vmatprep.mubr.f32.mxu0 0.0
          %2379 = vmatmul.mubr.f32.gmra.mxu0 %v2191
          %v2380 = vpop.f32.mrf.mxu0
          %v2381 = vadd.f32 %v2146, %v2380
          %v2382 = vpop.f32.mrf.mxu0
          %2383 = vmatprep.mubr.f32.mxu0 0.0
          %2384 = vmatmul.mubr.f32.gmra.mxu0 %v2194
          %v2385 = vpop.f32.mrf.mxu0
          %v2386 = vadd.f32 %v2146, %v2385
          %v2387 = vpop.f32.mrf.mxu0
          %2388 = vmatprep.mubr.f32.mxu0 0.0
          %2389 = vmatmul.mubr.f32.gmra.mxu0 %v2197
          %v2390 = vpop.f32.mrf.mxu0
          %v2391 = vadd.f32 %v2146, %v2390
          %v2392 = vpop.f32.mrf.mxu0
          %2393 = vmatprep.mubr.f32.mxu0 0.0
          %2394 = vmatmul.mubr.f32.gmra.mxu0 %v2200
          %v2395 = vpop.f32.mrf.mxu0
          %v2396 = vadd.f32 %v2146, %v2395
          %v2397 = vpop.f32.mrf.mxu0
          %2398 = vmatprep.mubr.f32.mxu0 0.0
          %2399 = vmatmul.mubr.f32.gmra.mxu0 %v2203
          %v2400 = vpop.f32.mrf.mxu0
          %v2401 = vadd.f32 %v2146, %v2400
          %v2402 = vpop.f32.mrf.mxu0
          %2403 = vmatprep.mubr.f32.mxu0 0.0
          %2404 = vmatmul.mubr.f32.gmra.mxu0 %v2206
          %v2405 = vpop.f32.mrf.mxu0
          %v2406 = vadd.f32 %v2146, %v2405
          %v2407 = vpop.f32.mrf.mxu0
          %2408 = vmatprep.mubr.f32.mxu0 0.0
          %2409 = vmatmul.mubr.f32.gmra.mxu0 %v2209
          %v2410 = vpop.f32.mrf.mxu0
          %v2411 = vadd.f32 %v2146, %v2410
          %v2412 = vpop.f32.mrf.mxu0
          %2413 = vmatprep.mubr.f32.mxu0 0.0
          %2414 = vmatmul.mubr.f32.gmra.mxu0 %v2212
          %v2415 = vpop.f32.mrf.mxu0
          %v2416 = vadd.f32 %v2146, %v2415
          %v2417 = vpop.f32.mrf.mxu0
          %2418 = vmatprep.mubr.f32.mxu0 0.0
          %2419 = vmatmul.mubr.f32.gmra.mxu0 %v2215
          %v2420 = vpop.f32.mrf.mxu0
          %v2421 = vadd.f32 %v2146, %v2420
          %v2422 = vpop.f32.mrf.mxu0
          %2423 = vmatprep.mubr.f32.mxu0 0.0
          %2424 = vmatmul.mubr.f32.gmra.mxu0 %v2218
          %v2425 = vpop.f32.mrf.mxu0
          %v2426 = vadd.f32 %v2146, %v2425
          %v2427 = vpop.f32.mrf.mxu0
          %2428 = vmatprep.mubr.f32.mxu0 0.0
          %2429 = vmatmul.mubr.f32.gmra.mxu0 %v2221
          %v2430 = vpop.f32.mrf.mxu0
          %v2431 = vadd.f32 %v2146, %v2430
          %v2432 = vpop.f32.mrf.mxu0
          %2433 = vmatprep.mubr.f32.mxu0 0.0
          %2434 = vmatmul.mubr.f32.gmra.mxu0 %v2224
          %v2435 = vpop.f32.mrf.mxu0
          %v2436 = vadd.f32 %v2146, %v2435
          %v2437 = vpop.f32.mrf.mxu0
          %2438 = vmatprep.mubr.f32.mxu0 0.0
          %2439 = vmatmul.mubr.f32.gmra.mxu0 %v2227
          %v2440 = vpop.f32.mrf.mxu0
          %v2441 = vadd.f32 %v2146, %v2440
          %v2442 = vpop.f32.mrf.mxu0
          %2443 = vmatprep.mubr.f32.mxu0 0.0
          %2444 = vmatmul.mubr.f32.gmra.mxu0 %v2230
          %v2445 = vpop.f32.mrf.mxu0
          %v2446 = vadd.f32 %v2146, %v2445
          %v2447 = vpop.f32.mrf.mxu0
          %2448 = vmatprep.mubr.f32.mxu0 0.0
          %2449 = vmatmul.mubr.f32.gmra.mxu0 %v2233
          %v2450 = vpop.f32.mrf.mxu0
          %v2451 = vadd.f32 %v2146, %v2450
          %v2452 = vpop.f32.mrf.mxu0
          %2453 = vmatprep.mubr.f32.mxu0 0.0
          %2454 = vmatmul.mubr.f32.gmra.mxu0 %v2236
          %v2455 = vpop.f32.mrf.mxu0
          %v2456 = vadd.f32 %v2146, %v2455
          %v2457 = vpop.f32.mrf.mxu0
          %2458 = vmatprep.mubr.f32.mxu0 0.0
          %2459 = vmatmul.mubr.f32.gmra.mxu0 %v2239
          %v2460 = vpop.f32.mrf.mxu0
          %v2461 = vadd.f32 %v2146, %v2460
          %v2462 = vpop.f32.mrf.mxu0
          %2463 = vmatprep.mubr.f32.mxu0 0.0
          %2464 = vmatmul.mubr.f32.gmra.mxu0 %v2242
          %v2465 = vpop.f32.mrf.mxu0
          %v2466 = vadd.f32 %v2146, %v2465
          %v2467 = vpop.f32.mrf.mxu0
          %2468 = vdwg.mxu0
          %vm2469 = vcmp.gt.f32.partialorder %v2311, 0.0
          %vm2470 = vcmp.gt.f32.partialorder %v2316, 0.0
          %vm2471 = vcmp.gt.f32.partialorder %v2321, 0.0
          %vm2472 = vcmp.gt.f32.partialorder %v2326, 0.0
          %vm2473 = vcmp.gt.f32.partialorder %v2331, 0.0
          %vm2474 = vcmp.gt.f32.partialorder %v2336, 0.0
          %vm2475 = vcmp.gt.f32.partialorder %v2341, 0.0
          %vm2476 = vcmp.gt.f32.partialorder %v2346, 0.0
          %vm2477 = vcmp.gt.f32.partialorder %v2351, 0.0
          %vm2478 = vcmp.gt.f32.partialorder %v2356, 0.0
          %vm2479 = vcmp.gt.f32.partialorder %v2361, 0.0
          %vm2480 = vcmp.gt.f32.partialorder %v2366, 0.0
          %vm2481 = vcmp.gt.f32.partialorder %v2371, 0.0
          %vm2482 = vcmp.gt.f32.partialorder %v2376, 0.0
          %vm2483 = vcmp.gt.f32.partialorder %v2381, 0.0
          %vm2484 = vcmp.gt.f32.partialorder %v2386, 0.0
          %vm2485 = vcmp.gt.f32.partialorder %v2391, 0.0
          %vm2486 = vcmp.gt.f32.partialorder %v2396, 0.0
          %vm2487 = vcmp.gt.f32.partialorder %v2401, 0.0
          %vm2488 = vcmp.gt.f32.partialorder %v2406, 0.0
          %vm2489 = vcmp.gt.f32.partialorder %v2411, 0.0
          %vm2490 = vcmp.gt.f32.partialorder %v2416, 0.0
          %vm2491 = vcmp.gt.f32.partialorder %v2421, 0.0
          %vm2492 = vcmp.gt.f32.partialorder %v2426, 0.0
          %vm2493 = vcmp.gt.f32.partialorder %v2431, 0.0
          %vm2494 = vcmp.gt.f32.partialorder %v2436, 0.0
          %vm2495 = vcmp.gt.f32.partialorder %v2441, 0.0
          %vm2496 = vcmp.gt.f32.partialorder %v2446, 0.0
          %vm2497 = vcmp.gt.f32.partialorder %v2451, 0.0
          %vm2498 = vcmp.gt.f32.partialorder %v2456, 0.0
          %vm2499 = vcmp.gt.f32.partialorder %v2461, 0.0
          %vm2500 = vcmp.gt.f32.partialorder %v2466, 0.0
          %v2501 = vmul.f32 %v2311, 1.442695
          %v2502 = vpow.pop %v2501
          %v2503 = vmul.f32 %v2316, 1.442695
          %v2504 = vpow.pop %v2503
          %v2505 = vmul.f32 %v2321, 1.442695
          %v2506 = vpow.pop %v2505
          %v2507 = vmul.f32 %v2326, 1.442695
          %v2508 = vpow.pop %v2507
          %v2509 = vmul.f32 %v2331, 1.442695
          %v2510 = vpow.pop %v2509
          %v2511 = vmul.f32 %v2336, 1.442695
          %v2512 = vpow.pop %v2511
          %v2513 = vmul.f32 %v2341, 1.442695
          %v2514 = vpow.pop %v2513
          %v2515 = vmul.f32 %v2346, 1.442695
          %v2516 = vpow.pop %v2515
          %v2517 = vmul.f32 %v2351, 1.442695
          %v2518 = vpow.pop %v2517
          %v2519 = vmul.f32 %v2356, 1.442695
          %v2520 = vpow.pop %v2519
          %v2521 = vmul.f32 %v2361, 1.442695
          %v2522 = vpow.pop %v2521
          %v2523 = vmul.f32 %v2366, 1.442695
          %v2524 = vpow.pop %v2523
          %v2525 = vmul.f32 %v2371, 1.442695
          %v2526 = vpow.pop %v2525
          %v2527 = vmul.f32 %v2376, 1.442695
          %v2528 = vpow.pop %v2527
          %v2529 = vmul.f32 %v2381, 1.442695
          %v2530 = vpow.pop %v2529
          %v2531 = vmul.f32 %v2386, 1.442695
          %v2532 = vpow.pop %v2531
          %v2533 = vmul.f32 %v2391, 1.442695
          %v2534 = vpow.pop %v2533
          %v2535 = vmul.f32 %v2396, 1.442695
          %v2536 = vpow.pop %v2535
          %v2537 = vmul.f32 %v2401, 1.442695
          %v2538 = vpow.pop %v2537
          %v2539 = vmul.f32 %v2406, 1.442695
          %v2540 = vpow.pop %v2539
          %v2541 = vmul.f32 %v2411, 1.442695
          %v2542 = vpow.pop %v2541
          %v2543 = vmul.f32 %v2416, 1.442695
          %v2544 = vpow.pop %v2543
          %v2545 = vmul.f32 %v2421, 1.442695
          %v2546 = vpow.pop %v2545
          %v2547 = vmul.f32 %v2426, 1.442695
          %v2548 = vpow.pop %v2547
          %v2549 = vmul.f32 %v2431, 1.442695
          %v2550 = vpow.pop %v2549
          %v2551 = vmul.f32 %v2436, 1.442695
          %v2552 = vpow.pop %v2551
          %v2553 = vmul.f32 %v2441, 1.442695
          %v2554 = vpow.pop %v2553
          %v2555 = vmul.f32 %v2446, 1.442695
          %v2556 = vpow.pop %v2555
          %v2557 = vmul.f32 %v2451, 1.442695
          %v2558 = vpow.pop %v2557
          %v2559 = vmul.f32 %v2456, 1.442695
          %v2560 = vpow.pop %v2559
          %v2561 = vmul.f32 %v2461, 1.442695
          %v2562 = vpow.pop %v2561
          %v2563 = vmul.f32 %v2466, 1.442695
          %v2564 = vpow.pop %v2563
          %v2565 = vsub.f32 %v2502, 1.0
          %v2566 = vsub.f32 %v2504, 1.0
          %v2567 = vsub.f32 %v2506, 1.0
          %v2568 = vsub.f32 %v2508, 1.0
          %v2569 = vsub.f32 %v2510, 1.0
          %v2570 = vsub.f32 %v2512, 1.0
          %v2571 = vsub.f32 %v2514, 1.0
          %v2572 = vsub.f32 %v2516, 1.0
          %v2573 = vsub.f32 %v2518, 1.0
          %v2574 = vsub.f32 %v2520, 1.0
          %v2575 = vsub.f32 %v2522, 1.0
          %v2576 = vsub.f32 %v2524, 1.0
          %v2577 = vsub.f32 %v2526, 1.0
          %v2578 = vsub.f32 %v2528, 1.0
          %v2579 = vsub.f32 %v2530, 1.0
          %v2580 = vsub.f32 %v2532, 1.0
          %v2581 = vsub.f32 %v2534, 1.0
          %v2582 = vsub.f32 %v2536, 1.0
          %v2583 = vsub.f32 %v2538, 1.0
          %v2584 = vsub.f32 %v2540, 1.0
          %v2585 = vsub.f32 %v2542, 1.0
          %v2586 = vsub.f32 %v2544, 1.0
          %v2587 = vsub.f32 %v2546, 1.0
          %v2588 = vsub.f32 %v2548, 1.0
          %v2589 = vsub.f32 %v2550, 1.0
          %v2590 = vsub.f32 %v2552, 1.0
          %v2591 = vsub.f32 %v2554, 1.0
          %v2592 = vsub.f32 %v2556, 1.0
          %v2593 = vsub.f32 %v2558, 1.0
          %v2594 = vsub.f32 %v2560, 1.0
          %v2595 = vsub.f32 %v2562, 1.0
          %v2596 = vsub.f32 %v2564, 1.0
          %v2597 = vsel %vm2469, %v2311, %v2565
          %v2598 = vsel %vm2470, %v2316, %v2566
          %v2599 = vsel %vm2471, %v2321, %v2567
          %v2600 = vsel %vm2472, %v2326, %v2568
          %v2601 = vsel %vm2473, %v2331, %v2569
          %v2602 = vsel %vm2474, %v2336, %v2570
          %v2603 = vsel %vm2475, %v2341, %v2571
          %v2604 = vsel %vm2476, %v2346, %v2572
          %v2605 = vsel %vm2477, %v2351, %v2573
          %v2606 = vsel %vm2478, %v2356, %v2574
          %v2607 = vsel %vm2479, %v2361, %v2575
          %v2608 = vsel %vm2480, %v2366, %v2576
          %v2609 = vsel %vm2481, %v2371, %v2577
          %v2610 = vsel %vm2482, %v2376, %v2578
          %v2611 = vsel %vm2483, %v2381, %v2579
          %v2612 = vsel %vm2484, %v2386, %v2580
          %v2613 = vsel %vm2485, %v2391, %v2581
          %v2614 = vsel %vm2486, %v2396, %v2582
          %v2615 = vsel %vm2487, %v2401, %v2583
          %v2616 = vsel %vm2488, %v2406, %v2584
          %v2617 = vsel %vm2489, %v2411, %v2585
          %v2618 = vsel %vm2490, %v2416, %v2586
          %v2619 = vsel %vm2491, %v2421, %v2587
          %v2620 = vsel %vm2492, %v2426, %v2588
          %v2621 = vsel %vm2493, %v2431, %v2589
          %v2622 = vsel %vm2494, %v2436, %v2590
          %v2623 = vsel %vm2495, %v2441, %v2591
          %v2624 = vsel %vm2496, %v2446, %v2592
          %v2625 = vsel %vm2497, %v2451, %v2593
          %v2626 = vsel %vm2498, %v2456, %v2594
          %v2627 = vsel %vm2499, %v2461, %v2595
          %v2628 = vsel %vm2500, %v2466, %v2596
          %v2629 = vld [vmem:[%s8] sm:$0xff]
          %v2630 = vld [vmem:[%s8 + $0x8] sm:$0xff]
          %v2631 = vld [vmem:[%s8 + $0x10] sm:$0xff]
          %v2632 = vld [vmem:[%s8 + $0x18] sm:$0xff]
          %v2633 = vld [vmem:[%s9] sm:$0x1]
          %v2635 = vlaneseq
          %v2636 = vshrl.u32 %v2635, 7
          %v2637 = vsub.s32 0, %v2636
          %v2638 = vrot.slane %v2633, %v2637
          %vm2640 = vcmask 261120
          %v2642 = vsel %vm2640, %v2597, 0
          %v2645 = vsel %vm2640, %v2598, 0
          %v2648 = vsel %vm2640, %v2599, 0
          %v2651 = vsel %vm2640, %v2600, 0
          %v2654 = vsel %vm2640, %v2601, 0
          %v2657 = vsel %vm2640, %v2602, 0
          %v2660 = vsel %vm2640, %v2603, 0
          %v2663 = vsel %vm2640, %v2604, 0
          %v2666 = vsel %vm2640, %v2605, 0
          %v2669 = vsel %vm2640, %v2606, 0
          %v2672 = vsel %vm2640, %v2607, 0
          %v2675 = vsel %vm2640, %v2608, 0
          %v2678 = vsel %vm2640, %v2609, 0
          %v2681 = vsel %vm2640, %v2610, 0
          %v2684 = vsel %vm2640, %v2611, 0
          %v2687 = vsel %vm2640, %v2612, 0
          %v2690 = vsel %vm2640, %v2613, 0
          %v2693 = vsel %vm2640, %v2614, 0
          %v2696 = vsel %vm2640, %v2615, 0
          %v2699 = vsel %vm2640, %v2616, 0
          %v2702 = vsel %vm2640, %v2617, 0
          %v2705 = vsel %vm2640, %v2618, 0
          %v2708 = vsel %vm2640, %v2619, 0
          %v2711 = vsel %vm2640, %v2620, 0
          %v2714 = vsel %vm2640, %v2621, 0
          %v2717 = vsel %vm2640, %v2622, 0
          %v2720 = vsel %vm2640, %v2623, 0
          %v2723 = vsel %vm2640, %v2624, 0
          %v2726 = vsel %vm2640, %v2625, 0
          %v2729 = vsel %vm2640, %v2626, 0
          %v2732 = vsel %vm2640, %v2627, 0
          %v2735 = vsel %vm2640, %v2628, 0
          %2737 = vmatprep.subr.mxu0 0.0
          %2738 = vmatpush1.msra.mxu0 0.0
          %2739 = vmatprep.subr.mxu0 0.0
          %2740 = vmatpush1.msra.mxu0 0.0
          %2741 = vmatprep.subr.mxu0 0.0
          %2742 = vmatpush1.msra.mxu0 0.0
          %2743 = vmatprep.subr.mxu0 0.0
          %2744 = vmatpush1.msra.mxu0 0.0
          %2745 = vmatprep.subr.mxu0 0.0
          %2746 = vmatpush1.msra.mxu0 0.0
          %2747 = vmatprep.subr.mxu0 0.0
          %2748 = vmatpush1.msra.mxu0 0.0
          %2749 = vmatprep.subr.mxu0 0.0
          %2750 = vmatpush1.msra.mxu0 0.0
          %2751 = vmatprep.subr.mxu0 0.0
          %2752 = vmatpush1.msra.mxu0 0.0
          %2753 = vmatprep.subr.mxu0 0.0
          %2754 = vmatpush1.msra.mxu0 0.0
          %2755 = vmatprep.subr.mxu0 0.0
          %2756 = vmatpush1.msra.mxu0 0.0
          %2757 = vmatprep.subr.mxu0 0.0
          %2758 = vmatpush1.msra.mxu0 0.0
          %2759 = vmatprep.subr.mxu0 0.0
          %2760 = vmatpush1.msra.mxu0 0.0
          %2761 = vmatprep.subr.mxu0 0.0
          %2762 = vmatpush1.msra.mxu0 %v2632
          %2763 = vmatprep.subr.mxu0 0.0
          %2764 = vmatpush1.msra.mxu0 %v2631
          %2765 = vmatprep.subr.mxu0 0.0
          %2766 = vmatpush1.msra.mxu0 %v2630
          %2767 = vmatprep.subr.mxu0 0.0
          %2768 = vmatpush1.msra.mxu0 %v2629
          %2769 = vmatprep.subr.mxu0 0.0
          %2770 = vmatpush2.msra.mxu0 0.0
          %2771 = vmatprep.subr.mxu0 0.0
          %2772 = vmatpush2.msra.mxu0 0.0
          %2773 = vmatprep.subr.mxu0 0.0
          %2774 = vmatpush2.msra.mxu0 0.0
          %2775 = vmatprep.subr.mxu0 0.0
          %2776 = vmatpush2.msra.mxu0 0.0
          %2777 = vmatprep.subr.mxu0 0.0
          %2778 = vmatpush2.msra.mxu0 0.0
          %2779 = vmatprep.subr.mxu0 0.0
          %2780 = vmatpush2.msra.mxu0 0.0
          %2781 = vmatprep.subr.mxu0 0.0
          %2782 = vmatpush2.msra.mxu0 0.0
          %2783 = vmatprep.subr.mxu0 0.0
          %2784 = vmatpush2.msra.mxu0 0.0
          %2785 = vmatprep.subr.mxu0 0.0
          %2786 = vmatpush2.msra.mxu0 0.0
          %2787 = vmatprep.subr.mxu0 0.0
          %2788 = vmatpush2.msra.mxu0 0.0
          %2789 = vmatprep.subr.mxu0 0.0
          %2790 = vmatpush2.msra.mxu0 0.0
          %2791 = vmatprep.subr.mxu0 0.0
          %2792 = vmatpush2.msra.mxu0 0.0
          %2793 = vmatprep.subr.mxu0 0.0
          %2794 = vmatpush2.msra.mxu0 0.0
          %2795 = vmatprep.subr.mxu0 0.0
          %2796 = vmatpush2.msra.mxu0 0.0
          %2797 = vmatprep.subr.mxu0 0.0
          %2798 = vmatpush2.msra.mxu0 0.0
          %2799 = vmatprep.subr.mxu0 0.0
          %2800 = vmatpush2.msra.mxu0 0.0
          %2801 = vmatprep.mubr.f32.mxu0 0.0
          %2802 = vmatmul.mubr.f32.gmra.mxu0 %v2642
          %v2803 = vpop.f32.mrf.mxu0
          %v2804 = vadd.f32 %v2638, %v2803
          %v2805 = vpop.f32.mrf.mxu0
          %2806 = vmatprep.mubr.f32.mxu0 0.0
          %2807 = vmatmul.mubr.f32.gmra.mxu0 %v2645
          %v2808 = vpop.f32.mrf.mxu0
          %v2809 = vadd.f32 %v2638, %v2808
          %v2810 = vpop.f32.mrf.mxu0
          %2811 = vmatprep.mubr.f32.mxu0 0.0
          %2812 = vmatmul.mubr.f32.gmra.mxu0 %v2648
          %v2813 = vpop.f32.mrf.mxu0
          %v2814 = vadd.f32 %v2638, %v2813
          %v2815 = vpop.f32.mrf.mxu0
          %2816 = vmatprep.mubr.f32.mxu0 0.0
          %2817 = vmatmul.mubr.f32.gmra.mxu0 %v2651
          %v2818 = vpop.f32.mrf.mxu0
          %v2819 = vadd.f32 %v2638, %v2818
          %v2820 = vpop.f32.mrf.mxu0
          %2821 = vmatprep.mubr.f32.mxu0 0.0
          %2822 = vmatmul.mubr.f32.gmra.mxu0 %v2654
          %v2823 = vpop.f32.mrf.mxu0
          %v2824 = vadd.f32 %v2638, %v2823
          %v2825 = vpop.f32.mrf.mxu0
          %2826 = vmatprep.mubr.f32.mxu0 0.0
          %2827 = vmatmul.mubr.f32.gmra.mxu0 %v2657
          %v2828 = vpop.f32.mrf.mxu0
          %v2829 = vadd.f32 %v2638, %v2828
          %v2830 = vpop.f32.mrf.mxu0
          %2831 = vmatprep.mubr.f32.mxu0 0.0
          %2832 = vmatmul.mubr.f32.gmra.mxu0 %v2660
          %v2833 = vpop.f32.mrf.mxu0
          %v2834 = vadd.f32 %v2638, %v2833
          %v2835 = vpop.f32.mrf.mxu0
          %2836 = vmatprep.mubr.f32.mxu0 0.0
          %2837 = vmatmul.mubr.f32.gmra.mxu0 %v2663
          %v2838 = vpop.f32.mrf.mxu0
          %v2839 = vadd.f32 %v2638, %v2838
          %v2840 = vpop.f32.mrf.mxu0
          %2841 = vmatprep.mubr.f32.mxu0 0.0
          %2842 = vmatmul.mubr.f32.gmra.mxu0 %v2666
          %v2843 = vpop.f32.mrf.mxu0
          %v2844 = vadd.f32 %v2638, %v2843
          %v2845 = vpop.f32.mrf.mxu0
          %2846 = vmatprep.mubr.f32.mxu0 0.0
          %2847 = vmatmul.mubr.f32.gmra.mxu0 %v2669
          %v2848 = vpop.f32.mrf.mxu0
          %v2849 = vadd.f32 %v2638, %v2848
          %v2850 = vpop.f32.mrf.mxu0
          %2851 = vmatprep.mubr.f32.mxu0 0.0
          %2852 = vmatmul.mubr.f32.gmra.mxu0 %v2672
          %v2853 = vpop.f32.mrf.mxu0
          %v2854 = vadd.f32 %v2638, %v2853
          %v2855 = vpop.f32.mrf.mxu0
          %2856 = vmatprep.mubr.f32.mxu0 0.0
          %2857 = vmatmul.mubr.f32.gmra.mxu0 %v2675
          %v2858 = vpop.f32.mrf.mxu0
          %v2859 = vadd.f32 %v2638, %v2858
          %v2860 = vpop.f32.mrf.mxu0
          %2861 = vmatprep.mubr.f32.mxu0 0.0
          %2862 = vmatmul.mubr.f32.gmra.mxu0 %v2678
          %v2863 = vpop.f32.mrf.mxu0
          %v2864 = vadd.f32 %v2638, %v2863
          %v2865 = vpop.f32.mrf.mxu0
          %2866 = vmatprep.mubr.f32.mxu0 0.0
          %2867 = vmatmul.mubr.f32.gmra.mxu0 %v2681
          %v2868 = vpop.f32.mrf.mxu0
          %v2869 = vadd.f32 %v2638, %v2868
          %v2870 = vpop.f32.mrf.mxu0
          %2871 = vmatprep.mubr.f32.mxu0 0.0
          %2872 = vmatmul.mubr.f32.gmra.mxu0 %v2684
          %v2873 = vpop.f32.mrf.mxu0
          %v2874 = vadd.f32 %v2638, %v2873
          %v2875 = vpop.f32.mrf.mxu0
          %2876 = vmatprep.mubr.f32.mxu0 0.0
          %2877 = vmatmul.mubr.f32.gmra.mxu0 %v2687
          %v2878 = vpop.f32.mrf.mxu0
          %v2879 = vadd.f32 %v2638, %v2878
          %v2880 = vpop.f32.mrf.mxu0
          %2881 = vmatprep.mubr.f32.mxu0 0.0
          %2882 = vmatmul.mubr.f32.gmra.mxu0 %v2690
          %v2883 = vpop.f32.mrf.mxu0
          %v2884 = vadd.f32 %v2638, %v2883
          %v2885 = vpop.f32.mrf.mxu0
          %2886 = vmatprep.mubr.f32.mxu0 0.0
          %2887 = vmatmul.mubr.f32.gmra.mxu0 %v2693
          %v2888 = vpop.f32.mrf.mxu0
          %v2889 = vadd.f32 %v2638, %v2888
          %v2890 = vpop.f32.mrf.mxu0
          %2891 = vmatprep.mubr.f32.mxu0 0.0
          %2892 = vmatmul.mubr.f32.gmra.mxu0 %v2696
          %v2893 = vpop.f32.mrf.mxu0
          %v2894 = vadd.f32 %v2638, %v2893
          %v2895 = vpop.f32.mrf.mxu0
          %2896 = vmatprep.mubr.f32.mxu0 0.0
          %2897 = vmatmul.mubr.f32.gmra.mxu0 %v2699
          %v2898 = vpop.f32.mrf.mxu0
          %v2899 = vadd.f32 %v2638, %v2898
          %v2900 = vpop.f32.mrf.mxu0
          %2901 = vmatprep.mubr.f32.mxu0 0.0
          %2902 = vmatmul.mubr.f32.gmra.mxu0 %v2702
          %v2903 = vpop.f32.mrf.mxu0
          %v2904 = vadd.f32 %v2638, %v2903
          %v2905 = vpop.f32.mrf.mxu0
          %2906 = vmatprep.mubr.f32.mxu0 0.0
          %2907 = vmatmul.mubr.f32.gmra.mxu0 %v2705
          %v2908 = vpop.f32.mrf.mxu0
          %v2909 = vadd.f32 %v2638, %v2908
          %v2910 = vpop.f32.mrf.mxu0
          %2911 = vmatprep.mubr.f32.mxu0 0.0
          %2912 = vmatmul.mubr.f32.gmra.mxu0 %v2708
          %v2913 = vpop.f32.mrf.mxu0
          %v2914 = vadd.f32 %v2638, %v2913
          %v2915 = vpop.f32.mrf.mxu0
          %2916 = vmatprep.mubr.f32.mxu0 0.0
          %2917 = vmatmul.mubr.f32.gmra.mxu0 %v2711
          %v2918 = vpop.f32.mrf.mxu0
          %v2919 = vadd.f32 %v2638, %v2918
          %v2920 = vpop.f32.mrf.mxu0
          %2921 = vmatprep.mubr.f32.mxu0 0.0
          %2922 = vmatmul.mubr.f32.gmra.mxu0 %v2714
          %v2923 = vpop.f32.mrf.mxu0
          %v2924 = vadd.f32 %v2638, %v2923
          %v2925 = vpop.f32.mrf.mxu0
          %2926 = vmatprep.mubr.f32.mxu0 0.0
          %2927 = vmatmul.mubr.f32.gmra.mxu0 %v2717
          %v2928 = vpop.f32.mrf.mxu0
          %v2929 = vadd.f32 %v2638, %v2928
          %v2930 = vpop.f32.mrf.mxu0
          %2931 = vmatprep.mubr.f32.mxu0 0.0
          %2932 = vmatmul.mubr.f32.gmra.mxu0 %v2720
          %v2933 = vpop.f32.mrf.mxu0
          %v2934 = vadd.f32 %v2638, %v2933
          %v2935 = vpop.f32.mrf.mxu0
          %2936 = vmatprep.mubr.f32.mxu0 0.0
          %2937 = vmatmul.mubr.f32.gmra.mxu0 %v2723
          %v2938 = vpop.f32.mrf.mxu0
          %v2939 = vadd.f32 %v2638, %v2938
          %v2940 = vpop.f32.mrf.mxu0
          %2941 = vmatprep.mubr.f32.mxu0 0.0
          %2942 = vmatmul.mubr.f32.gmra.mxu0 %v2726
          %v2943 = vpop.f32.mrf.mxu0
          %v2944 = vadd.f32 %v2638, %v2943
          %v2945 = vpop.f32.mrf.mxu0
          %2946 = vmatprep.mubr.f32.mxu0 0.0
          %2947 = vmatmul.mubr.f32.gmra.mxu0 %v2729
          %v2948 = vpop.f32.mrf.mxu0
          %v2949 = vadd.f32 %v2638, %v2948
          %v2950 = vpop.f32.mrf.mxu0
          %2951 = vmatprep.mubr.f32.mxu0 0.0
          %2952 = vmatmul.mubr.f32.gmra.mxu0 %v2732
          %v2953 = vpop.f32.mrf.mxu0
          %v2954 = vadd.f32 %v2638, %v2953
          %v2955 = vpop.f32.mrf.mxu0
          %2956 = vmatprep.mubr.f32.mxu0 0.0
          %2957 = vmatmul.mubr.f32.gmra.mxu0 %v2735
          %v2958 = vpop.f32.mrf.mxu0
          %v2959 = vadd.f32 %v2638, %v2958
          %v2960 = vpop.f32.mrf.mxu0
          %2961 = vdwg.mxu0
          %2962 = vmax.xlane.f32.xlu0 %v2804
          %v2963 = vpop.xlane.xlu0 %2962
          %2964 = vmax.xlane.f32.xlu0 %v2809
          %v2965 = vpop.xlane.xlu0 %2964
          %2966 = vmax.xlane.f32.xlu0 %v2814
          %v2967 = vpop.xlane.xlu0 %2966
          %2968 = vmax.xlane.f32.xlu0 %v2819
          %v2969 = vpop.xlane.xlu0 %2968
          %2970 = vmax.xlane.f32.xlu0 %v2824
          %v2971 = vpop.xlane.xlu0 %2970
          %2972 = vmax.xlane.f32.xlu0 %v2829
          %v2973 = vpop.xlane.xlu0 %2972
          %2974 = vmax.xlane.f32.xlu0 %v2834
          %v2975 = vpop.xlane.xlu0 %2974
          %2976 = vmax.xlane.f32.xlu0 %v2839
          %v2977 = vpop.xlane.xlu0 %2976
          %2978 = vmax.xlane.f32.xlu0 %v2844
          %v2979 = vpop.xlane.xlu0 %2978
          %2980 = vmax.xlane.f32.xlu0 %v2849
          %v2981 = vpop.xlane.xlu0 %2980
          %2982 = vmax.xlane.f32.xlu0 %v2854
          %v2983 = vpop.xlane.xlu0 %2982
          %2984 = vmax.xlane.f32.xlu0 %v2859
          %v2985 = vpop.xlane.xlu0 %2984
          %2986 = vmax.xlane.f32.xlu0 %v2864
          %v2987 = vpop.xlane.xlu0 %2986
          %2988 = vmax.xlane.f32.xlu0 %v2869
          %v2989 = vpop.xlane.xlu0 %2988
          %2990 = vmax.xlane.f32.xlu0 %v2874
          %v2991 = vpop.xlane.xlu0 %2990
          %2992 = vmax.xlane.f32.xlu0 %v2879
          %v2993 = vpop.xlane.xlu0 %2992
          %2994 = vmax.xlane.f32.xlu0 %v2884
          %v2995 = vpop.xlane.xlu0 %2994
          %2996 = vmax.xlane.f32.xlu0 %v2889
          %v2997 = vpop.xlane.xlu0 %2996
          %2998 = vmax.xlane.f32.xlu0 %v2894
          %v2999 = vpop.xlane.xlu0 %2998
          %3000 = vmax.xlane.f32.xlu0 %v2899
          %v3001 = vpop.xlane.xlu0 %3000
          %3002 = vmax.xlane.f32.xlu0 %v2904
          %v3003 = vpop.xlane.xlu0 %3002
          %3004 = vmax.xlane.f32.xlu0 %v2909
          %v3005 = vpop.xlane.xlu0 %3004
          %3006 = vmax.xlane.f32.xlu0 %v2914
          %v3007 = vpop.xlane.xlu0 %3006
          %3008 = vmax.xlane.f32.xlu0 %v2919
          %v3009 = vpop.xlane.xlu0 %3008
          %3010 = vmax.xlane.f32.xlu0 %v2924
          %v3011 = vpop.xlane.xlu0 %3010
          %3012 = vmax.xlane.f32.xlu0 %v2929
          %v3013 = vpop.xlane.xlu0 %3012
          %3014 = vmax.xlane.f32.xlu0 %v2934
          %v3015 = vpop.xlane.xlu0 %3014
          %3016 = vmax.xlane.f32.xlu0 %v2939
          %v3017 = vpop.xlane.xlu0 %3016
          %3018 = vmax.xlane.f32.xlu0 %v2944
          %v3019 = vpop.xlane.xlu0 %3018
          %3020 = vmax.xlane.f32.xlu0 %v2949
          %v3021 = vpop.xlane.xlu0 %3020
          %3022 = vmax.xlane.f32.xlu0 %v2954
          %v3023 = vpop.xlane.xlu0 %3022
          %3024 = vmax.xlane.f32.xlu0 %v2959
          %v3025 = vpop.xlane.xlu0 %3024
          %v3026 = vsub.f32 %v2804, %v2963
          %v3027 = vsub.f32 %v2809, %v2965
          %v3028 = vsub.f32 %v2814, %v2967
          %v3029 = vsub.f32 %v2819, %v2969
          %v3030 = vsub.f32 %v2824, %v2971
          %v3031 = vsub.f32 %v2829, %v2973
          %v3032 = vsub.f32 %v2834, %v2975
          %v3033 = vsub.f32 %v2839, %v2977
          %v3034 = vsub.f32 %v2844, %v2979
          %v3035 = vsub.f32 %v2849, %v2981
          %v3036 = vsub.f32 %v2854, %v2983
          %v3037 = vsub.f32 %v2859, %v2985
          %v3038 = vsub.f32 %v2864, %v2987
          %v3039 = vsub.f32 %v2869, %v2989
          %v3040 = vsub.f32 %v2874, %v2991
          %v3041 = vsub.f32 %v2879, %v2993
          %v3042 = vsub.f32 %v2884, %v2995
          %v3043 = vsub.f32 %v2889, %v2997
          %v3044 = vsub.f32 %v2894, %v2999
          %v3045 = vsub.f32 %v2899, %v3001
          %v3046 = vsub.f32 %v2904, %v3003
          %v3047 = vsub.f32 %v2909, %v3005
          %v3048 = vsub.f32 %v2914, %v3007
          %v3049 = vsub.f32 %v2919, %v3009
          %v3050 = vsub.f32 %v2924, %v3011
          %v3051 = vsub.f32 %v2929, %v3013
          %v3052 = vsub.f32 %v2934, %v3015
          %v3053 = vsub.f32 %v2939, %v3017
          %v3054 = vsub.f32 %v2944, %v3019
          %v3055 = vsub.f32 %v2949, %v3021
          %v3056 = vsub.f32 %v2954, %v3023
          %v3057 = vsub.f32 %v2959, %v3025
          %v3058 = vmul.f32 %v3026, 1.442695
          %v3059 = vpow.pop %v3058
          %v3060 = vmul.f32 %v3027, 1.442695
          %v3061 = vpow.pop %v3060
          %v3062 = vmul.f32 %v3028, 1.442695
          %v3063 = vpow.pop %v3062
          %v3064 = vmul.f32 %v3029, 1.442695
          %v3065 = vpow.pop %v3064
          %v3066 = vmul.f32 %v3030, 1.442695
          %v3067 = vpow.pop %v3066
          %v3068 = vmul.f32 %v3031, 1.442695
          %v3069 = vpow.pop %v3068
          %v3070 = vmul.f32 %v3032, 1.442695
          %v3071 = vpow.pop %v3070
          %v3072 = vmul.f32 %v3033, 1.442695
          %v3073 = vpow.pop %v3072
          %v3074 = vmul.f32 %v3034, 1.442695
          %v3075 = vpow.pop %v3074
          %v3076 = vmul.f32 %v3035, 1.442695
          %v3077 = vpow.pop %v3076
          %v3078 = vmul.f32 %v3036, 1.442695
          %v3079 = vpow.pop %v3078
          %v3080 = vmul.f32 %v3037, 1.442695
          %v3081 = vpow.pop %v3080
          %v3082 = vmul.f32 %v3038, 1.442695
          %v3083 = vpow.pop %v3082
          %v3084 = vmul.f32 %v3039, 1.442695
          %v3085 = vpow.pop %v3084
          %v3086 = vmul.f32 %v3040, 1.442695
          %v3087 = vpow.pop %v3086
          %v3088 = vmul.f32 %v3041, 1.442695
          %v3089 = vpow.pop %v3088
          %v3090 = vmul.f32 %v3042, 1.442695
          %v3091 = vpow.pop %v3090
          %v3092 = vmul.f32 %v3043, 1.442695
          %v3093 = vpow.pop %v3092
          %v3094 = vmul.f32 %v3044, 1.442695
          %v3095 = vpow.pop %v3094
          %v3096 = vmul.f32 %v3045, 1.442695
          %v3097 = vpow.pop %v3096
          %v3098 = vmul.f32 %v3046, 1.442695
          %v3099 = vpow.pop %v3098
          %v3100 = vmul.f32 %v3047, 1.442695
          %v3101 = vpow.pop %v3100
          %v3102 = vmul.f32 %v3048, 1.442695
          %v3103 = vpow.pop %v3102
          %v3104 = vmul.f32 %v3049, 1.442695
          %v3105 = vpow.pop %v3104
          %v3106 = vmul.f32 %v3050, 1.442695
          %v3107 = vpow.pop %v3106
          %v3108 = vmul.f32 %v3051, 1.442695
          %v3109 = vpow.pop %v3108
          %v3110 = vmul.f32 %v3052, 1.442695
          %v3111 = vpow.pop %v3110
          %v3112 = vmul.f32 %v3053, 1.442695
          %v3113 = vpow.pop %v3112
          %v3114 = vmul.f32 %v3054, 1.442695
          %v3115 = vpow.pop %v3114
          %v3116 = vmul.f32 %v3055, 1.442695
          %v3117 = vpow.pop %v3116
          %v3118 = vmul.f32 %v3056, 1.442695
          %v3119 = vpow.pop %v3118
          %v3120 = vmul.f32 %v3057, 1.442695
          %v3121 = vpow.pop %v3120
          %3122 = vadd.xlane.f32.xlu0 %v3059
          %v3123 = vpop.xlane.xlu0 %3122
          %3124 = vadd.xlane.f32.xlu0 %v3061
          %v3125 = vpop.xlane.xlu0 %3124
          %3126 = vadd.xlane.f32.xlu0 %v3063
          %v3127 = vpop.xlane.xlu0 %3126
          %3128 = vadd.xlane.f32.xlu0 %v3065
          %v3129 = vpop.xlane.xlu0 %3128
          %3130 = vadd.xlane.f32.xlu0 %v3067
          %v3131 = vpop.xlane.xlu0 %3130
          %3132 = vadd.xlane.f32.xlu0 %v3069
          %v3133 = vpop.xlane.xlu0 %3132
          %3134 = vadd.xlane.f32.xlu0 %v3071
          %v3135 = vpop.xlane.xlu0 %3134
          %3136 = vadd.xlane.f32.xlu0 %v3073
          %v3137 = vpop.xlane.xlu0 %3136
          %3138 = vadd.xlane.f32.xlu0 %v3075
          %v3139 = vpop.xlane.xlu0 %3138
          %3140 = vadd.xlane.f32.xlu0 %v3077
          %v3141 = vpop.xlane.xlu0 %3140
          %3142 = vadd.xlane.f32.xlu0 %v3079
          %v3143 = vpop.xlane.xlu0 %3142
          %3144 = vadd.xlane.f32.xlu0 %v3081
          %v3145 = vpop.xlane.xlu0 %3144
          %3146 = vadd.xlane.f32.xlu0 %v3083
          %v3147 = vpop.xlane.xlu0 %3146
          %3148 = vadd.xlane.f32.xlu0 %v3085
          %v3149 = vpop.xlane.xlu0 %3148
          %3150 = vadd.xlane.f32.xlu0 %v3087
          %v3151 = vpop.xlane.xlu0 %3150
          %3152 = vadd.xlane.f32.xlu0 %v3089
          %v3153 = vpop.xlane.xlu0 %3152
          %3154 = vadd.xlane.f32.xlu0 %v3091
          %v3155 = vpop.xlane.xlu0 %3154
          %3156 = vadd.xlane.f32.xlu0 %v3093
          %v3157 = vpop.xlane.xlu0 %3156
          %3158 = vadd.xlane.f32.xlu0 %v3095
          %v3159 = vpop.xlane.xlu0 %3158
          %3160 = vadd.xlane.f32.xlu0 %v3097
          %v3161 = vpop.xlane.xlu0 %3160
          %3162 = vadd.xlane.f32.xlu0 %v3099
          %v3163 = vpop.xlane.xlu0 %3162
          %3164 = vadd.xlane.f32.xlu0 %v3101
          %v3165 = vpop.xlane.xlu0 %3164
          %3166 = vadd.xlane.f32.xlu0 %v3103
          %v3167 = vpop.xlane.xlu0 %3166
          %3168 = vadd.xlane.f32.xlu0 %v3105
          %v3169 = vpop.xlane.xlu0 %3168
          %3170 = vadd.xlane.f32.xlu0 %v3107
          %v3171 = vpop.xlane.xlu0 %3170
          %3172 = vadd.xlane.f32.xlu0 %v3109
          %v3173 = vpop.xlane.xlu0 %3172
          %3174 = vadd.xlane.f32.xlu0 %v3111
          %v3175 = vpop.xlane.xlu0 %3174
          %3176 = vadd.xlane.f32.xlu0 %v3113
          %v3177 = vpop.xlane.xlu0 %3176
          %3178 = vadd.xlane.f32.xlu0 %v3115
          %v3179 = vpop.xlane.xlu0 %3178
          %3180 = vadd.xlane.f32.xlu0 %v3117
          %v3181 = vpop.xlane.xlu0 %3180
          %3182 = vadd.xlane.f32.xlu0 %v3119
          %v3183 = vpop.xlane.xlu0 %3182
          %3184 = vadd.xlane.f32.xlu0 %v3121
          %v3185 = vpop.xlane.xlu0 %3184
          %v3186 = vrcp.pop %v3123
          %v3187 = vrcp.pop %v3125
          %v3188 = vrcp.pop %v3127
          %v3189 = vrcp.pop %v3129
          %v3190 = vrcp.pop %v3131
          %v3191 = vrcp.pop %v3133
          %v3192 = vrcp.pop %v3135
          %v3193 = vrcp.pop %v3137
          %v3194 = vrcp.pop %v3139
          %v3195 = vrcp.pop %v3141
          %v3196 = vrcp.pop %v3143
          %v3197 = vrcp.pop %v3145
          %v3198 = vrcp.pop %v3147
          %v3199 = vrcp.pop %v3149
          %v3200 = vrcp.pop %v3151
          %v3201 = vrcp.pop %v3153
          %v3202 = vrcp.pop %v3155
          %v3203 = vrcp.pop %v3157
          %v3204 = vrcp.pop %v3159
          %v3205 = vrcp.pop %v3161
          %v3206 = vrcp.pop %v3163
          %v3207 = vrcp.pop %v3165
          %v3208 = vrcp.pop %v3167
          %v3209 = vrcp.pop %v3169
          %v3210 = vrcp.pop %v3171
          %v3211 = vrcp.pop %v3173
          %v3212 = vrcp.pop %v3175
          %v3213 = vrcp.pop %v3177
          %v3214 = vrcp.pop %v3179
          %v3215 = vrcp.pop %v3181
          %v3216 = vrcp.pop %v3183
          %v3217 = vrcp.pop %v3185
          %v3218 = vmul.f32 %v3059, %v3186
          %v3219 = vmul.f32 %v3061, %v3187
          %v3220 = vmul.f32 %v3063, %v3188
          %v3221 = vmul.f32 %v3065, %v3189
          %v3222 = vmul.f32 %v3067, %v3190
          %v3223 = vmul.f32 %v3069, %v3191
          %v3224 = vmul.f32 %v3071, %v3192
          %v3225 = vmul.f32 %v3073, %v3193
          %v3226 = vmul.f32 %v3075, %v3194
          %v3227 = vmul.f32 %v3077, %v3195
          %v3228 = vmul.f32 %v3079, %v3196
          %v3229 = vmul.f32 %v3081, %v3197
          %v3230 = vmul.f32 %v3083, %v3198
          %v3231 = vmul.f32 %v3085, %v3199
          %v3232 = vmul.f32 %v3087, %v3200
          %v3233 = vmul.f32 %v3089, %v3201
          %v3234 = vmul.f32 %v3091, %v3202
          %v3235 = vmul.f32 %v3093, %v3203
          %v3236 = vmul.f32 %v3095, %v3204
          %v3237 = vmul.f32 %v3097, %v3205
          %v3238 = vmul.f32 %v3099, %v3206
          %v3239 = vmul.f32 %v3101, %v3207
          %v3240 = vmul.f32 %v3103, %v3208
          %v3241 = vmul.f32 %v3105, %v3209
          %v3242 = vmul.f32 %v3107, %v3210
          %v3243 = vmul.f32 %v3109, %v3211
          %v3244 = vmul.f32 %v3111, %v3212
          %v3245 = vmul.f32 %v3113, %v3213
          %v3246 = vmul.f32 %v3115, %v3214
          %v3247 = vmul.f32 %v3117, %v3215
          %v3248 = vmul.f32 %v3119, %v3216
          %v3249 = vmul.f32 %v3121, %v3217
          %3250 = vst [vmem:[%s598] sm:$0xff] %v3218
          %3251 = vst [vmem:[%s598 + $0x8] sm:$0xff] %v3219
          %3252 = vst [vmem:[%s598 + $0x10] sm:$0xff] %v3220
          %3253 = vst [vmem:[%s598 + $0x18] sm:$0xff] %v3221
          %3254 = vst [vmem:[%s598 + $0x20] sm:$0xff] %v3222
          %3255 = vst [vmem:[%s598 + $0x28] sm:$0xff] %v3223
          %3256 = vst [vmem:[%s598 + $0x30] sm:$0xff] %v3224
          %3257 = vst [vmem:[%s598 + $0x38] sm:$0xff] %v3225
          %3258 = vst [vmem:[%s598 + $0x40] sm:$0xff] %v3226
          %3259 = vst [vmem:[%s598 + $0x48] sm:$0xff] %v3227
          %3260 = vst [vmem:[%s598 + $0x50] sm:$0xff] %v3228
          %3261 = vst [vmem:[%s598 + $0x58] sm:$0xff] %v3229
          %3262 = vst [vmem:[%s598 + $0x60] sm:$0xff] %v3230
          %3263 = vst [vmem:[%s598 + $0x68] sm:$0xff] %v3231
          %3264 = vst [vmem:[%s598 + $0x70] sm:$0xff] %v3232
          %3265 = vst [vmem:[%s598 + $0x78] sm:$0xff] %v3233
          %3266 = vst [vmem:[%s598 + $0x80] sm:$0xff] %v3234
          %3267 = vst [vmem:[%s598 + $0x88] sm:$0xff] %v3235
          %3268 = vst [vmem:[%s598 + $0x90] sm:$0xff] %v3236
          %3269 = vst [vmem:[%s598 + $0x98] sm:$0xff] %v3237
          %3270 = vst [vmem:[%s598 + $0xa0] sm:$0xff] %v3238
          %3271 = vst [vmem:[%s598 + $0xa8] sm:$0xff] %v3239
          %3272 = vst [vmem:[%s598 + $0xb0] sm:$0xff] %v3240
          %3273 = vst [vmem:[%s598 + $0xb8] sm:$0xff] %v3241
          %3274 = vst [vmem:[%s598 + $0xc0] sm:$0xff] %v3242
          %3275 = vst [vmem:[%s598 + $0xc8] sm:$0xff] %v3243
          %3276 = vst [vmem:[%s598 + $0xd0] sm:$0xff] %v3244
          %3277 = vst [vmem:[%s598 + $0xd8] sm:$0xff] %v3245
          %3278 = vst [vmem:[%s598 + $0xe0] sm:$0xff] %v3246
          %3279 = vst [vmem:[%s598 + $0xe8] sm:$0xff] %v3247
          %3280 = vst [vmem:[%s598 + $0xf0] sm:$0xff] %v3248
          %3281 = vst [vmem:[%s598 + $0xf8] sm:$0xff] %v3249
        $region106: #{tpu_custom_call.1} parent=93 // pred_fallthru
          _
        %s3282 = sand.u32 %s281, 1
        %s3283 = scalar_lea.sflag [#allocation5], %s3282
        %s3284 = sand.u32 %s281, 1
        %s3285 = smul.addr %s3284, 256
        %s3286 = scalar_lea.vmem [#allocation4], %s3285
        // Predicated region
        $region107: #{tpu_custom_call.1} parent=93 // pred_check
          %p3287 = pneg %p291
        $region108: #{tpu_custom_call.1} parent=93 // pred_check_branch
          %3289 = sbr.rel (%p3287) target = $region110
        $region109: #{tpu_custom_call.1} parent=93 // pred_region
          %s3290 = smul.u32 32, %s28
          %s3292 = ssub.s32 4096, 4096
          %3293 = vsyncadd %s3283, %s3292
          %s3294 = smul.addr %s3290, 128
          %s3295 = scalar_lea.hbm %s10, %s3294
          %s3296 = sshll.u32 %s3286, 4
          %s3297 = int_to_ptr.vmem [resolvable:$true] %s3296
          %3302 = dma.vmem_to_hbm [thread:$0]  %s3297, 4096, %s3295, %s3283, 128, 128, 8
        $region110: #{tpu_custom_call.1} parent=93 // pred_fallthru
          _
      $region94: #{tpu_custom_call.1} parent=5 // pred_fallthru
        _
      %p3303 = scmp.le.s32.totalorder 2, %s19
      // Predicated region
      $region111: #{tpu_custom_call.1} parent=5 // pred_check
        %p3304 = pneg %p3303
      $region112: #{tpu_custom_call.1} parent=5 // pred_check_branch
        %3306 = sbr.rel (%p3304) target = $region114
      $region113: #{tpu_custom_call.1} parent=5 // pred_region
        %s3307 = ssub.s32 %s19, 2
        // Predicated region
        $region115: #{tpu_custom_call.1} parent=113 // pred_check
          %p3308 = pneg %p297
        $region116: #{tpu_custom_call.1} parent=113 // pred_check_branch
          %3310 = sbr.rel (%p3308) target = $region118
        $region117: #{tpu_custom_call.1} parent=113 // pred_region
          %s3311 = sand.u32 %s282, 1
          %s3312 = scalar_lea.sflag [#allocation5], %s3311
          %s3313 = sand.u32 %s282, 1
          %s3314 = smul.addr %s3313, 256
          %s3315 = scalar_lea.vmem [#allocation4], %s3314
          %3316 = dma.done %s3312, 4096
        $region118: #{tpu_custom_call.1} parent=113 // pred_fallthru
          _
      $region114: #{tpu_custom_call.1} parent=5 // pred_fallthru
        _
    $region6: #{tpu_custom_call.1} parent=1 // loop_footer
      %s23 = sadd.s32 1, %s19
    $region7: #{tpu_custom_call.1} parent=1 // loop_footer_branch
      %18 = sbr.rel target = $region3
    $region8: #{tpu_custom_call.1} parent=1 // loop_exit
      _
    %3317 = vsyncpa [#allocation5], 1
    %s3318 = scalar_lea.sflag [#allocation5], 1
    %3319 = vsyncpa %s3318, 1

</llo_original>
